<compile_context>
chip_gen: v5e
topology: v5e:2x2
jax: 0.10.0
libtpu: 0.0.40
codegen_flags: <defaults>
</compile_context>

<pallas_src>
import functools

import jax
import jax.numpy as jnp
from jax.experimental import pallas as pl
from jax.experimental.pallas import tpu as pltpu

# ---------------- synthetic config (small shapes) ----------------
B = 2            # batch
N = 8            # number of proposals / sequence length
EMB = 32         # cfg.MODEL.TRAJECTORY_ENCODER.EMB_SIZE
NHEAD = 4        # cfg.MODEL.TRAJECTORY_ENCODER.NUM_ATTENTION_HEADS
HEAD_DIM = EMB // NHEAD
FF = 64          # cfg.MODEL.TRAJECTORY_ENCODER.DIM_FEEDFORWARD
NUM_LAYERS = 2   # cfg.MODEL.TRAJECTORY_ENCODER.NUM_LAYERS
VIZ_DIM = 16     # flattened ROI feature size fed to the box/viz encoder
DIN = 4 + VIZ_DIM + 1
DIN_PAD = 32     # zero-padded contraction dim for the input embedding
HID1 = 512       # output-head hidden sizes (nn.Linear(emb,512) -> (512,256))
HID2 = 256
AUX_W = 16       # lane-padded packed-output width: [next_boxes(4)|vels(4)|pres(1)|pad]
IMG_W, IMG_H = 64.0, 48.0
VEL_OUT_FACTOR = 1.0
NEG_INF = -1e9
LN_EPS = 1e-5


# ---------------- fused Pallas kernel ----------------
def _fused_forward_kernel(
        inp_ref, vmask_ref, boxes_ref,
        we_ref, be_ref,
        wqkv_ref, bqkv_ref, wo_ref, bo_ref,
        ln1w_ref, ln1b_ref, w1_ref, b1_ref, w2_ref, b2_ref,
        ln2w_ref, ln2b_ref,
        wh1_hbm_ref, bh1_ref, w2v_hbm_ref, b2v_ref, w2p_hbm_ref, b2p_ref,
        w3v_ref, b3v_ref, w3p_ref, b3p_ref,
        enc_ref, aux_ref,
        wh1_vmem, w2v_vmem, w2p_vmem, dma_sem,
        *, nhead, head_dim, num_layers, batch, seq):
    emb = nhead * head_dim
    m = batch * seq

    # ---- kick off the head-weight DMAs first; they overlap all encoder work ----
    cp_wh1 = pltpu.make_async_copy(wh1_hbm_ref, wh1_vmem, dma_sem.at[0])
    cp_w2v = pltpu.make_async_copy(w2v_hbm_ref, w2v_vmem, dma_sem.at[1])
    cp_w2p = pltpu.make_async_copy(w2p_hbm_ref, w2p_vmem, dma_sem.at[2])
    cp_wh1.start()
    cp_w2v.start()
    cp_w2p.start()

    def dense(x, w, b):
        return jnp.dot(x, w, preferred_element_type=jnp.float32) + b

    def layer_norm(h, w, b_):
        mu = jnp.mean(h, axis=-1, keepdims=True)
        var = jnp.mean((h - mu) * (h - mu), axis=-1, keepdims=True)
        return (h - mu) * jax.lax.rsqrt(var + LN_EPS) * w + b_

    # ---- additive attention mask built in-kernel from the (B, N) validity map.
    # Reference logic: block attention from VALID queries to INVALID keys.
    vm = vmask_ref[...]                                   # (B, N), 1.0 = valid
    mask_add = (vm[:, :, None] * (1.0 - vm[:, None, :])) * NEG_INF   # (B, N, N)

    # ---- input embedding: relu([boxes_norm | viz | time | 0-pad] @ We + be) ----
    x = jnp.maximum(dense(inp_ref[...], we_ref[...], be_ref[...]), 0.0)   # (m, EMB)

    scale = 1.0 / (head_dim ** 0.5)

    # ---- post-norm transformer encoder layers; weights resident in VMEM ----
    for l in range(num_layers):
        qkv = dense(x, wqkv_ref[l], bqkv_ref[l])          # (m, 3*emb)
        wo_l = wo_ref[l]                                  # (emb, emb)

        attn = jnp.zeros((m, emb), jnp.float32)
        for h in range(nhead):                            # unrolled, no concats
            q = qkv[:, h * head_dim:(h + 1) * head_dim].reshape(batch, seq, head_dim)
            k = qkv[:, emb + h * head_dim: emb + (h + 1) * head_dim].reshape(
                batch, seq, head_dim)
            v = qkv[:, 2 * emb + h * head_dim: 2 * emb + (h + 1) * head_dim].reshape(
                batch, seq, head_dim)

            s = jnp.einsum('bnd,bmd->bnm', q, k,
                           preferred_element_type=jnp.float32) * scale + mask_add
            s = s - jnp.max(s, axis=-1, keepdims=True)
            p = jnp.exp(s)
            p = p * pl.reciprocal(jnp.sum(p, axis=-1, keepdims=True), approx=True)
            o = jnp.einsum('bnm,bmd->bnd', p, v,
                           preferred_element_type=jnp.float32)   # (batch, seq, hd)

            # Output projection via linearity: concat(o_h) @ Wo == sum_h o_h @ Wo[h]
            attn = attn + jnp.dot(o.reshape(m, head_dim),
                                  wo_l[h * head_dim:(h + 1) * head_dim, :],
                                  preferred_element_type=jnp.float32)
        attn = attn + bo_ref[l]

        h1 = layer_norm(x + attn, ln1w_ref[l], ln1b_ref[l])
        f = jnp.maximum(dense(h1, w1_ref[l], b1_ref[l]), 0.0)
        f = dense(f, w2_ref[l], b2_ref[l])
        x = layer_norm(h1 + f, ln2w_ref[l], ln2b_ref[l])

    enc_ref[...] = x                                      # flat (B*N, EMB)

    # ---- output heads: wait for the overlapped bf16 weight DMAs, then compute ----
    cp_wh1.wait()
    cp_w2v.wait()
    cp_w2p.wait()

    xb = x.astype(jnp.bfloat16)
    hcat = jnp.maximum(
        jnp.dot(xb, wh1_vmem[...], preferred_element_type=jnp.float32) + bh1_ref[...],
        0.0)                                              # (m, 2*HID1) = [vel | pres]
    hv = jnp.maximum(
        jnp.dot(hcat[:, :HID1].astype(jnp.bfloat16), w2v_vmem[...],
                preferred_element_type=jnp.float32) + b2v_ref[...], 0.0)
    hp = jnp.maximum(
        jnp.dot(hcat[:, HID1:].astype(jnp.bfloat16), w2p_vmem[...],
                preferred_element_type=jnp.float32) + b2p_ref[...], 0.0)

    # w3v/b3v are pre-scaled by VEL_OUT_FACTOR * [W,H,W,H] -> pixel-space deltas.
    delta = dense(hv, w3v_ref[...], b3v_ref[...])         # (m, 4)
    pres = dense(hp, w3p_ref[...], b3p_ref[...])          # (m, 1)
    next_boxes = boxes_ref[...] + delta

    # packed lane-padded output slab: [next_boxes | vels | presence | zero pad]
    aux_ref[:, 0:4] = next_boxes
    aux_ref[:, 4:8] = delta                               # vels == next_boxes - boxes
    aux_ref[:, 8:9] = pres
    aux_ref[:, 9:] = jnp.zeros((m, AUX_W - 9), jnp.float32)


def fused_forward(inp_flat, vmask, boxes_flat, p):
    m = inp_flat.shape[0]
    batch = vmask.shape[0]
    seq = vmask.shape[1]
    kern = functools.partial(
        _fused_forward_kernel, nhead=NHEAD, head_dim=HEAD_DIM,
        num_layers=NUM_LAYERS, batch=batch, seq=seq)

    inputs = (inp_flat, vmask, boxes_flat,
              p["we"], p["be"],
              p["wqkv"], p["bqkv"], p["wo"], p["bo"],
              p["ln1w"], p["ln1b"], p["w1"], p["b1"], p["w2"], p["b2"],
              p["ln2w"], p["ln2b"],
              p["wh1"], p["bh1"], p["w2v"], p["b2v"], p["w2p"], p["b2p"],
              p["w3v"], p["b3v"], p["w3p"], p["b3p"])

    vmem_spec = pl.BlockSpec(memory_space=pltpu.MemorySpace.VMEM)
    hbm_spec = pl.BlockSpec(memory_space=pl.ANY)
    # indices of the big bf16 head weights that stay in HBM (manual async copy)
    hbm_idx = {17, 19, 21}          # wh1, w2v, w2p
    in_specs = [hbm_spec if i in hbm_idx else vmem_spec for i in range(len(inputs))]

    out_shape = (
        jax.ShapeDtypeStruct((m, EMB), jnp.float32),      # encoder output (flat)
        jax.ShapeDtypeStruct((m, AUX_W), jnp.float32),    # packed boxes/vels/presence
    )
    out_specs = (vmem_spec, vmem_spec)

    scratch_shapes = [
        pltpu.VMEM((EMB, 2 * HID1), jnp.bfloat16),        # wh1
        pltpu.VMEM((HID1, HID2), jnp.bfloat16),           # w2v
        pltpu.VMEM((HID1, HID2), jnp.bfloat16),           # w2p
        pltpu.SemaphoreType.DMA((3,)),
    ]

    # No grid: a single invocation; total VMEM footprint < 3 MB on every chip.
    return pl.pallas_call(
        kern,
        out_shape=out_shape,
        in_specs=in_specs,
        out_specs=out_specs,
        scratch_shapes=scratch_shapes,
    )(*inputs)


# ---------------- parameter construction (deterministic, pre-packed) ----------
def make_params(key):
    def lin(k, din, dout, std=0.02):
        kw, _ = jax.random.split(k)
        return (std * jax.random.normal(kw, (din, dout), jnp.float32),
                jnp.zeros((1, dout), jnp.float32))

    keys = jax.random.split(key, 4 + NUM_LAYERS)
    p = {}
    # box/viz/time embedding: [boxes(4) | viz(VIZ_DIM) | time(1) | 0-pad] -> EMB
    we, be = lin(keys[0], DIN, EMB)
    p["we"] = jnp.pad(we, ((0, DIN_PAD - DIN), (0, 0)))   # zero rows for the pad lanes
    p["be"] = be

    stacks = {name: [] for name in
              ("wqkv", "bqkv", "wo", "bo", "ln1w", "ln1b",
               "w1", "b1", "w2", "b2", "ln2w", "ln2b")}
    for l in range(NUM_LAYERS):
        lk = jax.random.split(keys[1 + l], 4)
        wqkv, bqkv = lin(lk[0], EMB, 3 * EMB)
        wo, bo = lin(lk[1], EMB, EMB)
        w1, b1 = lin(lk[2], EMB, FF)
        w2, b2 = lin(lk[3], FF, EMB)
        vals = dict(wqkv=wqkv, bqkv=bqkv, wo=wo, bo=bo,
                    ln1w=jnp.ones((1, EMB), jnp.float32),
                    ln1b=jnp.zeros((1, EMB), jnp.float32),
                    w1=w1, b1=b1, w2=w2, b2=b2,
                    ln2w=jnp.ones((1, EMB), jnp.float32),
                    ln2b=jnp.zeros((1, EMB), jnp.float32))
        for name, v in vals.items():
            stacks[name].append(v)
    for name, lst in stacks.items():
        p[name] = jnp.stack(lst, axis=0)                  # leading layer dim

    # box_vel_model: EMB->512->256->4 (use_small_output_init: std=0.001 last)
    vk = jax.random.split(keys[1 + NUM_LAYERS], 3)
    w1v, b1v = lin(vk[0], EMB, HID1)
    w2v, b2v = lin(vk[1], HID1, HID2)
    w3v, b3v = lin(vk[2], HID2, 4, std=0.001)
    # presence_model: EMB->512->256->1
    pk = jax.random.split(keys[2 + NUM_LAYERS], 3)
    w1p, b1p = lin(pk[0], EMB, HID1)
    w2p, b2p = lin(pk[1], HID1, HID2)
    w3p, b3p = lin(pk[2], HID2, 1)

    # fuse the two heads' first layer: (EMB, 1024) = [vel_512 | pres_512]; big
    # head weights are kept in bf16 (DMA-byte bound, MXU-native).
    p["wh1"] = jnp.concatenate([w1v, w1p], axis=1).astype(jnp.bfloat16)
    p["bh1"] = jnp.concatenate([b1v, b1p], axis=1)
    p["w2v"] = w2v.astype(jnp.bfloat16)
    p["b2v"] = b2v
    p["w2p"] = w2p.astype(jnp.bfloat16)
    p["b2p"] = b2p
    # Fold image unnormalization and VEL_OUT_FACTOR into the last vel layer so
    # the kernel emits pixel-space deltas directly (next_boxes = boxes + delta).
    col_scale = jnp.array([IMG_W, IMG_H, IMG_W, IMG_H], jnp.float32) * VEL_OUT_FACTOR
    p["w3v"] = w3v * col_scale[None, :]
    p["b3v"] = b3v * col_scale[None, :]
    p["w3p"], p["b3p"] = w3p, b3p
    return p


# ---------------- forward (matches TrajectoryTransformerEncoder.forward) ------
def trajectory_transformer_encoder(params, features, boxes, valid_mask, time):
    b, n = boxes.shape[:2]
    scale = jnp.array([IMG_W, IMG_H, IMG_W, IMG_H], jnp.float32)

    # --- BoxVizTimeEncoder (simplified): normalize boxes, concat viz + time,
    #     zero-pad the feature dim to 32 and flatten rows (batch-major).
    boxes_norm = boxes / scale
    time_n = (time.astype(jnp.float32) / float(N))[..., None]
    inp = jnp.concatenate([boxes_norm, features, time_n], axis=-1)   # (B, N, DIN)
    inp = jnp.pad(inp, ((0, 0), (0, 0), (0, DIN_PAD - DIN)))
    inp_flat = inp.reshape(b * n, DIN_PAD)
    boxes_flat = boxes.reshape(b * n, 4)
    vmask = valid_mask.astype(jnp.float32)                # mask built in-kernel

    # --- single fused Pallas kernel: embed + transformer + both heads + glue
    enc_flat, aux = fused_forward(inp_flat, vmask, boxes_flat, params)

    # module returns the transformer output in (seq, batch, emb) layout
    final_result = enc_flat.reshape(b, n, EMB).transpose(1, 0, 2)    # (N, B, EMB)
    next_boxes = aux[:, 0:4].reshape(b, n, 4)
    vels = aux[:, 4:8].reshape(b, n, 4)
    presence = aux[:, 8:9].reshape(b, n, 1)
    return final_result, next_boxes, vels, presence


# ---------------- main ----------------
if __name__ == "__main__":
    key = jax.random.PRNGKey(0)
    k_feat, k_box, k_par = jax.random.split(key, 3)

    features = jax.random.normal(k_feat, (B, N, VIZ_DIM), jnp.float32)
    xy = jax.random.uniform(k_box, (B, N, 2), jnp.float32,
                            minval=0.0, maxval=jnp.array([IMG_W - 8, IMG_H - 8]))
    wh = jax.random.uniform(jax.random.fold_in(k_box, 1), (B, N, 2), jnp.float32,
                            minval=2.0, maxval=8.0)
    boxes = jnp.concatenate([xy, xy + wh], axis=-1)                  # (B, N, 4) ulbr
    # make the last two proposals of batch 1 invalid (padding)
    valid_mask = jnp.ones((B, N), jnp.bool_).at[1, N - 2:].set(False)
    time = jnp.broadcast_to(jnp.arange(N, dtype=jnp.int32), (B, N))

    params = make_params(k_par)

    fwd = jax.jit(trajectory_transformer_encoder)
    final_result, next_boxes, vels, presence = fwd(
        params, features, boxes, valid_mask, time)
    jax.block_until_ready((final_result, next_boxes, vels, presence))

    assert final_result.shape == (N, B, EMB)
    assert next_boxes.shape == (B, N, 4)
    assert vels.shape == (B, N, 4)
    assert presence.shape == (B, N, 1)
    assert bool(jnp.all(jnp.isfinite(final_result)))
    assert bool(jnp.all(jnp.isfinite(next_boxes)))
    assert bool(jnp.all(jnp.isfinite(vels)))
    assert bool(jnp.all(jnp.isfinite(presence)))
    print("KERNEL_OK")
</pallas_src>

<mosaic_0001>
module attributes {stable_mosaic.version = 11 : i64} {
  func.func @_fused_forward_kernel(%arg0: memref<16x32xf32, #tpu.memory_space<vmem>>, %arg1: memref<2x8xf32, #tpu.memory_space<vmem>>, %arg2: memref<16x4xf32, #tpu.memory_space<vmem>>, %arg3: memref<32x32xf32, #tpu.memory_space<vmem>>, %arg4: memref<1x32xf32, #tpu.memory_space<vmem>>, %arg5: memref<2x32x96xf32, #tpu.memory_space<vmem>>, %arg6: memref<2x1x96xf32, #tpu.memory_space<vmem>>, %arg7: memref<2x32x32xf32, #tpu.memory_space<vmem>>, %arg8: memref<2x1x32xf32, #tpu.memory_space<vmem>>, %arg9: memref<2x1x32xf32, #tpu.memory_space<vmem>>, %arg10: memref<2x1x32xf32, #tpu.memory_space<vmem>>, %arg11: memref<2x32x64xf32, #tpu.memory_space<vmem>>, %arg12: memref<2x1x64xf32, #tpu.memory_space<vmem>>, %arg13: memref<2x64x32xf32, #tpu.memory_space<vmem>>, %arg14: memref<2x1x32xf32, #tpu.memory_space<vmem>>, %arg15: memref<2x1x32xf32, #tpu.memory_space<vmem>>, %arg16: memref<2x1x32xf32, #tpu.memory_space<vmem>>, %arg17: memref<32x1024xbf16, #tpu.memory_space<any>>, %arg18: memref<1x1024xf32, #tpu.memory_space<vmem>>, %arg19: memref<512x256xbf16, #tpu.memory_space<any>>, %arg20: memref<1x256xf32, #tpu.memory_space<vmem>>, %arg21: memref<512x256xbf16, #tpu.memory_space<any>>, %arg22: memref<1x256xf32, #tpu.memory_space<vmem>>, %arg23: memref<256x4xf32, #tpu.memory_space<vmem>>, %arg24: memref<1x4xf32, #tpu.memory_space<vmem>>, %arg25: memref<256x1xf32, #tpu.memory_space<vmem>>, %arg26: memref<1x1xf32, #tpu.memory_space<vmem>>, %arg27: memref<16x32xf32, #tpu.memory_space<vmem>>, %arg28: memref<16x16xf32, #tpu.memory_space<vmem>>, %arg29: memref<32x1024xbf16, #tpu.memory_space<vmem>>, %arg30: memref<512x256xbf16, #tpu.memory_space<vmem>>, %arg31: memref<512x256xbf16, #tpu.memory_space<vmem>>, %arg32: memref<3x!tpu.dma_semaphore, #tpu.memory_space<semaphore_mem>>) attributes {dimension_semantics = [], scalar_prefetch = 0 : i64, scratch_operands = 4 : i64, tpu.core_type = #tpu.core_type<tc>} {
    %c0_i32 = arith.constant 0 : i32
    %0 = tpu.memref_slice %arg32[%c0_i32] : memref<3x!tpu.dma_semaphore, #tpu.memory_space<semaphore_mem>> -> memref<1x!tpu.dma_semaphore, #tpu.memory_space<semaphore_mem>>
    %1 = tpu.memref_squeeze %0 : memref<1x!tpu.dma_semaphore, #tpu.memory_space<semaphore_mem>> -> memref<!tpu.dma_semaphore, #tpu.memory_space<semaphore_mem>>
    tpu.enqueue_dma source(%arg17 : memref<32x1024xbf16, #tpu.memory_space<any>>) target(%arg29 : memref<32x1024xbf16, #tpu.memory_space<vmem>>) target_semaphore(%1 : memref<!tpu.dma_semaphore, #tpu.memory_space<semaphore_mem>>)
    %c1_i32 = arith.constant 1 : i32
    %2 = tpu.memref_slice %arg32[%c1_i32] : memref<3x!tpu.dma_semaphore, #tpu.memory_space<semaphore_mem>> -> memref<1x!tpu.dma_semaphore, #tpu.memory_space<semaphore_mem>>
    %3 = tpu.memref_squeeze %2 : memref<1x!tpu.dma_semaphore, #tpu.memory_space<semaphore_mem>> -> memref<!tpu.dma_semaphore, #tpu.memory_space<semaphore_mem>>
    tpu.enqueue_dma source(%arg19 : memref<512x256xbf16, #tpu.memory_space<any>>) target(%arg30 : memref<512x256xbf16, #tpu.memory_space<vmem>>) target_semaphore(%3 : memref<!tpu.dma_semaphore, #tpu.memory_space<semaphore_mem>>)
    %c2_i32 = arith.constant 2 : i32
    %4 = tpu.memref_slice %arg32[%c2_i32] : memref<3x!tpu.dma_semaphore, #tpu.memory_space<semaphore_mem>> -> memref<1x!tpu.dma_semaphore, #tpu.memory_space<semaphore_mem>>
    %5 = tpu.memref_squeeze %4 : memref<1x!tpu.dma_semaphore, #tpu.memory_space<semaphore_mem>> -> memref<!tpu.dma_semaphore, #tpu.memory_space<semaphore_mem>>
    tpu.enqueue_dma source(%arg21 : memref<512x256xbf16, #tpu.memory_space<any>>) target(%arg31 : memref<512x256xbf16, #tpu.memory_space<vmem>>) target_semaphore(%5 : memref<!tpu.dma_semaphore, #tpu.memory_space<semaphore_mem>>)
    %c0 = arith.constant 0 : index
    %c0_0 = arith.constant 0 : index
    %6 = vector.load %arg1[%c0, %c0_0] : memref<2x8xf32, #tpu.memory_space<vmem>>, vector<2x8xf32>
    %7 = vector.shape_cast %6 : vector<2x8xf32> to vector<2x8x1xf32>
    %8 = vector.shape_cast %6 : vector<2x8xf32> to vector<2x1x8xf32>
    %cst = arith.constant 1.000000e+00 : f32
    %9 = vector.broadcast %cst : f32 to vector<2x1x8xf32>
    %10 = arith.subf %9, %8 : vector<2x1x8xf32>
    %11 = vector.broadcast %7 : vector<2x8x1xf32> to vector<2x8x8xf32>
    %12 = vector.broadcast %10 : vector<2x1x8xf32> to vector<2x8x8xf32>
    %13 = arith.mulf %11, %12 : vector<2x8x8xf32>
    %cst_1 = arith.constant -1.000000e+09 : f32
    %14 = vector.broadcast %cst_1 : f32 to vector<2x8x8xf32>
    %15 = arith.mulf %13, %14 : vector<2x8x8xf32>
    %c0_2 = arith.constant 0 : index
    %c0_3 = arith.constant 0 : index
    %16 = vector.load %arg0[%c0_2, %c0_3] : memref<16x32xf32, #tpu.memory_space<vmem>>, vector<16x32xf32>
    %c0_4 = arith.constant 0 : index
    %c0_5 = arith.constant 0 : index
    %17 = vector.load %arg3[%c0_4, %c0_5] : memref<32x32xf32, #tpu.memory_space<vmem>>, vector<32x32xf32>
    %c0_6 = arith.constant 0 : index
    %c0_7 = arith.constant 0 : index
    %18 = vector.load %arg4[%c0_6, %c0_7] : memref<1x32xf32, #tpu.memory_space<vmem>>, vector<1x32xf32>
    %cst_8 = arith.constant dense<0.000000e+00> : vector<16x32xf32>
    %19 = tpu.matmul %16, %17, %cst_8 {dimension_numbers = #tpu.dot_dimension_numbers<[1], [0], [0], [1], [0, 0, 1, 1], [], []>} : vector<16x32xf32>, vector<32x32xf32>, vector<16x32xf32> -> vector<16x32xf32>
    %20 = vector.broadcast %18 : vector<1x32xf32> to vector<16x32xf32>
    %21 = arith.addf %19, %20 : vector<16x32xf32>
    %cst_9 = arith.constant 0.000000e+00 : f32
    %22 = vector.broadcast %cst_9 : f32 to vector<16x32xf32>
    %23 = arith.maximumf %21, %22 : vector<16x32xf32>
    %c0_10 = arith.constant 0 : index
    %c0_11 = arith.constant 0 : index
    %c0_12 = arith.constant 0 : index
    %24 = vector.load %arg5[%c0_10, %c0_11, %c0_12] : memref<2x32x96xf32, #tpu.memory_space<vmem>>, vector<1x32x96xf32>
    %25 = vector.shape_cast %24 : vector<1x32x96xf32> to vector<32x96xf32>
    %c0_13 = arith.constant 0 : index
    %c0_14 = arith.constant 0 : index
    %c0_15 = arith.constant 0 : index
    %26 = vector.load %arg6[%c0_13, %c0_14, %c0_15] : memref<2x1x96xf32, #tpu.memory_space<vmem>>, vector<1x1x96xf32>
    %27 = vector.shape_cast %26 : vector<1x1x96xf32> to vector<1x96xf32>
    %cst_16 = arith.constant dense<0.000000e+00> : vector<16x96xf32>
    %28 = tpu.matmul %23, %25, %cst_16 {dimension_numbers = #tpu.dot_dimension_numbers<[1], [0], [0], [1], [0, 0, 1, 1], [], []>} : vector<16x32xf32>, vector<32x96xf32>, vector<16x96xf32> -> vector<16x96xf32>
    %29 = vector.broadcast %27 : vector<1x96xf32> to vector<16x96xf32>
    %30 = arith.addf %28, %29 : vector<16x96xf32>
    %c0_17 = arith.constant 0 : index
    %c0_18 = arith.constant 0 : index
    %c0_19 = arith.constant 0 : index
    %31 = vector.load %arg7[%c0_17, %c0_18, %c0_19] : memref<2x32x32xf32, #tpu.memory_space<vmem>>, vector<1x32x32xf32>
    %32 = vector.shape_cast %31 : vector<1x32x32xf32> to vector<32x32xf32>
    %cst_20 = arith.constant 0.000000e+00 : f32
    %33 = vector.broadcast %cst_20 : f32 to vector<16x32xf32>
    %34 = vector.extract_strided_slice %30 {offsets = [0, 0], sizes = [16, 8], strides = [1, 1]} : vector<16x96xf32> to vector<16x8xf32>
    %35 = vector.shape_cast %34 : vector<16x8xf32> to vector<2x8x8xf32>
    %36 = vector.extract_strided_slice %30 {offsets = [0, 32], sizes = [16, 8], strides = [1, 1]} : vector<16x96xf32> to vector<16x8xf32>
    %37 = vector.shape_cast %36 : vector<16x8xf32> to vector<2x8x8xf32>
    %38 = vector.extract_strided_slice %30 {offsets = [0, 64], sizes = [16, 8], strides = [1, 1]} : vector<16x96xf32> to vector<16x8xf32>
    %39 = vector.shape_cast %38 : vector<16x8xf32> to vector<2x8x8xf32>
    "tpu.trace_start"() <{level = 10 : i32, message = "bnd,bmd->bnm"}> : () -> ()
    %cst_21 = arith.constant dense<0.000000e+00> : vector<2x8x8xf32>
    %40 = tpu.matmul %35, %37, %cst_21 {dimension_numbers = #tpu.dot_dimension_numbers<[2], [2], [1], [1], [0, 0, 0, 1, 1, 1], [0], [0]>} : vector<2x8x8xf32>, vector<2x8x8xf32>, vector<2x8x8xf32> -> vector<2x8x8xf32>
    "tpu.trace_stop"() : () -> ()
    %cst_22 = arith.constant 0.353553385 : f32
    %41 = vector.broadcast %cst_22 : f32 to vector<2x8x8xf32>
    %42 = arith.mulf %40, %41 : vector<2x8x8xf32>
    %43 = arith.addf %42, %15 : vector<2x8x8xf32>
    %cst_23 = arith.constant dense<0xFF800000> : vector<2x8xf32>
    %44 = vector.multi_reduction <maximumf>, %43, %cst_23 [2] : vector<2x8x8xf32> to vector<2x8xf32>
    %45 = vector.shape_cast %44 : vector<2x8xf32> to vector<2x8x1xf32>
    %46 = vector.broadcast %45 : vector<2x8x1xf32> to vector<2x8x8xf32>
    %47 = arith.subf %43, %46 : vector<2x8x8xf32>
    %48 = math.exp %47 : vector<2x8x8xf32>
    %cst_24 = arith.constant dense<0.000000e+00> : vector<2x8xf32>
    %49 = vector.multi_reduction <add>, %48, %cst_24 [2] : vector<2x8x8xf32> to vector<2x8xf32>
    %50 = vector.shape_cast %49 : vector<2x8xf32> to vector<2x8x1xf32>
    %51 = tpu.reciprocal %50 {approx = true} : vector<2x8x1xf32> -> vector<2x8x1xf32>
    %52 = vector.broadcast %51 : vector<2x8x1xf32> to vector<2x8x8xf32>
    %53 = arith.mulf %48, %52 : vector<2x8x8xf32>
    "tpu.trace_start"() <{level = 10 : i32, message = "bnm,bmd->bnd"}> : () -> ()
    %cst_25 = arith.constant dense<0.000000e+00> : vector<2x8x8xf32>
    %54 = tpu.matmul %53, %39, %cst_25 {dimension_numbers = #tpu.dot_dimension_numbers<[2], [1], [1], [2], [0, 0, 0, 1, 1, 2], [0], [0]>} : vector<2x8x8xf32>, vector<2x8x8xf32>, vector<2x8x8xf32> -> vector<2x8x8xf32>
    "tpu.trace_stop"() : () -> ()
    %55 = vector.shape_cast %54 : vector<2x8x8xf32> to vector<16x8xf32>
    %56 = vector.extract_strided_slice %32 {offsets = [0, 0], sizes = [8, 32], strides = [1, 1]} : vector<32x32xf32> to vector<8x32xf32>
    %cst_26 = arith.constant dense<0.000000e+00> : vector<16x32xf32>
    %57 = tpu.matmul %55, %56, %cst_26 {dimension_numbers = #tpu.dot_dimension_numbers<[1], [0], [0], [1], [0, 0, 1, 1], [], []>} : vector<16x8xf32>, vector<8x32xf32>, vector<16x32xf32> -> vector<16x32xf32>
    %58 = arith.addf %33, %57 : vector<16x32xf32>
    %59 = vector.extract_strided_slice %30 {offsets = [0, 8], sizes = [16, 8], strides = [1, 1]} : vector<16x96xf32> to vector<16x8xf32>
    %60 = vector.shape_cast %59 : vector<16x8xf32> to vector<2x8x8xf32>
    %61 = vector.extract_strided_slice %30 {offsets = [0, 40], sizes = [16, 8], strides = [1, 1]} : vector<16x96xf32> to vector<16x8xf32>
    %62 = vector.shape_cast %61 : vector<16x8xf32> to vector<2x8x8xf32>
    %63 = vector.extract_strided_slice %30 {offsets = [0, 72], sizes = [16, 8], strides = [1, 1]} : vector<16x96xf32> to vector<16x8xf32>
    %64 = vector.shape_cast %63 : vector<16x8xf32> to vector<2x8x8xf32>
    "tpu.trace_start"() <{level = 10 : i32, message = "bnd,bmd->bnm"}> : () -> ()
    %cst_27 = arith.constant dense<0.000000e+00> : vector<2x8x8xf32>
    %65 = tpu.matmul %60, %62, %cst_27 {dimension_numbers = #tpu.dot_dimension_numbers<[2], [2], [1], [1], [0, 0, 0, 1, 1, 1], [0], [0]>} : vector<2x8x8xf32>, vector<2x8x8xf32>, vector<2x8x8xf32> -> vector<2x8x8xf32>
    "tpu.trace_stop"() : () -> ()
    %cst_28 = arith.constant 0.353553385 : f32
    %66 = vector.broadcast %cst_28 : f32 to vector<2x8x8xf32>
    %67 = arith.mulf %65, %66 : vector<2x8x8xf32>
    %68 = arith.addf %67, %15 : vector<2x8x8xf32>
    %cst_29 = arith.constant dense<0xFF800000> : vector<2x8xf32>
    %69 = vector.multi_reduction <maximumf>, %68, %cst_29 [2] : vector<2x8x8xf32> to vector<2x8xf32>
    %70 = vector.shape_cast %69 : vector<2x8xf32> to vector<2x8x1xf32>
    %71 = vector.broadcast %70 : vector<2x8x1xf32> to vector<2x8x8xf32>
    %72 = arith.subf %68, %71 : vector<2x8x8xf32>
    %73 = math.exp %72 : vector<2x8x8xf32>
    %cst_30 = arith.constant dense<0.000000e+00> : vector<2x8xf32>
    %74 = vector.multi_reduction <add>, %73, %cst_30 [2] : vector<2x8x8xf32> to vector<2x8xf32>
    %75 = vector.shape_cast %74 : vector<2x8xf32> to vector<2x8x1xf32>
    %76 = tpu.reciprocal %75 {approx = true} : vector<2x8x1xf32> -> vector<2x8x1xf32>
    %77 = vector.broadcast %76 : vector<2x8x1xf32> to vector<2x8x8xf32>
    %78 = arith.mulf %73, %77 : vector<2x8x8xf32>
    "tpu.trace_start"() <{level = 10 : i32, message = "bnm,bmd->bnd"}> : () -> ()
    %cst_31 = arith.constant dense<0.000000e+00> : vector<2x8x8xf32>
    %79 = tpu.matmul %78, %64, %cst_31 {dimension_numbers = #tpu.dot_dimension_numbers<[2], [1], [1], [2], [0, 0, 0, 1, 1, 2], [0], [0]>} : vector<2x8x8xf32>, vector<2x8x8xf32>, vector<2x8x8xf32> -> vector<2x8x8xf32>
    "tpu.trace_stop"() : () -> ()
    %80 = vector.shape_cast %79 : vector<2x8x8xf32> to vector<16x8xf32>
    %81 = vector.extract_strided_slice %32 {offsets = [8, 0], sizes = [8, 32], strides = [1, 1]} : vector<32x32xf32> to vector<8x32xf32>
    %cst_32 = arith.constant dense<0.000000e+00> : vector<16x32xf32>
    %82 = tpu.matmul %80, %81, %cst_32 {dimension_numbers = #tpu.dot_dimension_numbers<[1], [0], [0], [1], [0, 0, 1, 1], [], []>} : vector<16x8xf32>, vector<8x32xf32>, vector<16x32xf32> -> vector<16x32xf32>
    %83 = arith.addf %58, %82 : vector<16x32xf32>
    %84 = vector.extract_strided_slice %30 {offsets = [0, 16], sizes = [16, 8], strides = [1, 1]} : vector<16x96xf32> to vector<16x8xf32>
    %85 = vector.shape_cast %84 : vector<16x8xf32> to vector<2x8x8xf32>
    %86 = vector.extract_strided_slice %30 {offsets = [0, 48], sizes = [16, 8], strides = [1, 1]} : vector<16x96xf32> to vector<16x8xf32>
    %87 = vector.shape_cast %86 : vector<16x8xf32> to vector<2x8x8xf32>
    %88 = vector.extract_strided_slice %30 {offsets = [0, 80], sizes = [16, 8], strides = [1, 1]} : vector<16x96xf32> to vector<16x8xf32>
    %89 = vector.shape_cast %88 : vector<16x8xf32> to vector<2x8x8xf32>
    "tpu.trace_start"() <{level = 10 : i32, message = "bnd,bmd->bnm"}> : () -> ()
    %cst_33 = arith.constant dense<0.000000e+00> : vector<2x8x8xf32>
    %90 = tpu.matmul %85, %87, %cst_33 {dimension_numbers = #tpu.dot_dimension_numbers<[2], [2], [1], [1], [0, 0, 0, 1, 1, 1], [0], [0]>} : vector<2x8x8xf32>, vector<2x8x8xf32>, vector<2x8x8xf32> -> vector<2x8x8xf32>
    "tpu.trace_stop"() : () -> ()
    %cst_34 = arith.constant 0.353553385 : f32
    %91 = vector.broadcast %cst_34 : f32 to vector<2x8x8xf32>
    %92 = arith.mulf %90, %91 : vector<2x8x8xf32>
    %93 = arith.addf %92, %15 : vector<2x8x8xf32>
    %cst_35 = arith.constant dense<0xFF800000> : vector<2x8xf32>
    %94 = vector.multi_reduction <maximumf>, %93, %cst_35 [2] : vector<2x8x8xf32> to vector<2x8xf32>
    %95 = vector.shape_cast %94 : vector<2x8xf32> to vector<2x8x1xf32>
    %96 = vector.broadcast %95 : vector<2x8x1xf32> to vector<2x8x8xf32>
    %97 = arith.subf %93, %96 : vector<2x8x8xf32>
    %98 = math.exp %97 : vector<2x8x8xf32>
    %cst_36 = arith.constant dense<0.000000e+00> : vector<2x8xf32>
    %99 = vector.multi_reduction <add>, %98, %cst_36 [2] : vector<2x8x8xf32> to vector<2x8xf32>
    %100 = vector.shape_cast %99 : vector<2x8xf32> to vector<2x8x1xf32>
    %101 = tpu.reciprocal %100 {approx = true} : vector<2x8x1xf32> -> vector<2x8x1xf32>
    %102 = vector.broadcast %101 : vector<2x8x1xf32> to vector<2x8x8xf32>
    %103 = arith.mulf %98, %102 : vector<2x8x8xf32>
    "tpu.trace_start"() <{level = 10 : i32, message = "bnm,bmd->bnd"}> : () -> ()
    %cst_37 = arith.constant dense<0.000000e+00> : vector<2x8x8xf32>
    %104 = tpu.matmul %103, %89, %cst_37 {dimension_numbers = #tpu.dot_dimension_numbers<[2], [1], [1], [2], [0, 0, 0, 1, 1, 2], [0], [0]>} : vector<2x8x8xf32>, vector<2x8x8xf32>, vector<2x8x8xf32> -> vector<2x8x8xf32>
    "tpu.trace_stop"() : () -> ()
    %105 = vector.shape_cast %104 : vector<2x8x8xf32> to vector<16x8xf32>
    %106 = vector.extract_strided_slice %32 {offsets = [16, 0], sizes = [8, 32], strides = [1, 1]} : vector<32x32xf32> to vector<8x32xf32>
    %cst_38 = arith.constant dense<0.000000e+00> : vector<16x32xf32>
    %107 = tpu.matmul %105, %106, %cst_38 {dimension_numbers = #tpu.dot_dimension_numbers<[1], [0], [0], [1], [0, 0, 1, 1], [], []>} : vector<16x8xf32>, vector<8x32xf32>, vector<16x32xf32> -> vector<16x32xf32>
    %108 = arith.addf %83, %107 : vector<16x32xf32>
    %109 = vector.extract_strided_slice %30 {offsets = [0, 24], sizes = [16, 8], strides = [1, 1]} : vector<16x96xf32> to vector<16x8xf32>
    %110 = vector.shape_cast %109 : vector<16x8xf32> to vector<2x8x8xf32>
    %111 = vector.extract_strided_slice %30 {offsets = [0, 56], sizes = [16, 8], strides = [1, 1]} : vector<16x96xf32> to vector<16x8xf32>
    %112 = vector.shape_cast %111 : vector<16x8xf32> to vector<2x8x8xf32>
    %113 = vector.extract_strided_slice %30 {offsets = [0, 88], sizes = [16, 8], strides = [1, 1]} : vector<16x96xf32> to vector<16x8xf32>
    %114 = vector.shape_cast %113 : vector<16x8xf32> to vector<2x8x8xf32>
    "tpu.trace_start"() <{level = 10 : i32, message = "bnd,bmd->bnm"}> : () -> ()
    %cst_39 = arith.constant dense<0.000000e+00> : vector<2x8x8xf32>
    %115 = tpu.matmul %110, %112, %cst_39 {dimension_numbers = #tpu.dot_dimension_numbers<[2], [2], [1], [1], [0, 0, 0, 1, 1, 1], [0], [0]>} : vector<2x8x8xf32>, vector<2x8x8xf32>, vector<2x8x8xf32> -> vector<2x8x8xf32>
    "tpu.trace_stop"() : () -> ()
    %cst_40 = arith.constant 0.353553385 : f32
    %116 = vector.broadcast %cst_40 : f32 to vector<2x8x8xf32>
    %117 = arith.mulf %115, %116 : vector<2x8x8xf32>
    %118 = arith.addf %117, %15 : vector<2x8x8xf32>
    %cst_41 = arith.constant dense<0xFF800000> : vector<2x8xf32>
    %119 = vector.multi_reduction <maximumf>, %118, %cst_41 [2] : vector<2x8x8xf32> to vector<2x8xf32>
    %120 = vector.shape_cast %119 : vector<2x8xf32> to vector<2x8x1xf32>
    %121 = vector.broadcast %120 : vector<2x8x1xf32> to vector<2x8x8xf32>
    %122 = arith.subf %118, %121 : vector<2x8x8xf32>
    %123 = math.exp %122 : vector<2x8x8xf32>
    %cst_42 = arith.constant dense<0.000000e+00> : vector<2x8xf32>
    %124 = vector.multi_reduction <add>, %123, %cst_42 [2] : vector<2x8x8xf32> to vector<2x8xf32>
    %125 = vector.shape_cast %124 : vector<2x8xf32> to vector<2x8x1xf32>
    %126 = tpu.reciprocal %125 {approx = true} : vector<2x8x1xf32> -> vector<2x8x1xf32>
    %127 = vector.broadcast %126 : vector<2x8x1xf32> to vector<2x8x8xf32>
    %128 = arith.mulf %123, %127 : vector<2x8x8xf32>
    "tpu.trace_start"() <{level = 10 : i32, message = "bnm,bmd->bnd"}> : () -> ()
    %cst_43 = arith.constant dense<0.000000e+00> : vector<2x8x8xf32>
    %129 = tpu.matmul %128, %114, %cst_43 {dimension_numbers = #tpu.dot_dimension_numbers<[2], [1], [1], [2], [0, 0, 0, 1, 1, 2], [0], [0]>} : vector<2x8x8xf32>, vector<2x8x8xf32>, vector<2x8x8xf32> -> vector<2x8x8xf32>
    "tpu.trace_stop"() : () -> ()
    %130 = vector.shape_cast %129 : vector<2x8x8xf32> to vector<16x8xf32>
    %131 = vector.extract_strided_slice %32 {offsets = [24, 0], sizes = [8, 32], strides = [1, 1]} : vector<32x32xf32> to vector<8x32xf32>
    %cst_44 = arith.constant dense<0.000000e+00> : vector<16x32xf32>
    %132 = tpu.matmul %130, %131, %cst_44 {dimension_numbers = #tpu.dot_dimension_numbers<[1], [0], [0], [1], [0, 0, 1, 1], [], []>} : vector<16x8xf32>, vector<8x32xf32>, vector<16x32xf32> -> vector<16x32xf32>
    %133 = arith.addf %108, %132 : vector<16x32xf32>
    %c0_45 = arith.constant 0 : index
    %c0_46 = arith.constant 0 : index
    %c0_47 = arith.constant 0 : index
    %134 = vector.load %arg8[%c0_45, %c0_46, %c0_47] : memref<2x1x32xf32, #tpu.memory_space<vmem>>, vector<1x1x32xf32>
    %135 = vector.shape_cast %134 : vector<1x1x32xf32> to vector<1x32xf32>
    %136 = vector.broadcast %135 : vector<1x32xf32> to vector<16x32xf32>
    %137 = arith.addf %133, %136 : vector<16x32xf32>
    %138 = arith.addf %23, %137 : vector<16x32xf32>
    %c0_48 = arith.constant 0 : index
    %c0_49 = arith.constant 0 : index
    %c0_50 = arith.constant 0 : index
    %139 = vector.load %arg9[%c0_48, %c0_49, %c0_50] : memref<2x1x32xf32, #tpu.memory_space<vmem>>, vector<1x1x32xf32>
    %140 = vector.shape_cast %139 : vector<1x1x32xf32> to vector<1x32xf32>
    %c0_51 = arith.constant 0 : index
    %c0_52 = arith.constant 0 : index
    %c0_53 = arith.constant 0 : index
    %141 = vector.load %arg10[%c0_51, %c0_52, %c0_53] : memref<2x1x32xf32, #tpu.memory_space<vmem>>, vector<1x1x32xf32>
    %142 = vector.shape_cast %141 : vector<1x1x32xf32> to vector<1x32xf32>
    %cst_54 = arith.constant dense<0.000000e+00> : vector<16xf32>
    %143 = vector.multi_reduction <add>, %138, %cst_54 [1] : vector<16x32xf32> to vector<16xf32>
    %144 = vector.shape_cast %143 : vector<16xf32> to vector<16x1xf32>
    %cst_55 = arith.constant 3.200000e+01 : f32
    %145 = vector.broadcast %cst_55 : f32 to vector<16x1xf32>
    %146 = arith.divf %144, %145 : vector<16x1xf32>
    %147 = vector.broadcast %146 : vector<16x1xf32> to vector<16x32xf32>
    %148 = arith.subf %138, %147 : vector<16x32xf32>
    %149 = vector.broadcast %146 : vector<16x1xf32> to vector<16x32xf32>
    %150 = arith.subf %138, %149 : vector<16x32xf32>
    %151 = arith.mulf %148, %150 : vector<16x32xf32>
    %cst_56 = arith.constant dense<0.000000e+00> : vector<16xf32>
    %152 = vector.multi_reduction <add>, %151, %cst_56 [1] : vector<16x32xf32> to vector<16xf32>
    %153 = vector.shape_cast %152 : vector<16xf32> to vector<16x1xf32>
    %cst_57 = arith.constant 3.200000e+01 : f32
    %154 = vector.broadcast %cst_57 : f32 to vector<16x1xf32>
    %155 = arith.divf %153, %154 : vector<16x1xf32>
    %156 = vector.broadcast %146 : vector<16x1xf32> to vector<16x32xf32>
    %157 = arith.subf %138, %156 : vector<16x32xf32>
    %cst_58 = arith.constant 9.99999974E-6 : f32
    %158 = vector.broadcast %cst_58 : f32 to vector<16x1xf32>
    %159 = arith.addf %155, %158 : vector<16x1xf32>
    %160 = math.rsqrt %159 : vector<16x1xf32>
    %161 = vector.broadcast %160 : vector<16x1xf32> to vector<16x32xf32>
    %162 = arith.mulf %157, %161 : vector<16x32xf32>
    %163 = vector.broadcast %140 : vector<1x32xf32> to vector<16x32xf32>
    %164 = arith.mulf %162, %163 : vector<16x32xf32>
    %165 = vector.broadcast %142 : vector<1x32xf32> to vector<16x32xf32>
    %166 = arith.addf %164, %165 : vector<16x32xf32>
    %c0_59 = arith.constant 0 : index
    %c0_60 = arith.constant 0 : index
    %c0_61 = arith.constant 0 : index
    %167 = vector.load %arg11[%c0_59, %c0_60, %c0_61] : memref<2x32x64xf32, #tpu.memory_space<vmem>>, vector<1x32x64xf32>
    %168 = vector.shape_cast %167 : vector<1x32x64xf32> to vector<32x64xf32>
    %c0_62 = arith.constant 0 : index
    %c0_63 = arith.constant 0 : index
    %c0_64 = arith.constant 0 : index
    %169 = vector.load %arg12[%c0_62, %c0_63, %c0_64] : memref<2x1x64xf32, #tpu.memory_space<vmem>>, vector<1x1x64xf32>
    %170 = vector.shape_cast %169 : vector<1x1x64xf32> to vector<1x64xf32>
    %cst_65 = arith.constant dense<0.000000e+00> : vector<16x64xf32>
    %171 = tpu.matmul %166, %168, %cst_65 {dimension_numbers = #tpu.dot_dimension_numbers<[1], [0], [0], [1], [0, 0, 1, 1], [], []>} : vector<16x32xf32>, vector<32x64xf32>, vector<16x64xf32> -> vector<16x64xf32>
    %172 = vector.broadcast %170 : vector<1x64xf32> to vector<16x64xf32>
    %173 = arith.addf %171, %172 : vector<16x64xf32>
    %cst_66 = arith.constant 0.000000e+00 : f32
    %174 = vector.broadcast %cst_66 : f32 to vector<16x64xf32>
    %175 = arith.maximumf %173, %174 : vector<16x64xf32>
    %c0_67 = arith.constant 0 : index
    %c0_68 = arith.constant 0 : index
    %c0_69 = arith.constant 0 : index
    %176 = vector.load %arg13[%c0_67, %c0_68, %c0_69] : memref<2x64x32xf32, #tpu.memory_space<vmem>>, vector<1x64x32xf32>
    %177 = vector.shape_cast %176 : vector<1x64x32xf32> to vector<64x32xf32>
    %c0_70 = arith.constant 0 : index
    %c0_71 = arith.constant 0 : index
    %c0_72 = arith.constant 0 : index
    %178 = vector.load %arg14[%c0_70, %c0_71, %c0_72] : memref<2x1x32xf32, #tpu.memory_space<vmem>>, vector<1x1x32xf32>
    %179 = vector.shape_cast %178 : vector<1x1x32xf32> to vector<1x32xf32>
    %cst_73 = arith.constant dense<0.000000e+00> : vector<16x32xf32>
    %180 = tpu.matmul %175, %177, %cst_73 {dimension_numbers = #tpu.dot_dimension_numbers<[1], [0], [0], [1], [0, 0, 1, 1], [], []>} : vector<16x64xf32>, vector<64x32xf32>, vector<16x32xf32> -> vector<16x32xf32>
    %181 = vector.broadcast %179 : vector<1x32xf32> to vector<16x32xf32>
    %182 = arith.addf %180, %181 : vector<16x32xf32>
    %183 = arith.addf %166, %182 : vector<16x32xf32>
    %c0_74 = arith.constant 0 : index
    %c0_75 = arith.constant 0 : index
    %c0_76 = arith.constant 0 : index
    %184 = vector.load %arg15[%c0_74, %c0_75, %c0_76] : memref<2x1x32xf32, #tpu.memory_space<vmem>>, vector<1x1x32xf32>
    %185 = vector.shape_cast %184 : vector<1x1x32xf32> to vector<1x32xf32>
    %c0_77 = arith.constant 0 : index
    %c0_78 = arith.constant 0 : index
    %c0_79 = arith.constant 0 : index
    %186 = vector.load %arg16[%c0_77, %c0_78, %c0_79] : memref<2x1x32xf32, #tpu.memory_space<vmem>>, vector<1x1x32xf32>
    %187 = vector.shape_cast %186 : vector<1x1x32xf32> to vector<1x32xf32>
    %cst_80 = arith.constant dense<0.000000e+00> : vector<16xf32>
    %188 = vector.multi_reduction <add>, %183, %cst_80 [1] : vector<16x32xf32> to vector<16xf32>
    %189 = vector.shape_cast %188 : vector<16xf32> to vector<16x1xf32>
    %cst_81 = arith.constant 3.200000e+01 : f32
    %190 = vector.broadcast %cst_81 : f32 to vector<16x1xf32>
    %191 = arith.divf %189, %190 : vector<16x1xf32>
    %192 = vector.broadcast %191 : vector<16x1xf32> to vector<16x32xf32>
    %193 = arith.subf %183, %192 : vector<16x32xf32>
    %194 = vector.broadcast %191 : vector<16x1xf32> to vector<16x32xf32>
    %195 = arith.subf %183, %194 : vector<16x32xf32>
    %196 = arith.mulf %193, %195 : vector<16x32xf32>
    %cst_82 = arith.constant dense<0.000000e+00> : vector<16xf32>
    %197 = vector.multi_reduction <add>, %196, %cst_82 [1] : vector<16x32xf32> to vector<16xf32>
    %198 = vector.shape_cast %197 : vector<16xf32> to vector<16x1xf32>
    %cst_83 = arith.constant 3.200000e+01 : f32
    %199 = vector.broadcast %cst_83 : f32 to vector<16x1xf32>
    %200 = arith.divf %198, %199 : vector<16x1xf32>
    %201 = vector.broadcast %191 : vector<16x1xf32> to vector<16x32xf32>
    %202 = arith.subf %183, %201 : vector<16x32xf32>
    %cst_84 = arith.constant 9.99999974E-6 : f32
    %203 = vector.broadcast %cst_84 : f32 to vector<16x1xf32>
    %204 = arith.addf %200, %203 : vector<16x1xf32>
    %205 = math.rsqrt %204 : vector<16x1xf32>
    %206 = vector.broadcast %205 : vector<16x1xf32> to vector<16x32xf32>
    %207 = arith.mulf %202, %206 : vector<16x32xf32>
    %208 = vector.broadcast %185 : vector<1x32xf32> to vector<16x32xf32>
    %209 = arith.mulf %207, %208 : vector<16x32xf32>
    %210 = vector.broadcast %187 : vector<1x32xf32> to vector<16x32xf32>
    %211 = arith.addf %209, %210 : vector<16x32xf32>
    %c1 = arith.constant 1 : index
    %c0_85 = arith.constant 0 : index
    %c0_86 = arith.constant 0 : index
    %212 = vector.load %arg5[%c1, %c0_85, %c0_86] : memref<2x32x96xf32, #tpu.memory_space<vmem>>, vector<1x32x96xf32>
    %213 = vector.shape_cast %212 : vector<1x32x96xf32> to vector<32x96xf32>
    %c1_87 = arith.constant 1 : index
    %c0_88 = arith.constant 0 : index
    %c0_89 = arith.constant 0 : index
    %214 = vector.load %arg6[%c1_87, %c0_88, %c0_89] : memref<2x1x96xf32, #tpu.memory_space<vmem>>, vector<1x1x96xf32>
    %215 = vector.shape_cast %214 : vector<1x1x96xf32> to vector<1x96xf32>
    %cst_90 = arith.constant dense<0.000000e+00> : vector<16x96xf32>
    %216 = tpu.matmul %211, %213, %cst_90 {dimension_numbers = #tpu.dot_dimension_numbers<[1], [0], [0], [1], [0, 0, 1, 1], [], []>} : vector<16x32xf32>, vector<32x96xf32>, vector<16x96xf32> -> vector<16x96xf32>
    %217 = vector.broadcast %215 : vector<1x96xf32> to vector<16x96xf32>
    %218 = arith.addf %216, %217 : vector<16x96xf32>
    %c1_91 = arith.constant 1 : index
    %c0_92 = arith.constant 0 : index
    %c0_93 = arith.constant 0 : index
    %219 = vector.load %arg7[%c1_91, %c0_92, %c0_93] : memref<2x32x32xf32, #tpu.memory_space<vmem>>, vector<1x32x32xf32>
    %220 = vector.shape_cast %219 : vector<1x32x32xf32> to vector<32x32xf32>
    %cst_94 = arith.constant 0.000000e+00 : f32
    %221 = vector.broadcast %cst_94 : f32 to vector<16x32xf32>
    %222 = vector.extract_strided_slice %218 {offsets = [0, 0], sizes = [16, 8], strides = [1, 1]} : vector<16x96xf32> to vector<16x8xf32>
    %223 = vector.shape_cast %222 : vector<16x8xf32> to vector<2x8x8xf32>
    %224 = vector.extract_strided_slice %218 {offsets = [0, 32], sizes = [16, 8], strides = [1, 1]} : vector<16x96xf32> to vector<16x8xf32>
    %225 = vector.shape_cast %224 : vector<16x8xf32> to vector<2x8x8xf32>
    %226 = vector.extract_strided_slice %218 {offsets = [0, 64], sizes = [16, 8], strides = [1, 1]} : vector<16x96xf32> to vector<16x8xf32>
    %227 = vector.shape_cast %226 : vector<16x8xf32> to vector<2x8x8xf32>
    "tpu.trace_start"() <{level = 10 : i32, message = "bnd,bmd->bnm"}> : () -> ()
    %cst_95 = arith.constant dense<0.000000e+00> : vector<2x8x8xf32>
    %228 = tpu.matmul %223, %225, %cst_95 {dimension_numbers = #tpu.dot_dimension_numbers<[2], [2], [1], [1], [0, 0, 0, 1, 1, 1], [0], [0]>} : vector<2x8x8xf32>, vector<2x8x8xf32>, vector<2x8x8xf32> -> vector<2x8x8xf32>
    "tpu.trace_stop"() : () -> ()
    %cst_96 = arith.constant 0.353553385 : f32
    %229 = vector.broadcast %cst_96 : f32 to vector<2x8x8xf32>
    %230 = arith.mulf %228, %229 : vector<2x8x8xf32>
    %231 = arith.addf %230, %15 : vector<2x8x8xf32>
    %cst_97 = arith.constant dense<0xFF800000> : vector<2x8xf32>
    %232 = vector.multi_reduction <maximumf>, %231, %cst_97 [2] : vector<2x8x8xf32> to vector<2x8xf32>
    %233 = vector.shape_cast %232 : vector<2x8xf32> to vector<2x8x1xf32>
    %234 = vector.broadcast %233 : vector<2x8x1xf32> to vector<2x8x8xf32>
    %235 = arith.subf %231, %234 : vector<2x8x8xf32>
    %236 = math.exp %235 : vector<2x8x8xf32>
    %cst_98 = arith.constant dense<0.000000e+00> : vector<2x8xf32>
    %237 = vector.multi_reduction <add>, %236, %cst_98 [2] : vector<2x8x8xf32> to vector<2x8xf32>
    %238 = vector.shape_cast %237 : vector<2x8xf32> to vector<2x8x1xf32>
    %239 = tpu.reciprocal %238 {approx = true} : vector<2x8x1xf32> -> vector<2x8x1xf32>
    %240 = vector.broadcast %239 : vector<2x8x1xf32> to vector<2x8x8xf32>
    %241 = arith.mulf %236, %240 : vector<2x8x8xf32>
    "tpu.trace_start"() <{level = 10 : i32, message = "bnm,bmd->bnd"}> : () -> ()
    %cst_99 = arith.constant dense<0.000000e+00> : vector<2x8x8xf32>
    %242 = tpu.matmul %241, %227, %cst_99 {dimension_numbers = #tpu.dot_dimension_numbers<[2], [1], [1], [2], [0, 0, 0, 1, 1, 2], [0], [0]>} : vector<2x8x8xf32>, vector<2x8x8xf32>, vector<2x8x8xf32> -> vector<2x8x8xf32>
    "tpu.trace_stop"() : () -> ()
    %243 = vector.shape_cast %242 : vector<2x8x8xf32> to vector<16x8xf32>
    %244 = vector.extract_strided_slice %220 {offsets = [0, 0], sizes = [8, 32], strides = [1, 1]} : vector<32x32xf32> to vector<8x32xf32>
    %cst_100 = arith.constant dense<0.000000e+00> : vector<16x32xf32>
    %245 = tpu.matmul %243, %244, %cst_100 {dimension_numbers = #tpu.dot_dimension_numbers<[1], [0], [0], [1], [0, 0, 1, 1], [], []>} : vector<16x8xf32>, vector<8x32xf32>, vector<16x32xf32> -> vector<16x32xf32>
    %246 = arith.addf %221, %245 : vector<16x32xf32>
    %247 = vector.extract_strided_slice %218 {offsets = [0, 8], sizes = [16, 8], strides = [1, 1]} : vector<16x96xf32> to vector<16x8xf32>
    %248 = vector.shape_cast %247 : vector<16x8xf32> to vector<2x8x8xf32>
    %249 = vector.extract_strided_slice %218 {offsets = [0, 40], sizes = [16, 8], strides = [1, 1]} : vector<16x96xf32> to vector<16x8xf32>
    %250 = vector.shape_cast %249 : vector<16x8xf32> to vector<2x8x8xf32>
    %251 = vector.extract_strided_slice %218 {offsets = [0, 72], sizes = [16, 8], strides = [1, 1]} : vector<16x96xf32> to vector<16x8xf32>
    %252 = vector.shape_cast %251 : vector<16x8xf32> to vector<2x8x8xf32>
    "tpu.trace_start"() <{level = 10 : i32, message = "bnd,bmd->bnm"}> : () -> ()
    %cst_101 = arith.constant dense<0.000000e+00> : vector<2x8x8xf32>
    %253 = tpu.matmul %248, %250, %cst_101 {dimension_numbers = #tpu.dot_dimension_numbers<[2], [2], [1], [1], [0, 0, 0, 1, 1, 1], [0], [0]>} : vector<2x8x8xf32>, vector<2x8x8xf32>, vector<2x8x8xf32> -> vector<2x8x8xf32>
    "tpu.trace_stop"() : () -> ()
    %cst_102 = arith.constant 0.353553385 : f32
    %254 = vector.broadcast %cst_102 : f32 to vector<2x8x8xf32>
    %255 = arith.mulf %253, %254 : vector<2x8x8xf32>
    %256 = arith.addf %255, %15 : vector<2x8x8xf32>
    %cst_103 = arith.constant dense<0xFF800000> : vector<2x8xf32>
    %257 = vector.multi_reduction <maximumf>, %256, %cst_103 [2] : vector<2x8x8xf32> to vector<2x8xf32>
    %258 = vector.shape_cast %257 : vector<2x8xf32> to vector<2x8x1xf32>
    %259 = vector.broadcast %258 : vector<2x8x1xf32> to vector<2x8x8xf32>
    %260 = arith.subf %256, %259 : vector<2x8x8xf32>
    %261 = math.exp %260 : vector<2x8x8xf32>
    %cst_104 = arith.constant dense<0.000000e+00> : vector<2x8xf32>
    %262 = vector.multi_reduction <add>, %261, %cst_104 [2] : vector<2x8x8xf32> to vector<2x8xf32>
    %263 = vector.shape_cast %262 : vector<2x8xf32> to vector<2x8x1xf32>
    %264 = tpu.reciprocal %263 {approx = true} : vector<2x8x1xf32> -> vector<2x8x1xf32>
    %265 = vector.broadcast %264 : vector<2x8x1xf32> to vector<2x8x8xf32>
    %266 = arith.mulf %261, %265 : vector<2x8x8xf32>
    "tpu.trace_start"() <{level = 10 : i32, message = "bnm,bmd->bnd"}> : () -> ()
    %cst_105 = arith.constant dense<0.000000e+00> : vector<2x8x8xf32>
    %267 = tpu.matmul %266, %252, %cst_105 {dimension_numbers = #tpu.dot_dimension_numbers<[2], [1], [1], [2], [0, 0, 0, 1, 1, 2], [0], [0]>} : vector<2x8x8xf32>, vector<2x8x8xf32>, vector<2x8x8xf32> -> vector<2x8x8xf32>
    "tpu.trace_stop"() : () -> ()
    %268 = vector.shape_cast %267 : vector<2x8x8xf32> to vector<16x8xf32>
    %269 = vector.extract_strided_slice %220 {offsets = [8, 0], sizes = [8, 32], strides = [1, 1]} : vector<32x32xf32> to vector<8x32xf32>
    %cst_106 = arith.constant dense<0.000000e+00> : vector<16x32xf32>
    %270 = tpu.matmul %268, %269, %cst_106 {dimension_numbers = #tpu.dot_dimension_numbers<[1], [0], [0], [1], [0, 0, 1, 1], [], []>} : vector<16x8xf32>, vector<8x32xf32>, vector<16x32xf32> -> vector<16x32xf32>
    %271 = arith.addf %246, %270 : vector<16x32xf32>
    %272 = vector.extract_strided_slice %218 {offsets = [0, 16], sizes = [16, 8], strides = [1, 1]} : vector<16x96xf32> to vector<16x8xf32>
    %273 = vector.shape_cast %272 : vector<16x8xf32> to vector<2x8x8xf32>
    %274 = vector.extract_strided_slice %218 {offsets = [0, 48], sizes = [16, 8], strides = [1, 1]} : vector<16x96xf32> to vector<16x8xf32>
    %275 = vector.shape_cast %274 : vector<16x8xf32> to vector<2x8x8xf32>
    %276 = vector.extract_strided_slice %218 {offsets = [0, 80], sizes = [16, 8], strides = [1, 1]} : vector<16x96xf32> to vector<16x8xf32>
    %277 = vector.shape_cast %276 : vector<16x8xf32> to vector<2x8x8xf32>
    "tpu.trace_start"() <{level = 10 : i32, message = "bnd,bmd->bnm"}> : () -> ()
    %cst_107 = arith.constant dense<0.000000e+00> : vector<2x8x8xf32>
    %278 = tpu.matmul %273, %275, %cst_107 {dimension_numbers = #tpu.dot_dimension_numbers<[2], [2], [1], [1], [0, 0, 0, 1, 1, 1], [0], [0]>} : vector<2x8x8xf32>, vector<2x8x8xf32>, vector<2x8x8xf32> -> vector<2x8x8xf32>
    "tpu.trace_stop"() : () -> ()
    %cst_108 = arith.constant 0.353553385 : f32
    %279 = vector.broadcast %cst_108 : f32 to vector<2x8x8xf32>
    %280 = arith.mulf %278, %279 : vector<2x8x8xf32>
    %281 = arith.addf %280, %15 : vector<2x8x8xf32>
    %cst_109 = arith.constant dense<0xFF800000> : vector<2x8xf32>
    %282 = vector.multi_reduction <maximumf>, %281, %cst_109 [2] : vector<2x8x8xf32> to vector<2x8xf32>
    %283 = vector.shape_cast %282 : vector<2x8xf32> to vector<2x8x1xf32>
    %284 = vector.broadcast %283 : vector<2x8x1xf32> to vector<2x8x8xf32>
    %285 = arith.subf %281, %284 : vector<2x8x8xf32>
    %286 = math.exp %285 : vector<2x8x8xf32>
    %cst_110 = arith.constant dense<0.000000e+00> : vector<2x8xf32>
    %287 = vector.multi_reduction <add>, %286, %cst_110 [2] : vector<2x8x8xf32> to vector<2x8xf32>
    %288 = vector.shape_cast %287 : vector<2x8xf32> to vector<2x8x1xf32>
    %289 = tpu.reciprocal %288 {approx = true} : vector<2x8x1xf32> -> vector<2x8x1xf32>
    %290 = vector.broadcast %289 : vector<2x8x1xf32> to vector<2x8x8xf32>
    %291 = arith.mulf %286, %290 : vector<2x8x8xf32>
    "tpu.trace_start"() <{level = 10 : i32, message = "bnm,bmd->bnd"}> : () -> ()
    %cst_111 = arith.constant dense<0.000000e+00> : vector<2x8x8xf32>
    %292 = tpu.matmul %291, %277, %cst_111 {dimension_numbers = #tpu.dot_dimension_numbers<[2], [1], [1], [2], [0, 0, 0, 1, 1, 2], [0], [0]>} : vector<2x8x8xf32>, vector<2x8x8xf32>, vector<2x8x8xf32> -> vector<2x8x8xf32>
    "tpu.trace_stop"() : () -> ()
    %293 = vector.shape_cast %292 : vector<2x8x8xf32> to vector<16x8xf32>
    %294 = vector.extract_strided_slice %220 {offsets = [16, 0], sizes = [8, 32], strides = [1, 1]} : vector<32x32xf32> to vector<8x32xf32>
    %cst_112 = arith.constant dense<0.000000e+00> : vector<16x32xf32>
    %295 = tpu.matmul %293, %294, %cst_112 {dimension_numbers = #tpu.dot_dimension_numbers<[1], [0], [0], [1], [0, 0, 1, 1], [], []>} : vector<16x8xf32>, vector<8x32xf32>, vector<16x32xf32> -> vector<16x32xf32>
    %296 = arith.addf %271, %295 : vector<16x32xf32>
    %297 = vector.extract_strided_slice %218 {offsets = [0, 24], sizes = [16, 8], strides = [1, 1]} : vector<16x96xf32> to vector<16x8xf32>
    %298 = vector.shape_cast %297 : vector<16x8xf32> to vector<2x8x8xf32>
    %299 = vector.extract_strided_slice %218 {offsets = [0, 56], sizes = [16, 8], strides = [1, 1]} : vector<16x96xf32> to vector<16x8xf32>
    %300 = vector.shape_cast %299 : vector<16x8xf32> to vector<2x8x8xf32>
    %301 = vector.extract_strided_slice %218 {offsets = [0, 88], sizes = [16, 8], strides = [1, 1]} : vector<16x96xf32> to vector<16x8xf32>
    %302 = vector.shape_cast %301 : vector<16x8xf32> to vector<2x8x8xf32>
    "tpu.trace_start"() <{level = 10 : i32, message = "bnd,bmd->bnm"}> : () -> ()
    %cst_113 = arith.constant dense<0.000000e+00> : vector<2x8x8xf32>
    %303 = tpu.matmul %298, %300, %cst_113 {dimension_numbers = #tpu.dot_dimension_numbers<[2], [2], [1], [1], [0, 0, 0, 1, 1, 1], [0], [0]>} : vector<2x8x8xf32>, vector<2x8x8xf32>, vector<2x8x8xf32> -> vector<2x8x8xf32>
    "tpu.trace_stop"() : () -> ()
    %cst_114 = arith.constant 0.353553385 : f32
    %304 = vector.broadcast %cst_114 : f32 to vector<2x8x8xf32>
    %305 = arith.mulf %303, %304 : vector<2x8x8xf32>
    %306 = arith.addf %305, %15 : vector<2x8x8xf32>
    %cst_115 = arith.constant dense<0xFF800000> : vector<2x8xf32>
    %307 = vector.multi_reduction <maximumf>, %306, %cst_115 [2] : vector<2x8x8xf32> to vector<2x8xf32>
    %308 = vector.shape_cast %307 : vector<2x8xf32> to vector<2x8x1xf32>
    %309 = vector.broadcast %308 : vector<2x8x1xf32> to vector<2x8x8xf32>
    %310 = arith.subf %306, %309 : vector<2x8x8xf32>
    %311 = math.exp %310 : vector<2x8x8xf32>
    %cst_116 = arith.constant dense<0.000000e+00> : vector<2x8xf32>
    %312 = vector.multi_reduction <add>, %311, %cst_116 [2] : vector<2x8x8xf32> to vector<2x8xf32>
    %313 = vector.shape_cast %312 : vector<2x8xf32> to vector<2x8x1xf32>
    %314 = tpu.reciprocal %313 {approx = true} : vector<2x8x1xf32> -> vector<2x8x1xf32>
    %315 = vector.broadcast %314 : vector<2x8x1xf32> to vector<2x8x8xf32>
    %316 = arith.mulf %311, %315 : vector<2x8x8xf32>
    "tpu.trace_start"() <{level = 10 : i32, message = "bnm,bmd->bnd"}> : () -> ()
    %cst_117 = arith.constant dense<0.000000e+00> : vector<2x8x8xf32>
    %317 = tpu.matmul %316, %302, %cst_117 {dimension_numbers = #tpu.dot_dimension_numbers<[2], [1], [1], [2], [0, 0, 0, 1, 1, 2], [0], [0]>} : vector<2x8x8xf32>, vector<2x8x8xf32>, vector<2x8x8xf32> -> vector<2x8x8xf32>
    "tpu.trace_stop"() : () -> ()
    %318 = vector.shape_cast %317 : vector<2x8x8xf32> to vector<16x8xf32>
    %319 = vector.extract_strided_slice %220 {offsets = [24, 0], sizes = [8, 32], strides = [1, 1]} : vector<32x32xf32> to vector<8x32xf32>
    %cst_118 = arith.constant dense<0.000000e+00> : vector<16x32xf32>
    %320 = tpu.matmul %318, %319, %cst_118 {dimension_numbers = #tpu.dot_dimension_numbers<[1], [0], [0], [1], [0, 0, 1, 1], [], []>} : vector<16x8xf32>, vector<8x32xf32>, vector<16x32xf32> -> vector<16x32xf32>
    %321 = arith.addf %296, %320 : vector<16x32xf32>
    %c1_119 = arith.constant 1 : index
    %c0_120 = arith.constant 0 : index
    %c0_121 = arith.constant 0 : index
    %322 = vector.load %arg8[%c1_119, %c0_120, %c0_121] : memref<2x1x32xf32, #tpu.memory_space<vmem>>, vector<1x1x32xf32>
    %323 = vector.shape_cast %322 : vector<1x1x32xf32> to vector<1x32xf32>
    %324 = vector.broadcast %323 : vector<1x32xf32> to vector<16x32xf32>
    %325 = arith.addf %321, %324 : vector<16x32xf32>
    %326 = arith.addf %211, %325 : vector<16x32xf32>
    %c1_122 = arith.constant 1 : index
    %c0_123 = arith.constant 0 : index
    %c0_124 = arith.constant 0 : index
    %327 = vector.load %arg9[%c1_122, %c0_123, %c0_124] : memref<2x1x32xf32, #tpu.memory_space<vmem>>, vector<1x1x32xf32>
    %328 = vector.shape_cast %327 : vector<1x1x32xf32> to vector<1x32xf32>
    %c1_125 = arith.constant 1 : index
    %c0_126 = arith.constant 0 : index
    %c0_127 = arith.constant 0 : index
    %329 = vector.load %arg10[%c1_125, %c0_126, %c0_127] : memref<2x1x32xf32, #tpu.memory_space<vmem>>, vector<1x1x32xf32>
    %330 = vector.shape_cast %329 : vector<1x1x32xf32> to vector<1x32xf32>
    %cst_128 = arith.constant dense<0.000000e+00> : vector<16xf32>
    %331 = vector.multi_reduction <add>, %326, %cst_128 [1] : vector<16x32xf32> to vector<16xf32>
    %332 = vector.shape_cast %331 : vector<16xf32> to vector<16x1xf32>
    %cst_129 = arith.constant 3.200000e+01 : f32
    %333 = vector.broadcast %cst_129 : f32 to vector<16x1xf32>
    %334 = arith.divf %332, %333 : vector<16x1xf32>
    %335 = vector.broadcast %334 : vector<16x1xf32> to vector<16x32xf32>
    %336 = arith.subf %326, %335 : vector<16x32xf32>
    %337 = vector.broadcast %334 : vector<16x1xf32> to vector<16x32xf32>
    %338 = arith.subf %326, %337 : vector<16x32xf32>
    %339 = arith.mulf %336, %338 : vector<16x32xf32>
    %cst_130 = arith.constant dense<0.000000e+00> : vector<16xf32>
    %340 = vector.multi_reduction <add>, %339, %cst_130 [1] : vector<16x32xf32> to vector<16xf32>
    %341 = vector.shape_cast %340 : vector<16xf32> to vector<16x1xf32>
    %cst_131 = arith.constant 3.200000e+01 : f32
    %342 = vector.broadcast %cst_131 : f32 to vector<16x1xf32>
    %343 = arith.divf %341, %342 : vector<16x1xf32>
    %344 = vector.broadcast %334 : vector<16x1xf32> to vector<16x32xf32>
    %345 = arith.subf %326, %344 : vector<16x32xf32>
    %cst_132 = arith.constant 9.99999974E-6 : f32
    %346 = vector.broadcast %cst_132 : f32 to vector<16x1xf32>
    %347 = arith.addf %343, %346 : vector<16x1xf32>
    %348 = math.rsqrt %347 : vector<16x1xf32>
    %349 = vector.broadcast %348 : vector<16x1xf32> to vector<16x32xf32>
    %350 = arith.mulf %345, %349 : vector<16x32xf32>
    %351 = vector.broadcast %328 : vector<1x32xf32> to vector<16x32xf32>
    %352 = arith.mulf %350, %351 : vector<16x32xf32>
    %353 = vector.broadcast %330 : vector<1x32xf32> to vector<16x32xf32>
    %354 = arith.addf %352, %353 : vector<16x32xf32>
    %c1_133 = arith.constant 1 : index
    %c0_134 = arith.constant 0 : index
    %c0_135 = arith.constant 0 : index
    %355 = vector.load %arg11[%c1_133, %c0_134, %c0_135] : memref<2x32x64xf32, #tpu.memory_space<vmem>>, vector<1x32x64xf32>
    %356 = vector.shape_cast %355 : vector<1x32x64xf32> to vector<32x64xf32>
    %c1_136 = arith.constant 1 : index
    %c0_137 = arith.constant 0 : index
    %c0_138 = arith.constant 0 : index
    %357 = vector.load %arg12[%c1_136, %c0_137, %c0_138] : memref<2x1x64xf32, #tpu.memory_space<vmem>>, vector<1x1x64xf32>
    %358 = vector.shape_cast %357 : vector<1x1x64xf32> to vector<1x64xf32>
    %cst_139 = arith.constant dense<0.000000e+00> : vector<16x64xf32>
    %359 = tpu.matmul %354, %356, %cst_139 {dimension_numbers = #tpu.dot_dimension_numbers<[1], [0], [0], [1], [0, 0, 1, 1], [], []>} : vector<16x32xf32>, vector<32x64xf32>, vector<16x64xf32> -> vector<16x64xf32>
    %360 = vector.broadcast %358 : vector<1x64xf32> to vector<16x64xf32>
    %361 = arith.addf %359, %360 : vector<16x64xf32>
    %cst_140 = arith.constant 0.000000e+00 : f32
    %362 = vector.broadcast %cst_140 : f32 to vector<16x64xf32>
    %363 = arith.maximumf %361, %362 : vector<16x64xf32>
    %c1_141 = arith.constant 1 : index
    %c0_142 = arith.constant 0 : index
    %c0_143 = arith.constant 0 : index
    %364 = vector.load %arg13[%c1_141, %c0_142, %c0_143] : memref<2x64x32xf32, #tpu.memory_space<vmem>>, vector<1x64x32xf32>
    %365 = vector.shape_cast %364 : vector<1x64x32xf32> to vector<64x32xf32>
    %c1_144 = arith.constant 1 : index
    %c0_145 = arith.constant 0 : index
    %c0_146 = arith.constant 0 : index
    %366 = vector.load %arg14[%c1_144, %c0_145, %c0_146] : memref<2x1x32xf32, #tpu.memory_space<vmem>>, vector<1x1x32xf32>
    %367 = vector.shape_cast %366 : vector<1x1x32xf32> to vector<1x32xf32>
    %cst_147 = arith.constant dense<0.000000e+00> : vector<16x32xf32>
    %368 = tpu.matmul %363, %365, %cst_147 {dimension_numbers = #tpu.dot_dimension_numbers<[1], [0], [0], [1], [0, 0, 1, 1], [], []>} : vector<16x64xf32>, vector<64x32xf32>, vector<16x32xf32> -> vector<16x32xf32>
    %369 = vector.broadcast %367 : vector<1x32xf32> to vector<16x32xf32>
    %370 = arith.addf %368, %369 : vector<16x32xf32>
    %371 = arith.addf %354, %370 : vector<16x32xf32>
    %c1_148 = arith.constant 1 : index
    %c0_149 = arith.constant 0 : index
    %c0_150 = arith.constant 0 : index
    %372 = vector.load %arg15[%c1_148, %c0_149, %c0_150] : memref<2x1x32xf32, #tpu.memory_space<vmem>>, vector<1x1x32xf32>
    %373 = vector.shape_cast %372 : vector<1x1x32xf32> to vector<1x32xf32>
    %c1_151 = arith.constant 1 : index
    %c0_152 = arith.constant 0 : index
    %c0_153 = arith.constant 0 : index
    %374 = vector.load %arg16[%c1_151, %c0_152, %c0_153] : memref<2x1x32xf32, #tpu.memory_space<vmem>>, vector<1x1x32xf32>
    %375 = vector.shape_cast %374 : vector<1x1x32xf32> to vector<1x32xf32>
    %cst_154 = arith.constant dense<0.000000e+00> : vector<16xf32>
    %376 = vector.multi_reduction <add>, %371, %cst_154 [1] : vector<16x32xf32> to vector<16xf32>
    %377 = vector.shape_cast %376 : vector<16xf32> to vector<16x1xf32>
    %cst_155 = arith.constant 3.200000e+01 : f32
    %378 = vector.broadcast %cst_155 : f32 to vector<16x1xf32>
    %379 = arith.divf %377, %378 : vector<16x1xf32>
    %380 = vector.broadcast %379 : vector<16x1xf32> to vector<16x32xf32>
    %381 = arith.subf %371, %380 : vector<16x32xf32>
    %382 = vector.broadcast %379 : vector<16x1xf32> to vector<16x32xf32>
    %383 = arith.subf %371, %382 : vector<16x32xf32>
    %384 = arith.mulf %381, %383 : vector<16x32xf32>
    %cst_156 = arith.constant dense<0.000000e+00> : vector<16xf32>
    %385 = vector.multi_reduction <add>, %384, %cst_156 [1] : vector<16x32xf32> to vector<16xf32>
    %386 = vector.shape_cast %385 : vector<16xf32> to vector<16x1xf32>
    %cst_157 = arith.constant 3.200000e+01 : f32
    %387 = vector.broadcast %cst_157 : f32 to vector<16x1xf32>
    %388 = arith.divf %386, %387 : vector<16x1xf32>
    %389 = vector.broadcast %379 : vector<16x1xf32> to vector<16x32xf32>
    %390 = arith.subf %371, %389 : vector<16x32xf32>
    %cst_158 = arith.constant 9.99999974E-6 : f32
    %391 = vector.broadcast %cst_158 : f32 to vector<16x1xf32>
    %392 = arith.addf %388, %391 : vector<16x1xf32>
    %393 = math.rsqrt %392 : vector<16x1xf32>
    %394 = vector.broadcast %393 : vector<16x1xf32> to vector<16x32xf32>
    %395 = arith.mulf %390, %394 : vector<16x32xf32>
    %396 = vector.broadcast %373 : vector<1x32xf32> to vector<16x32xf32>
    %397 = arith.mulf %395, %396 : vector<16x32xf32>
    %398 = vector.broadcast %375 : vector<1x32xf32> to vector<16x32xf32>
    %399 = arith.addf %397, %398 : vector<16x32xf32>
    %c0_159 = arith.constant 0 : index
    %c0_160 = arith.constant 0 : index
    %400 = vector.load %arg27[%c0_159, %c0_160] : memref<16x32xf32, #tpu.memory_space<vmem>>, vector<16x32xf32>
    tpu.vector_store %arg27[%c0_159, %c0_160], %399 {strides = array<i32>} : memref<16x32xf32, #tpu.memory_space<vmem>>, vector<16x32xf32>,
    %c0_i32_161 = arith.constant 0 : i32
    %401 = tpu.memref_slice %arg32[%c0_i32_161] : memref<3x!tpu.dma_semaphore, #tpu.memory_space<semaphore_mem>> -> memref<1x!tpu.dma_semaphore, #tpu.memory_space<semaphore_mem>>
    %402 = tpu.memref_squeeze %401 : memref<1x!tpu.dma_semaphore, #tpu.memory_space<semaphore_mem>> -> memref<!tpu.dma_semaphore, #tpu.memory_space<semaphore_mem>>
    tpu.wait_dma2 semaphore(%402 : memref<!tpu.dma_semaphore, #tpu.memory_space<semaphore_mem>>) src(%arg17 : memref<32x1024xbf16, #tpu.memory_space<any>>) dst(%arg29 : memref<32x1024xbf16, #tpu.memory_space<vmem>>)
    %c1_i32_162 = arith.constant 1 : i32
    %403 = tpu.memref_slice %arg32[%c1_i32_162] : memref<3x!tpu.dma_semaphore, #tpu.memory_space<semaphore_mem>> -> memref<1x!tpu.dma_semaphore, #tpu.memory_space<semaphore_mem>>
    %404 = tpu.memref_squeeze %403 : memref<1x!tpu.dma_semaphore, #tpu.memory_space<semaphore_mem>> -> memref<!tpu.dma_semaphore, #tpu.memory_space<semaphore_mem>>
    tpu.wait_dma2 semaphore(%404 : memref<!tpu.dma_semaphore, #tpu.memory_space<semaphore_mem>>) src(%arg19 : memref<512x256xbf16, #tpu.memory_space<any>>) dst(%arg30 : memref<512x256xbf16, #tpu.memory_space<vmem>>)
    %c2_i32_163 = arith.constant 2 : i32
    %405 = tpu.memref_slice %arg32[%c2_i32_163] : memref<3x!tpu.dma_semaphore, #tpu.memory_space<semaphore_mem>> -> memref<1x!tpu.dma_semaphore, #tpu.memory_space<semaphore_mem>>
    %406 = tpu.memref_squeeze %405 : memref<1x!tpu.dma_semaphore, #tpu.memory_space<semaphore_mem>> -> memref<!tpu.dma_semaphore, #tpu.memory_space<semaphore_mem>>
    tpu.wait_dma2 semaphore(%406 : memref<!tpu.dma_semaphore, #tpu.memory_space<semaphore_mem>>) src(%arg21 : memref<512x256xbf16, #tpu.memory_space<any>>) dst(%arg31 : memref<512x256xbf16, #tpu.memory_space<vmem>>)
    %407 = arith.truncf %399 : vector<16x32xf32> to vector<16x32xbf16>
    %c0_164 = arith.constant 0 : index
    %c0_165 = arith.constant 0 : index
    %408 = vector.load %arg29[%c0_164, %c0_165] : memref<32x1024xbf16, #tpu.memory_space<vmem>>, vector<32x1024xbf16>
    %cst_166 = arith.constant dense<0.000000e+00> : vector<16x1024xf32>
    %409 = tpu.matmul %407, %408, %cst_166 {dimension_numbers = #tpu.dot_dimension_numbers<[1], [0], [0], [1], [0, 0, 1, 1], [], []>} : vector<16x32xbf16>, vector<32x1024xbf16>, vector<16x1024xf32> -> vector<16x1024xf32>
    %c0_167 = arith.constant 0 : index
    %c0_168 = arith.constant 0 : index
    %410 = vector.load %arg18[%c0_167, %c0_168] : memref<1x1024xf32, #tpu.memory_space<vmem>>, vector<1x1024xf32>
    %411 = vector.broadcast %410 : vector<1x1024xf32> to vector<16x1024xf32>
    %412 = arith.addf %409, %411 : vector<16x1024xf32>
    %cst_169 = arith.constant 0.000000e+00 : f32
    %413 = vector.broadcast %cst_169 : f32 to vector<16x1024xf32>
    %414 = arith.maximumf %412, %413 : vector<16x1024xf32>
    %415 = vector.extract_strided_slice %414 {offsets = [0, 0], sizes = [16, 512], strides = [1, 1]} : vector<16x1024xf32> to vector<16x512xf32>
    %416 = arith.truncf %415 : vector<16x512xf32> to vector<16x512xbf16>
    %c0_170 = arith.constant 0 : index
    %c0_171 = arith.constant 0 : index
    %417 = vector.load %arg30[%c0_170, %c0_171] : memref<512x256xbf16, #tpu.memory_space<vmem>>, vector<512x256xbf16>
    %cst_172 = arith.constant dense<0.000000e+00> : vector<16x256xf32>
    %418 = tpu.matmul %416, %417, %cst_172 {dimension_numbers = #tpu.dot_dimension_numbers<[1], [0], [0], [1], [0, 0, 1, 1], [], []>} : vector<16x512xbf16>, vector<512x256xbf16>, vector<16x256xf32> -> vector<16x256xf32>
    %c0_173 = arith.constant 0 : index
    %c0_174 = arith.constant 0 : index
    %419 = vector.load %arg20[%c0_173, %c0_174] : memref<1x256xf32, #tpu.memory_space<vmem>>, vector<1x256xf32>
    %420 = vector.broadcast %419 : vector<1x256xf32> to vector<16x256xf32>
    %421 = arith.addf %418, %420 : vector<16x256xf32>
    %cst_175 = arith.constant 0.000000e+00 : f32
    %422 = vector.broadcast %cst_175 : f32 to vector<16x256xf32>
    %423 = arith.maximumf %421, %422 : vector<16x256xf32>
    %424 = vector.extract_strided_slice %414 {offsets = [0, 512], sizes = [16, 512], strides = [1, 1]} : vector<16x1024xf32> to vector<16x512xf32>
    %425 = arith.truncf %424 : vector<16x512xf32> to vector<16x512xbf16>
    %c0_176 = arith.constant 0 : index
    %c0_177 = arith.constant 0 : index
    %426 = vector.load %arg31[%c0_176, %c0_177] : memref<512x256xbf16, #tpu.memory_space<vmem>>, vector<512x256xbf16>
    %cst_178 = arith.constant dense<0.000000e+00> : vector<16x256xf32>
    %427 = tpu.matmul %425, %426, %cst_178 {dimension_numbers = #tpu.dot_dimension_numbers<[1], [0], [0], [1], [0, 0, 1, 1], [], []>} : vector<16x512xbf16>, vector<512x256xbf16>, vector<16x256xf32> -> vector<16x256xf32>
    %c0_179 = arith.constant 0 : index
    %c0_180 = arith.constant 0 : index
    %428 = vector.load %arg22[%c0_179, %c0_180] : memref<1x256xf32, #tpu.memory_space<vmem>>, vector<1x256xf32>
    %429 = vector.broadcast %428 : vector<1x256xf32> to vector<16x256xf32>
    %430 = arith.addf %427, %429 : vector<16x256xf32>
    %cst_181 = arith.constant 0.000000e+00 : f32
    %431 = vector.broadcast %cst_181 : f32 to vector<16x256xf32>
    %432 = arith.maximumf %430, %431 : vector<16x256xf32>
    %c0_182 = arith.constant 0 : index
    %c0_183 = arith.constant 0 : index
    %433 = vector.load %arg23[%c0_182, %c0_183] : memref<256x4xf32, #tpu.memory_space<vmem>>, vector<256x4xf32>
    %c0_184 = arith.constant 0 : index
    %c0_185 = arith.constant 0 : index
    %434 = vector.load %arg24[%c0_184, %c0_185] : memref<1x4xf32, #tpu.memory_space<vmem>>, vector<1x4xf32>
    %cst_186 = arith.constant dense<0.000000e+00> : vector<16x4xf32>
    %435 = tpu.matmul %423, %433, %cst_186 {dimension_numbers = #tpu.dot_dimension_numbers<[1], [0], [0], [1], [0, 0, 1, 1], [], []>} : vector<16x256xf32>, vector<256x4xf32>, vector<16x4xf32> -> vector<16x4xf32>
    %436 = vector.broadcast %434 : vector<1x4xf32> to vector<16x4xf32>
    %437 = arith.addf %435, %436 : vector<16x4xf32>
    %c0_187 = arith.constant 0 : index
    %c0_188 = arith.constant 0 : index
    %438 = vector.load %arg25[%c0_187, %c0_188] : memref<256x1xf32, #tpu.memory_space<vmem>>, vector<256x1xf32>
    %c0_189 = arith.constant 0 : index
    %c0_190 = arith.constant 0 : index
    %439 = vector.load %arg26[%c0_189, %c0_190] : memref<1x1xf32, #tpu.memory_space<vmem>>, vector<1x1xf32>
    %cst_191 = arith.constant dense<0.000000e+00> : vector<16x1xf32>
    %440 = tpu.matmul %432, %438, %cst_191 {dimension_numbers = #tpu.dot_dimension_numbers<[1], [0], [0], [1], [0, 0, 1, 1], [], []>} : vector<16x256xf32>, vector<256x1xf32>, vector<16x1xf32> -> vector<16x1xf32>
    %441 = vector.broadcast %439 : vector<1x1xf32> to vector<16x1xf32>
    %442 = arith.addf %440, %441 : vector<16x1xf32>
    %c0_192 = arith.constant 0 : index
    %c0_193 = arith.constant 0 : index
    %443 = vector.load %arg2[%c0_192, %c0_193] : memref<16x4xf32, #tpu.memory_space<vmem>>, vector<16x4xf32>
    %444 = arith.addf %443, %437 : vector<16x4xf32>
    %c0_194 = arith.constant 0 : index
    %c0_195 = arith.constant 0 : index
    %445 = vector.load %arg28[%c0_194, %c0_195] : memref<16x16xf32, #tpu.memory_space<vmem>>, vector<16x4xf32>
    tpu.vector_store %arg28[%c0_194, %c0_195], %444 {strides = array<i32>} : memref<16x16xf32, #tpu.memory_space<vmem>>, vector<16x4xf32>,
    %c0_196 = arith.constant 0 : index
    %c4 = arith.constant 4 : index
    %446 = vector.load %arg28[%c0_196, %c4] : memref<16x16xf32, #tpu.memory_space<vmem>>, vector<16x4xf32>
    tpu.vector_store %arg28[%c0_196, %c4], %437 {strides = array<i32>} : memref<16x16xf32, #tpu.memory_space<vmem>>, vector<16x4xf32>,
    %c0_197 = arith.constant 0 : index
    %c8 = arith.constant 8 : index
    %447 = vector.load %arg28[%c0_197, %c8] : memref<16x16xf32, #tpu.memory_space<vmem>>, vector<16x1xf32>
    tpu.vector_store %arg28[%c0_197, %c8], %442 {strides = array<i32>} : memref<16x16xf32, #tpu.memory_space<vmem>>, vector<16x1xf32>,
    %cst_198 = arith.constant 0.000000e+00 : f32
    %448 = vector.broadcast %cst_198 : f32 to vector<16x7xf32>
    %c0_199 = arith.constant 0 : index
    %c9 = arith.constant 9 : index
    %449 = vector.load %arg28[%c0_199, %c9] : memref<16x16xf32, #tpu.memory_space<vmem>>, vector<16x7xf32>
    tpu.vector_store %arg28[%c0_199, %c9], %448 {strides = array<i32>} : memref<16x16xf32, #tpu.memory_space<vmem>>, vector<16x7xf32>,
    return
  }
}

</mosaic_0001>

<llo_original>
// kernel: trajectory_transformer_encoder.1
$region0: #{trajectory_transformer_encoder.1}
  #allocation0 [shape = 'u32[]', space=smem, size = 0x4, offset = 0x4, fixed_abs, tag = 'smem constant byte address 0x4 - core index']
  #allocation1 [shape = 'u32[72,128]{1,0:T(1,128)}', space=vmem, size = 0x9000, scoped, tag = 'internal scratch']
  #allocation2 [shape = 'bf16[32,1024]{1,0:T(8,128)(2,1)}', space=vmem, size = 0x10000, scoped, tag = 'scratch operand']
  #allocation3 [shape = 'bf16[512,256]{1,0:T(8,128)(2,1)}', space=vmem, size = 0x40000, scoped, tag = 'scratch operand']
  #allocation4 [shape = 'bf16[512,256]{1,0:T(8,128)(2,1)}', space=vmem, size = 0x40000, scoped, tag = 'scratch operand']
  #allocation5 [shape = 's32[3]{0}', space=sflag, size = 0xc, scoped, tag = 'scratch operand']
  #allocation6 [shape = 'f32[1,1]{1,0:T(1,128)S(1)}', space=vmem, size = 0x200, scoped, tag = 'scoped memory for trajectory_transformer_encoder.1']
  #allocation23 [shape = 's32[]', space=sflag, size = 0x4, offset = 0, fixed_abs, tag = 'sflag constant byte address 0x0 - dummy sync flag']
  #allocation24 [shape = 's32[]', space=sflag, size = 0x4, offset = 0, fixed_abs, tag = 'sflag constant byte address 0x0 - dummy sync flag']
  #allocation25 [shape = 's32[]', space=sflag, size = 0x4, offset = 0, fixed_abs, tag = 'sflag constant byte address 0x0 - dummy sync flag']
  #allocation26 [shape = 's32[]', space=sflag, size = 0x4, offset = 0, fixed_abs, tag = 'sflag constant byte address 0x0 - dummy sync flag']
  #allocation27 [shape = 'u32[]', space=smem, size = 0x4, offset = 0x44, fixed_abs, tag = 'smem constant byte address 0x44 - assertion arg 0']
  #allocation28 [shape = 'u32[]', space=smem, size = 0x4, offset = 0x48, fixed_abs, tag = 'smem constant byte address 0x48 - assertion arg 1']
  %s0 = inlined_call_operand.vmem [shape: f32[16,32], index: 0, kind: input, shape index: {}]
  %s1 = inlined_call_operand.vmem [shape: f32[2,8], index: 1, kind: input, shape index: {}]
  %s2 = inlined_call_operand.vmem [shape: f32[16,4], index: 2, kind: input, shape index: {}]
  %s3 = inlined_call_operand.hbm [shape: f32[32,32], index: 3, kind: input, shape index: {}]
  %s4 = inlined_call_operand.vmem [shape: f32[1,32], index: 4, kind: input, shape index: {}]
  %s5 = inlined_call_operand.vmem [shape: f32[2,32,96], index: 5, kind: input, shape index: {}]
  %s6 = inlined_call_operand.vmem [shape: f32[2,1,96], index: 6, kind: input, shape index: {}]
  %s7 = inlined_call_operand.vmem [shape: f32[2,32,32], index: 7, kind: input, shape index: {}]
  %s8 = inlined_call_operand.vmem [shape: f32[2,1,32], index: 8, kind: input, shape index: {}]
  %s9 = inlined_call_operand.vmem [shape: f32[2,1,32], index: 9, kind: input, shape index: {}]
  %s10 = inlined_call_operand.hbm [shape: f32[2,1,32], index: 10, kind: input, shape index: {}]
  %s11 = inlined_call_operand.hbm [shape: f32[2,32,64], index: 11, kind: input, shape index: {}]
  %s12 = inlined_call_operand.hbm [shape: f32[2,1,64], index: 12, kind: input, shape index: {}]
  %s13 = inlined_call_operand.vmem [shape: f32[2,64,32], index: 13, kind: input, shape index: {}]
  %s14 = inlined_call_operand.hbm [shape: f32[2,1,32], index: 14, kind: input, shape index: {}]
  %s15 = inlined_call_operand.vmem [shape: f32[2,1,32], index: 15, kind: input, shape index: {}]
  %s16 = inlined_call_operand.hbm [shape: f32[2,1,32], index: 16, kind: input, shape index: {}]
  %s17 = inlined_call_operand.vmem [shape: bf16[32,1024], index: 17, kind: input, shape index: {}]
  %s18 = inlined_call_operand.hbm [shape: f32[1,1024], index: 18, kind: input, shape index: {}]
  %s19 = inlined_call_operand.vmem [shape: bf16[512,256], index: 19, kind: input, shape index: {}]
  %s20 = inlined_call_operand.hbm [shape: f32[1,256], index: 20, kind: input, shape index: {}]
  %s21 = inlined_call_operand.hbm [shape: bf16[512,256], index: 21, kind: input, shape index: {}]
  %s22 = inlined_call_operand.hbm [shape: f32[1,256], index: 22, kind: input, shape index: {}]
  %s23 = inlined_call_operand.vmem [shape: f32[256,4], index: 23, kind: input, shape index: {}]
  %s24 = inlined_call_operand.hbm [shape: f32[1,4], index: 24, kind: input, shape index: {}]
  %s25 = inlined_call_operand.vmem [shape: f32[256,1], index: 25, kind: input, shape index: {}]
  %s26 = inlined_call_operand.<no memory space> [shape: f32[1,1], index: 26, kind: input, shape index: {}]
  %s27 = inlined_call_operand.vmem [shape: f32[16,32], index: 27, kind: output, shape index: {0}]
  %s28 = inlined_call_operand.vmem [shape: f32[16,16], index: 28, kind: output, shape index: {1}]
  %29 = xla_tuple %s27, %s28
  %s30 = sld [smem:[#allocation0]]
  $region196: #{trajectory_transformer_encoder.1} parent=0
    _
  %s32 = ssub.s32 1, %s30
  %s33 = scalar_select 0, %s32, %s30
  %v34 = vstv %s26
  %35 = vst [vmem:[#allocation6] sm:$0x1] %v34
  $region1: #{trajectory_transformer_encoder.1} parent=0
    #allocation7 [shape = 'u8[16384]{0}', space=vmem, size = 0x4000, scoped, tag = 'input window, operand 3, single buffered']
    #allocation8 [shape = 's32[1]{0}', space=sflag, size = 0x4, scoped, tag = 'scoped memory for trajectory_transformer_encoder.1']
    #allocation9 [shape = 'u8[1024]{0}', space=vmem, size = 0x400, scoped, tag = 'input window, operand 10, single buffered']
    #allocation10 [shape = 's32[1]{0}', space=sflag, size = 0x4, scoped, tag = 'scoped memory for trajectory_transformer_encoder.1']
    #allocation11 [shape = 'u8[32768]{0}', space=vmem, size = 0x8000, scoped, tag = 'input window, operand 11, single buffered']
    #allocation12 [shape = 'u8[1024]{0}', space=vmem, size = 0x400, scoped, tag = 'input window, operand 12, single buffered']
    #allocation13 [shape = 's32[1]{0}', space=sflag, size = 0x4, scoped, tag = 'scoped memory for trajectory_transformer_encoder.1']
    #allocation14 [shape = 'u8[1024]{0}', space=vmem, size = 0x400, scoped, tag = 'input window, operand 14, single buffered']
    #allocation15 [shape = 'u8[1024]{0}', space=vmem, size = 0x400, scoped, tag = 'input window, operand 16, single buffered']
    #allocation16 [shape = 's32[1]{0}', space=sflag, size = 0x4, scoped, tag = 'scoped memory for trajectory_transformer_encoder.1']
    #allocation17 [shape = 'u8[4096]{0}', space=vmem, size = 0x1000, scoped, tag = 'input window, operand 18, single buffered']
    #allocation18 [shape = 'u8[1024]{0}', space=vmem, size = 0x400, scoped, tag = 'input window, operand 20, single buffered']
    #allocation19 [shape = 's32[1]{0}', space=sflag, size = 0x4, scoped, tag = 'scoped memory for trajectory_transformer_encoder.1']
    #allocation20 [shape = 'u8[1024]{0}', space=vmem, size = 0x400, scoped, tag = 'input window, operand 22, single buffered']
    #allocation21 [shape = 'u8[512]{0}', space=vmem, size = 0x400, scoped, tag = 'input window, operand 24, single buffered']
    #allocation22 [shape = 's32[1]{0}', space=sflag, size = 0x4, scoped, tag = 'scoped memory for trajectory_transformer_encoder.1']
    %36 = vsyncpa [#allocation8], 0
    %37 = vsyncpa [#allocation10], 0
    %38 = vsyncpa [#allocation13], 0
    %39 = vsyncpa [#allocation16], 0
    %40 = vsyncpa [#allocation19], 0
    %41 = vsyncpa [#allocation22], 0
    // Predicated region
    $region2: #{trajectory_transformer_encoder.1} parent=1 // pred_check
      _
    $region3: #{trajectory_transformer_encoder.1} parent=1 // pred_check_branch
      %43 = sbr.rel (0) target = $region5
    $region4: #{trajectory_transformer_encoder.1} parent=1 // pred_region
      _
    $region5: #{trajectory_transformer_encoder.1} parent=1 // pred_fallthru
      _
    // Predicated region
    $region6: #{trajectory_transformer_encoder.1} parent=1 // pred_check
      _
    $region7: #{trajectory_transformer_encoder.1} parent=1 // pred_check_branch
      %45 = sbr.rel (0) target = $region9
    $region8: #{trajectory_transformer_encoder.1} parent=1 // pred_region
      _
    $region9: #{trajectory_transformer_encoder.1} parent=1 // pred_fallthru
      _
    // Predicated region
    $region10: #{trajectory_transformer_encoder.1} parent=1 // pred_check
      _
    $region11: #{trajectory_transformer_encoder.1} parent=1 // pred_check_branch
      %47 = sbr.rel (0) target = $region13
    $region12: #{trajectory_transformer_encoder.1} parent=1 // pred_region
      _
    $region13: #{trajectory_transformer_encoder.1} parent=1 // pred_fallthru
      _
    // Predicated region
    $region14: #{trajectory_transformer_encoder.1} parent=1 // pred_check
      _
    $region15: #{trajectory_transformer_encoder.1} parent=1 // pred_check_branch
      %49 = sbr.rel (0) target = $region17
    $region16: #{trajectory_transformer_encoder.1} parent=1 // pred_region
      %51 = vsyncadd [#allocation8], 0
      %s52 = sshll.u32 %s3, 4
      %s53 = int_to_ptr.hbm [resolvable:$true] %s52
      %s54 = sshll.u32 [#allocation7], 4
      %s55 = int_to_ptr.vmem [resolvable:$true] %s54
      %60 = dma.hbm_to_vmem [thread:$0]  %s53, 512, %s55, [#allocation8], 128, 128, 8
    $region17: #{trajectory_transformer_encoder.1} parent=1 // pred_fallthru
      _
    // Predicated region
    $region18: #{trajectory_transformer_encoder.1} parent=1 // pred_check
      _
    $region19: #{trajectory_transformer_encoder.1} parent=1 // pred_check_branch
      %62 = sbr.rel (0) target = $region21
    $region20: #{trajectory_transformer_encoder.1} parent=1 // pred_region
      _
    $region21: #{trajectory_transformer_encoder.1} parent=1 // pred_fallthru
      _
    // Predicated region
    $region22: #{trajectory_transformer_encoder.1} parent=1 // pred_check
      _
    $region23: #{trajectory_transformer_encoder.1} parent=1 // pred_check_branch
      %64 = sbr.rel (0) target = $region25
    $region24: #{trajectory_transformer_encoder.1} parent=1 // pred_region
      _
    $region25: #{trajectory_transformer_encoder.1} parent=1 // pred_fallthru
      _
    // Predicated region
    $region26: #{trajectory_transformer_encoder.1} parent=1 // pred_check
      _
    $region27: #{trajectory_transformer_encoder.1} parent=1 // pred_check_branch
      %66 = sbr.rel (0) target = $region29
    $region28: #{trajectory_transformer_encoder.1} parent=1 // pred_region
      _
    $region29: #{trajectory_transformer_encoder.1} parent=1 // pred_fallthru
      _
    // Predicated region
    $region30: #{trajectory_transformer_encoder.1} parent=1 // pred_check
      _
    $region31: #{trajectory_transformer_encoder.1} parent=1 // pred_check_branch
      %68 = sbr.rel (0) target = $region33
    $region32: #{trajectory_transformer_encoder.1} parent=1 // pred_region
      _
    $region33: #{trajectory_transformer_encoder.1} parent=1 // pred_fallthru
      _
    // Predicated region
    $region34: #{trajectory_transformer_encoder.1} parent=1 // pred_check
      _
    $region35: #{trajectory_transformer_encoder.1} parent=1 // pred_check_branch
      %70 = sbr.rel (0) target = $region37
    $region36: #{trajectory_transformer_encoder.1} parent=1 // pred_region
      _
    $region37: #{trajectory_transformer_encoder.1} parent=1 // pred_fallthru
      _
    // Predicated region
    $region38: #{trajectory_transformer_encoder.1} parent=1 // pred_check
      _
    $region39: #{trajectory_transformer_encoder.1} parent=1 // pred_check_branch
      %72 = sbr.rel (0) target = $region41
    $region40: #{trajectory_transformer_encoder.1} parent=1 // pred_region
      _
    $region41: #{trajectory_transformer_encoder.1} parent=1 // pred_fallthru
      _
    // Predicated region
    $region42: #{trajectory_transformer_encoder.1} parent=1 // pred_check
      _
    $region43: #{trajectory_transformer_encoder.1} parent=1 // pred_check_branch
      %74 = sbr.rel (0) target = $region45
    $region44: #{trajectory_transformer_encoder.1} parent=1 // pred_region
      %76 = vsyncadd [#allocation10], 0
      %s77 = sshll.u32 %s10, 4
      %s78 = int_to_ptr.hbm [resolvable:$true] %s77
      %s79 = sshll.u32 [#allocation9], 4
      %s80 = int_to_ptr.vmem [resolvable:$true] %s79
      %85 = dma.hbm_to_vmem [thread:$0]  %s78, 32, %s80, [#allocation10], 16, 16, 1
    $region45: #{trajectory_transformer_encoder.1} parent=1 // pred_fallthru
      _
    // Predicated region
    $region46: #{trajectory_transformer_encoder.1} parent=1 // pred_check
      _
    $region47: #{trajectory_transformer_encoder.1} parent=1 // pred_check_branch
      %87 = sbr.rel (0) target = $region49
    $region48: #{trajectory_transformer_encoder.1} parent=1 // pred_region
      %89 = vsyncadd [#allocation10], 0
      %s90 = sshll.u32 %s11, 4
      %s91 = int_to_ptr.hbm [resolvable:$true] %s90
      %s92 = sshll.u32 [#allocation11], 4
      %s93 = int_to_ptr.vmem [resolvable:$true] %s92
      %98 = dma.hbm_to_vmem [thread:$0]  %s91, 1024, %s93, [#allocation10], 128, 128, 8
    $region49: #{trajectory_transformer_encoder.1} parent=1 // pred_fallthru
      _
    // Predicated region
    $region50: #{trajectory_transformer_encoder.1} parent=1 // pred_check
      _
    $region51: #{trajectory_transformer_encoder.1} parent=1 // pred_check_branch
      %100 = sbr.rel (0) target = $region53
    $region52: #{trajectory_transformer_encoder.1} parent=1 // pred_region
      %102 = vsyncadd [#allocation13], 0
      %s103 = sshll.u32 %s12, 4
      %s104 = int_to_ptr.hbm [resolvable:$true] %s103
      %s105 = sshll.u32 [#allocation12], 4
      %s106 = int_to_ptr.vmem [resolvable:$true] %s105
      %111 = dma.hbm_to_vmem [thread:$0]  %s104, 32, %s106, [#allocation13], 16, 16, 1
    $region53: #{trajectory_transformer_encoder.1} parent=1 // pred_fallthru
      _
    // Predicated region
    $region54: #{trajectory_transformer_encoder.1} parent=1 // pred_check
      _
    $region55: #{trajectory_transformer_encoder.1} parent=1 // pred_check_branch
      %113 = sbr.rel (0) target = $region57
    $region56: #{trajectory_transformer_encoder.1} parent=1 // pred_region
      _
    $region57: #{trajectory_transformer_encoder.1} parent=1 // pred_fallthru
      _
    // Predicated region
    $region58: #{trajectory_transformer_encoder.1} parent=1 // pred_check
      _
    $region59: #{trajectory_transformer_encoder.1} parent=1 // pred_check_branch
      %115 = sbr.rel (0) target = $region61
    $region60: #{trajectory_transformer_encoder.1} parent=1 // pred_region
      %117 = vsyncadd [#allocation13], 0
      %s118 = sshll.u32 %s14, 4
      %s119 = int_to_ptr.hbm [resolvable:$true] %s118
      %s120 = sshll.u32 [#allocation14], 4
      %s121 = int_to_ptr.vmem [resolvable:$true] %s120
      %126 = dma.hbm_to_vmem [thread:$0]  %s119, 32, %s121, [#allocation13], 16, 16, 1
    $region61: #{trajectory_transformer_encoder.1} parent=1 // pred_fallthru
      _
    // Predicated region
    $region62: #{trajectory_transformer_encoder.1} parent=1 // pred_check
      _
    $region63: #{trajectory_transformer_encoder.1} parent=1 // pred_check_branch
      %128 = sbr.rel (0) target = $region65
    $region64: #{trajectory_transformer_encoder.1} parent=1 // pred_region
      _
    $region65: #{trajectory_transformer_encoder.1} parent=1 // pred_fallthru
      _
    // Predicated region
    $region66: #{trajectory_transformer_encoder.1} parent=1 // pred_check
      _
    $region67: #{trajectory_transformer_encoder.1} parent=1 // pred_check_branch
      %130 = sbr.rel (0) target = $region69
    $region68: #{trajectory_transformer_encoder.1} parent=1 // pred_region
      %132 = vsyncadd [#allocation16], 0
      %s133 = sshll.u32 %s16, 4
      %s134 = int_to_ptr.hbm [resolvable:$true] %s133
      %s135 = sshll.u32 [#allocation15], 4
      %s136 = int_to_ptr.vmem [resolvable:$true] %s135
      %141 = dma.hbm_to_vmem [thread:$0]  %s134, 32, %s136, [#allocation16], 16, 16, 1
    $region69: #{trajectory_transformer_encoder.1} parent=1 // pred_fallthru
      _
    // Predicated region
    $region70: #{trajectory_transformer_encoder.1} parent=1 // pred_check
      _
    $region71: #{trajectory_transformer_encoder.1} parent=1 // pred_check_branch
      %143 = sbr.rel (0) target = $region73
    $region72: #{trajectory_transformer_encoder.1} parent=1 // pred_region
      %145 = vsyncadd [#allocation16], 0
      %s147 = sshll.u32 %s18, 4
      %s148 = int_to_ptr.hbm [resolvable:$true] %s147
      %s149 = sshll.u32 [#allocation17], 4
      %s150 = int_to_ptr.vmem [resolvable:$true] %s149
      %152 = dma.hbm_to_vmem [thread:$0]  %s148, 128, %s150, [#allocation16]
    $region73: #{trajectory_transformer_encoder.1} parent=1 // pred_fallthru
      _
    // Predicated region
    $region74: #{trajectory_transformer_encoder.1} parent=1 // pred_check
      _
    $region75: #{trajectory_transformer_encoder.1} parent=1 // pred_check_branch
      %154 = sbr.rel (0) target = $region77
    $region76: #{trajectory_transformer_encoder.1} parent=1 // pred_region
      %156 = vsyncadd [#allocation19], 0
      %s158 = sshll.u32 %s20, 4
      %s159 = int_to_ptr.hbm [resolvable:$true] %s158
      %s160 = sshll.u32 [#allocation18], 4
      %s161 = int_to_ptr.vmem [resolvable:$true] %s160
      %163 = dma.hbm_to_vmem [thread:$0]  %s159, 32, %s161, [#allocation19]
    $region77: #{trajectory_transformer_encoder.1} parent=1 // pred_fallthru
      _
    // Predicated region
    $region78: #{trajectory_transformer_encoder.1} parent=1 // pred_check
      _
    $region79: #{trajectory_transformer_encoder.1} parent=1 // pred_check_branch
      %165 = sbr.rel (0) target = $region81
    $region80: #{trajectory_transformer_encoder.1} parent=1 // pred_region
      %167 = vsyncadd [#allocation19], 0
      %s169 = sshll.u32 %s22, 4
      %s170 = int_to_ptr.hbm [resolvable:$true] %s169
      %s171 = sshll.u32 [#allocation20], 4
      %s172 = int_to_ptr.vmem [resolvable:$true] %s171
      %174 = dma.hbm_to_vmem [thread:$0]  %s170, 32, %s172, [#allocation19]
    $region81: #{trajectory_transformer_encoder.1} parent=1 // pred_fallthru
      _
    // Predicated region
    $region82: #{trajectory_transformer_encoder.1} parent=1 // pred_check
      _
    $region83: #{trajectory_transformer_encoder.1} parent=1 // pred_check_branch
      %176 = sbr.rel (0) target = $region85
    $region84: #{trajectory_transformer_encoder.1} parent=1 // pred_region
      _
    $region85: #{trajectory_transformer_encoder.1} parent=1 // pred_fallthru
      _
    // Predicated region
    $region86: #{trajectory_transformer_encoder.1} parent=1 // pred_check
      _
    $region87: #{trajectory_transformer_encoder.1} parent=1 // pred_check_branch
      %178 = sbr.rel (0) target = $region89
    $region88: #{trajectory_transformer_encoder.1} parent=1 // pred_region
      %180 = vsyncadd [#allocation22], 0
      %s182 = sshll.u32 %s24, 4
      %s183 = int_to_ptr.hbm [resolvable:$true] %s182
      %s184 = sshll.u32 [#allocation21], 4
      %s185 = int_to_ptr.vmem [resolvable:$true] %s184
      %187 = dma.hbm_to_vmem [thread:$0]  %s183, 16, %s185, [#allocation22]
    $region89: #{trajectory_transformer_encoder.1} parent=1 // pred_fallthru
      _
    // Predicated region
    $region90: #{trajectory_transformer_encoder.1} parent=1 // pred_check
      _
    $region91: #{trajectory_transformer_encoder.1} parent=1 // pred_check_branch
      %189 = sbr.rel (0) target = $region93
    $region92: #{trajectory_transformer_encoder.1} parent=1 // pred_region
      _
    $region93: #{trajectory_transformer_encoder.1} parent=1 // pred_fallthru
      _
    // Predicated region
    $region94: #{trajectory_transformer_encoder.1} parent=1 // pred_check
      _
    $region95: #{trajectory_transformer_encoder.1} parent=1 // pred_check_branch
      %191 = sbr.rel (0) target = $region97
    $region96: #{trajectory_transformer_encoder.1} parent=1 // pred_region
      _
    $region97: #{trajectory_transformer_encoder.1} parent=1 // pred_fallthru
      _
    // Predicated region
    $region98: #{trajectory_transformer_encoder.1} parent=1 // pred_check
      _
    $region99: #{trajectory_transformer_encoder.1} parent=1 // pred_check_branch
      %193 = sbr.rel (0) target = $region101
    $region100: #{trajectory_transformer_encoder.1} parent=1 // pred_region
      %195 = dma.done [#allocation8], 512
    $region101: #{trajectory_transformer_encoder.1} parent=1 // pred_fallthru
      _
    // Predicated region
    $region102: #{trajectory_transformer_encoder.1} parent=1 // pred_check
      _
    $region103: #{trajectory_transformer_encoder.1} parent=1 // pred_check_branch
      %197 = sbr.rel (0) target = $region105
    $region104: #{trajectory_transformer_encoder.1} parent=1 // pred_region
      %199 = dma.done [#allocation10], 32
    $region105: #{trajectory_transformer_encoder.1} parent=1 // pred_fallthru
      _
    // Predicated region
    $region106: #{trajectory_transformer_encoder.1} parent=1 // pred_check
      _
    $region107: #{trajectory_transformer_encoder.1} parent=1 // pred_check_branch
      %201 = sbr.rel (0) target = $region109
    $region108: #{trajectory_transformer_encoder.1} parent=1 // pred_region
      %203 = dma.done [#allocation10], 1024
    $region109: #{trajectory_transformer_encoder.1} parent=1 // pred_fallthru
      _
    // Predicated region
    $region110: #{trajectory_transformer_encoder.1} parent=1 // pred_check
      _
    $region111: #{trajectory_transformer_encoder.1} parent=1 // pred_check_branch
      %205 = sbr.rel (0) target = $region113
    $region112: #{trajectory_transformer_encoder.1} parent=1 // pred_region
      %207 = dma.done [#allocation13], 32
    $region113: #{trajectory_transformer_encoder.1} parent=1 // pred_fallthru
      _
    // Predicated region
    $region114: #{trajectory_transformer_encoder.1} parent=1 // pred_check
      _
    $region115: #{trajectory_transformer_encoder.1} parent=1 // pred_check_branch
      %209 = sbr.rel (0) target = $region117
    $region116: #{trajectory_transformer_encoder.1} parent=1 // pred_region
      %211 = dma.done [#allocation13], 32
    $region117: #{trajectory_transformer_encoder.1} parent=1 // pred_fallthru
      _
    // Predicated region
    $region118: #{trajectory_transformer_encoder.1} parent=1 // pred_check
      _
    $region119: #{trajectory_transformer_encoder.1} parent=1 // pred_check_branch
      %213 = sbr.rel (0) target = $region121
    $region120: #{trajectory_transformer_encoder.1} parent=1 // pred_region
      %215 = dma.done [#allocation16], 32
    $region121: #{trajectory_transformer_encoder.1} parent=1 // pred_fallthru
      _
    // Predicated region
    $region122: #{trajectory_transformer_encoder.1} parent=1 // pred_check
      _
    $region123: #{trajectory_transformer_encoder.1} parent=1 // pred_check_branch
      %217 = sbr.rel (0) target = $region125
    $region124: #{trajectory_transformer_encoder.1} parent=1 // pred_region
      %219 = dma.done [#allocation16], 128
    $region125: #{trajectory_transformer_encoder.1} parent=1 // pred_fallthru
      _
    // Predicated region
    $region126: #{trajectory_transformer_encoder.1} parent=1 // pred_check
      _
    $region127: #{trajectory_transformer_encoder.1} parent=1 // pred_check_branch
      %221 = sbr.rel (0) target = $region129
    $region128: #{trajectory_transformer_encoder.1} parent=1 // pred_region
      %223 = dma.done [#allocation19], 32
    $region129: #{trajectory_transformer_encoder.1} parent=1 // pred_fallthru
      _
    // Predicated region
    $region130: #{trajectory_transformer_encoder.1} parent=1 // pred_check
      _
    $region131: #{trajectory_transformer_encoder.1} parent=1 // pred_check_branch
      %225 = sbr.rel (0) target = $region133
    $region132: #{trajectory_transformer_encoder.1} parent=1 // pred_region
      %227 = dma.done [#allocation19], 32
    $region133: #{trajectory_transformer_encoder.1} parent=1 // pred_fallthru
      _
    // Predicated region
    $region134: #{trajectory_transformer_encoder.1} parent=1 // pred_check
      _
    $region135: #{trajectory_transformer_encoder.1} parent=1 // pred_check_branch
      %229 = sbr.rel (0) target = $region137
    $region136: #{trajectory_transformer_encoder.1} parent=1 // pred_region
      %231 = dma.done [#allocation22], 16
    $region137: #{trajectory_transformer_encoder.1} parent=1 // pred_fallthru
      _
    // Predicated region
    $region138: #{trajectory_transformer_encoder.1} parent=1 // pred_check
      _
    $region139: #{trajectory_transformer_encoder.1} parent=1 // pred_check_branch
      %234 = sbr.rel (0) target = $region141
    $region140: #{trajectory_transformer_encoder.1} parent=1 // pred_region
      loop: start=0, step=1, limit=1
      $region142: #{trajectory_transformer_encoder.1} parent=140 // loop_pre_header
        _
      $region143: #{trajectory_transformer_encoder.1} parent=140 // loop_header
        %s236 = sphi 0, %s240
        %p237 = scmp.ge.s32.totalorder %s236, 1
        %s241 = sphi %s17, %s17
        %s242 = sphi [#allocation2], [#allocation2]
      $region144: #{trajectory_transformer_encoder.1} parent=140 // loop_header_branch
        %239 = sbr.rel (%p237) target = $region148
      $region145: #{trajectory_transformer_encoder.1} parent=140 // loop_body
        %v243 = vld [vmem:[%s241] sm:$0xff]
        %244 = vst [vmem:[%s242] sm:$0xff] %v243
        %v245 = vld [vmem:[%s241 + $0x8] sm:$0xff]
        %246 = vst [vmem:[%s242 + $0x8] sm:$0xff] %v245
        %v247 = vld [vmem:[%s241 + $0x10] sm:$0xff]
        %248 = vst [vmem:[%s242 + $0x10] sm:$0xff] %v247
        %v249 = vld [vmem:[%s241 + $0x18] sm:$0xff]
        %250 = vst [vmem:[%s242 + $0x18] sm:$0xff] %v249
        %v251 = vld [vmem:[%s241 + $0x20] sm:$0xff]
        %252 = vst [vmem:[%s242 + $0x20] sm:$0xff] %v251
        %v253 = vld [vmem:[%s241 + $0x28] sm:$0xff]
        %254 = vst [vmem:[%s242 + $0x28] sm:$0xff] %v253
        %v255 = vld [vmem:[%s241 + $0x30] sm:$0xff]
        %256 = vst [vmem:[%s242 + $0x30] sm:$0xff] %v255
        %v257 = vld [vmem:[%s241 + $0x38] sm:$0xff]
        %258 = vst [vmem:[%s242 + $0x38] sm:$0xff] %v257
        %v259 = vld [vmem:[%s241 + $0x40] sm:$0xff]
        %260 = vst [vmem:[%s242 + $0x40] sm:$0xff] %v259
        %v261 = vld [vmem:[%s241 + $0x48] sm:$0xff]
        %262 = vst [vmem:[%s242 + $0x48] sm:$0xff] %v261
        %v263 = vld [vmem:[%s241 + $0x50] sm:$0xff]
        %264 = vst [vmem:[%s242 + $0x50] sm:$0xff] %v263
        %v265 = vld [vmem:[%s241 + $0x58] sm:$0xff]
        %266 = vst [vmem:[%s242 + $0x58] sm:$0xff] %v265
        %v267 = vld [vmem:[%s241 + $0x60] sm:$0xff]
        %268 = vst [vmem:[%s242 + $0x60] sm:$0xff] %v267
        %v269 = vld [vmem:[%s241 + $0x68] sm:$0xff]
        %270 = vst [vmem:[%s242 + $0x68] sm:$0xff] %v269
        %v271 = vld [vmem:[%s241 + $0x70] sm:$0xff]
        %272 = vst [vmem:[%s242 + $0x70] sm:$0xff] %v271
        %v273 = vld [vmem:[%s241 + $0x78] sm:$0xff]
        %274 = vst [vmem:[%s242 + $0x78] sm:$0xff] %v273
      $region146: #{trajectory_transformer_encoder.1} parent=140 // loop_footer
        %s240 = sadd.s32 1, %s236
      $region147: #{trajectory_transformer_encoder.1} parent=140 // loop_footer_branch
        %235 = sbr.rel target = $region143
      $region148: #{trajectory_transformer_encoder.1} parent=140 // loop_exit
        _
    $region141: #{trajectory_transformer_encoder.1} parent=1 // pred_fallthru
      _
    // Predicated region
    $region149: #{trajectory_transformer_encoder.1} parent=1 // pred_check
      _
    $region150: #{trajectory_transformer_encoder.1} parent=1 // pred_check_branch
      %276 = sbr.rel target = $region152
    $region151: #{trajectory_transformer_encoder.1} parent=1 // pred_region
      _
    $region152: #{trajectory_transformer_encoder.1} parent=1 // pred_fallthru
      _
    // Predicated region
    $region153: #{trajectory_transformer_encoder.1} parent=1 // pred_check
      _
    $region154: #{trajectory_transformer_encoder.1} parent=1 // pred_check_branch
      %279 = sbr.rel (0) target = $region156
    $region155: #{trajectory_transformer_encoder.1} parent=1 // pred_region
      %280 = vsyncadd [#allocation5], 2048
    $region156: #{trajectory_transformer_encoder.1} parent=1 // pred_fallthru
      _
    %s281 = scalar_lea.sflag [#allocation5], 1
    // Predicated region
    $region157: #{trajectory_transformer_encoder.1} parent=1 // pred_check
      _
    $region158: #{trajectory_transformer_encoder.1} parent=1 // pred_check_branch
      %283 = sbr.rel (0) target = $region160
    $region159: #{trajectory_transformer_encoder.1} parent=1 // pred_region
      loop: start=0, step=1, limit=1
      $region161: #{trajectory_transformer_encoder.1} parent=159 // loop_pre_header
        _
      $region162: #{trajectory_transformer_encoder.1} parent=159 // loop_header
        %s285 = sphi 0, %s289
        %p286 = scmp.ge.s32.totalorder %s285, 1
        %s290 = sphi %s19, %s19
        %s291 = sphi [#allocation3], [#allocation3]
      $region163: #{trajectory_transformer_encoder.1} parent=159 // loop_header_branch
        %288 = sbr.rel (%p286) target = $region167
      $region164: #{trajectory_transformer_encoder.1} parent=159 // loop_body
        %v292 = vld [vmem:[%s290] sm:$0xff]
        %293 = vst [vmem:[%s291] sm:$0xff] %v292
        %v294 = vld [vmem:[%s290 + $0x8] sm:$0xff]
        %295 = vst [vmem:[%s291 + $0x8] sm:$0xff] %v294
        %v296 = vld [vmem:[%s290 + $0x10] sm:$0xff]
        %297 = vst [vmem:[%s291 + $0x10] sm:$0xff] %v296
        %v298 = vld [vmem:[%s290 + $0x18] sm:$0xff]
        %299 = vst [vmem:[%s291 + $0x18] sm:$0xff] %v298
        %v300 = vld [vmem:[%s290 + $0x20] sm:$0xff]
        %301 = vst [vmem:[%s291 + $0x20] sm:$0xff] %v300
        %v302 = vld [vmem:[%s290 + $0x28] sm:$0xff]
        %303 = vst [vmem:[%s291 + $0x28] sm:$0xff] %v302
        %v304 = vld [vmem:[%s290 + $0x30] sm:$0xff]
        %305 = vst [vmem:[%s291 + $0x30] sm:$0xff] %v304
        %v306 = vld [vmem:[%s290 + $0x38] sm:$0xff]
        %307 = vst [vmem:[%s291 + $0x38] sm:$0xff] %v306
        %v308 = vld [vmem:[%s290 + $0x40] sm:$0xff]
        %309 = vst [vmem:[%s291 + $0x40] sm:$0xff] %v308
        %v310 = vld [vmem:[%s290 + $0x48] sm:$0xff]
        %311 = vst [vmem:[%s291 + $0x48] sm:$0xff] %v310
        %v312 = vld [vmem:[%s290 + $0x50] sm:$0xff]
        %313 = vst [vmem:[%s291 + $0x50] sm:$0xff] %v312
        %v314 = vld [vmem:[%s290 + $0x58] sm:$0xff]
        %315 = vst [vmem:[%s291 + $0x58] sm:$0xff] %v314
        %v316 = vld [vmem:[%s290 + $0x60] sm:$0xff]
        %317 = vst [vmem:[%s291 + $0x60] sm:$0xff] %v316
        %v318 = vld [vmem:[%s290 + $0x68] sm:$0xff]
        %319 = vst [vmem:[%s291 + $0x68] sm:$0xff] %v318
        %v320 = vld [vmem:[%s290 + $0x70] sm:$0xff]
        %321 = vst [vmem:[%s291 + $0x70] sm:$0xff] %v320
        %v322 = vld [vmem:[%s290 + $0x78] sm:$0xff]
        %323 = vst [vmem:[%s291 + $0x78] sm:$0xff] %v322
        %v324 = vld [vmem:[%s290 + $0x80] sm:$0xff]
        %325 = vst [vmem:[%s291 + $0x80] sm:$0xff] %v324
        %v326 = vld [vmem:[%s290 + $0x88] sm:$0xff]
        %327 = vst [vmem:[%s291 + $0x88] sm:$0xff] %v326
        %v328 = vld [vmem:[%s290 + $0x90] sm:$0xff]
        %329 = vst [vmem:[%s291 + $0x90] sm:$0xff] %v328
        %v330 = vld [vmem:[%s290 + $0x98] sm:$0xff]
        %331 = vst [vmem:[%s291 + $0x98] sm:$0xff] %v330
        %v332 = vld [vmem:[%s290 + $0xa0] sm:$0xff]
        %333 = vst [vmem:[%s291 + $0xa0] sm:$0xff] %v332
        %v334 = vld [vmem:[%s290 + $0xa8] sm:$0xff]
        %335 = vst [vmem:[%s291 + $0xa8] sm:$0xff] %v334
        %v336 = vld [vmem:[%s290 + $0xb0] sm:$0xff]
        %337 = vst [vmem:[%s291 + $0xb0] sm:$0xff] %v336
        %v338 = vld [vmem:[%s290 + $0xb8] sm:$0xff]
        %339 = vst [vmem:[%s291 + $0xb8] sm:$0xff] %v338
        %v340 = vld [vmem:[%s290 + $0xc0] sm:$0xff]
        %341 = vst [vmem:[%s291 + $0xc0] sm:$0xff] %v340
        %v342 = vld [vmem:[%s290 + $0xc8] sm:$0xff]
        %343 = vst [vmem:[%s291 + $0xc8] sm:$0xff] %v342
        %v344 = vld [vmem:[%s290 + $0xd0] sm:$0xff]
        %345 = vst [vmem:[%s291 + $0xd0] sm:$0xff] %v344
        %v346 = vld [vmem:[%s290 + $0xd8] sm:$0xff]
        %347 = vst [vmem:[%s291 + $0xd8] sm:$0xff] %v346
        %v348 = vld [vmem:[%s290 + $0xe0] sm:$0xff]
        %349 = vst [vmem:[%s291 + $0xe0] sm:$0xff] %v348
        %v350 = vld [vmem:[%s290 + $0xe8] sm:$0xff]
        %351 = vst [vmem:[%s291 + $0xe8] sm:$0xff] %v350
        %v352 = vld [vmem:[%s290 + $0xf0] sm:$0xff]
        %353 = vst [vmem:[%s291 + $0xf0] sm:$0xff] %v352
        %v354 = vld [vmem:[%s290 + $0xf8] sm:$0xff]
        %355 = vst [vmem:[%s291 + $0xf8] sm:$0xff] %v354
        %v356 = vld [vmem:[%s290 + $0x100] sm:$0xff]
        %357 = vst [vmem:[%s291 + $0x100] sm:$0xff] %v356
        %v358 = vld [vmem:[%s290 + $0x108] sm:$0xff]
        %359 = vst [vmem:[%s291 + $0x108] sm:$0xff] %v358
        %v360 = vld [vmem:[%s290 + $0x110] sm:$0xff]
        %361 = vst [vmem:[%s291 + $0x110] sm:$0xff] %v360
        %v362 = vld [vmem:[%s290 + $0x118] sm:$0xff]
        %363 = vst [vmem:[%s291 + $0x118] sm:$0xff] %v362
        %v364 = vld [vmem:[%s290 + $0x120] sm:$0xff]
        %365 = vst [vmem:[%s291 + $0x120] sm:$0xff] %v364
        %v366 = vld [vmem:[%s290 + $0x128] sm:$0xff]
        %367 = vst [vmem:[%s291 + $0x128] sm:$0xff] %v366
        %v368 = vld [vmem:[%s290 + $0x130] sm:$0xff]
        %369 = vst [vmem:[%s291 + $0x130] sm:$0xff] %v368
        %v370 = vld [vmem:[%s290 + $0x138] sm:$0xff]
        %371 = vst [vmem:[%s291 + $0x138] sm:$0xff] %v370
        %v372 = vld [vmem:[%s290 + $0x140] sm:$0xff]
        %373 = vst [vmem:[%s291 + $0x140] sm:$0xff] %v372
        %v374 = vld [vmem:[%s290 + $0x148] sm:$0xff]
        %375 = vst [vmem:[%s291 + $0x148] sm:$0xff] %v374
        %v376 = vld [vmem:[%s290 + $0x150] sm:$0xff]
        %377 = vst [vmem:[%s291 + $0x150] sm:$0xff] %v376
        %v378 = vld [vmem:[%s290 + $0x158] sm:$0xff]
        %379 = vst [vmem:[%s291 + $0x158] sm:$0xff] %v378
        %v380 = vld [vmem:[%s290 + $0x160] sm:$0xff]
        %381 = vst [vmem:[%s291 + $0x160] sm:$0xff] %v380
        %v382 = vld [vmem:[%s290 + $0x168] sm:$0xff]
        %383 = vst [vmem:[%s291 + $0x168] sm:$0xff] %v382
        %v384 = vld [vmem:[%s290 + $0x170] sm:$0xff]
        %385 = vst [vmem:[%s291 + $0x170] sm:$0xff] %v384
        %v386 = vld [vmem:[%s290 + $0x178] sm:$0xff]
        %387 = vst [vmem:[%s291 + $0x178] sm:$0xff] %v386
        %v388 = vld [vmem:[%s290 + $0x180] sm:$0xff]
        %389 = vst [vmem:[%s291 + $0x180] sm:$0xff] %v388
        %v390 = vld [vmem:[%s290 + $0x188] sm:$0xff]
        %391 = vst [vmem:[%s291 + $0x188] sm:$0xff] %v390
        %v392 = vld [vmem:[%s290 + $0x190] sm:$0xff]
        %393 = vst [vmem:[%s291 + $0x190] sm:$0xff] %v392
        %v394 = vld [vmem:[%s290 + $0x198] sm:$0xff]
        %395 = vst [vmem:[%s291 + $0x198] sm:$0xff] %v394
        %v396 = vld [vmem:[%s290 + $0x1a0] sm:$0xff]
        %397 = vst [vmem:[%s291 + $0x1a0] sm:$0xff] %v396
        %v398 = vld [vmem:[%s290 + $0x1a8] sm:$0xff]
        %399 = vst [vmem:[%s291 + $0x1a8] sm:$0xff] %v398
        %v400 = vld [vmem:[%s290 + $0x1b0] sm:$0xff]
        %401 = vst [vmem:[%s291 + $0x1b0] sm:$0xff] %v400
        %v402 = vld [vmem:[%s290 + $0x1b8] sm:$0xff]
        %403 = vst [vmem:[%s291 + $0x1b8] sm:$0xff] %v402
        %v404 = vld [vmem:[%s290 + $0x1c0] sm:$0xff]
        %405 = vst [vmem:[%s291 + $0x1c0] sm:$0xff] %v404
        %v406 = vld [vmem:[%s290 + $0x1c8] sm:$0xff]
        %407 = vst [vmem:[%s291 + $0x1c8] sm:$0xff] %v406
        %v408 = vld [vmem:[%s290 + $0x1d0] sm:$0xff]
        %409 = vst [vmem:[%s291 + $0x1d0] sm:$0xff] %v408
        %v410 = vld [vmem:[%s290 + $0x1d8] sm:$0xff]
        %411 = vst [vmem:[%s291 + $0x1d8] sm:$0xff] %v410
        %v412 = vld [vmem:[%s290 + $0x1e0] sm:$0xff]
        %413 = vst [vmem:[%s291 + $0x1e0] sm:$0xff] %v412
        %v414 = vld [vmem:[%s290 + $0x1e8] sm:$0xff]
        %415 = vst [vmem:[%s291 + $0x1e8] sm:$0xff] %v414
        %v416 = vld [vmem:[%s290 + $0x1f0] sm:$0xff]
        %417 = vst [vmem:[%s291 + $0x1f0] sm:$0xff] %v416
        %v418 = vld [vmem:[%s290 + $0x1f8] sm:$0xff]
        %419 = vst [vmem:[%s291 + $0x1f8] sm:$0xff] %v418
      $region165: #{trajectory_transformer_encoder.1} parent=159 // loop_footer
        %s289 = sadd.s32 1, %s285
      $region166: #{trajectory_transformer_encoder.1} parent=159 // loop_footer_branch
        %284 = sbr.rel target = $region162
      $region167: #{trajectory_transformer_encoder.1} parent=159 // loop_exit
        _
    $region160: #{trajectory_transformer_encoder.1} parent=1 // pred_fallthru
      _
    // Predicated region
    $region168: #{trajectory_transformer_encoder.1} parent=1 // pred_check
      _
    $region169: #{trajectory_transformer_encoder.1} parent=1 // pred_check_branch
      %421 = sbr.rel target = $region171
    $region170: #{trajectory_transformer_encoder.1} parent=1 // pred_region
      _
    $region171: #{trajectory_transformer_encoder.1} parent=1 // pred_fallthru
      _
    // Predicated region
    $region172: #{trajectory_transformer_encoder.1} parent=1 // pred_check
      _
    $region173: #{trajectory_transformer_encoder.1} parent=1 // pred_check_branch
      %424 = sbr.rel (0) target = $region175
    $region174: #{trajectory_transformer_encoder.1} parent=1 // pred_region
      %425 = vsyncadd %s281, 8192
    $region175: #{trajectory_transformer_encoder.1} parent=1 // pred_fallthru
      _
    %s426 = scalar_lea.sflag [#allocation5], 2
    // Predicated region
    $region176: #{trajectory_transformer_encoder.1} parent=1 // pred_check
      _
    $region177: #{trajectory_transformer_encoder.1} parent=1 // pred_check_branch
      %428 = sbr.rel target = $region179
    $region178: #{trajectory_transformer_encoder.1} parent=1 // pred_region
      %429 = sst [smem:[#allocation27]] [#allocation26]
      %430 = sst [smem:[#allocation28]] [#allocation25]
    $region179: #{trajectory_transformer_encoder.1} parent=1 // pred_fallthru
      _
    %432 = shalt.err (0)
    %s434 = sshll.u32 %s21, 4
    %s435 = int_to_ptr.hbm [resolvable:$true] %s434
    %s436 = sshll.u32 [#allocation4], 4
    %s437 = int_to_ptr.vmem [resolvable:$true] %s436
    %439 = dma.hbm_to_vmem [thread:$0]  %s435, 8192, %s437, %s426
    %v440 = vld [vmem:[%s1] sm:$0x3]
    %v441 = vperm.slane %v440, 0
    %v442 = vlaneseq
    %v443 = vshrl.u32 %v442, 7
    %445 = vset.pattern.permute.xlu0 %v443
    %446 = vperm.xlu0 %445, %v441
    %v447 = vpop.permute.xlu0 %446
    %v448 = vperm.slane %v440, 1
    %v449 = vlaneseq
    %v450 = vshrl.u32 %v449, 7
    %452 = vset.pattern.permute.xlu0 %v450
    %453 = vperm.xlu0 %452, %v448
    %v454 = vpop.permute.xlu0 %453
    %v456 = vrot.slane %v440, 1
    %v458 = vsub.f32 1.0, %v440
    %v459 = vsub.f32 1.0, %v456
    %v462 = vperm.slane %v458, 0
    %v463 = vperm.slane %v459, 0
    %v466 = vmul.f32 %v447, %v462
    %v467 = vmul.f32 %v454, %v463
    %v468 = vmul.f32 %v466, -1e+09
    %v469 = vmul.f32 %v467, -1e+09
    %v470 = vld [vmem:[%s0] sm:$0xff]
    %v471 = vld [vmem:[%s0 + $0x8] sm:$0xff]
    %v472 = vld [vmem:[#allocation7] sm:$0xff]
    %v473 = vld [vmem:[#allocation7 + $0x8] sm:$0xff]
    %v474 = vld [vmem:[#allocation7 + $0x10] sm:$0xff]
    %v475 = vld [vmem:[#allocation7 + $0x18] sm:$0xff]
    %v476 = vld [vmem:[%s4] sm:$0x1]
    %v478 = vperm.slane %v476, 0
    %vm480 = vcmask 261120
    %v482 = vsel %vm480, %v470, 0
    %v485 = vsel %vm480, %v471, 0
    %487 = vmatpush.msra.mxu0 0.0
    %488 = vmatpush.msra.mxu0 0.0
    %489 = vmatpush.msra.mxu0 0.0
    %490 = vmatpush.msra.mxu0 0.0
    %491 = vmatpush.msra.mxu0 0.0
    %492 = vmatpush.msra.mxu0 0.0
    %493 = vmatpush.msra.mxu0 0.0
    %494 = vmatpush.msra.mxu0 0.0
    %495 = vmatpush.msra.mxu0 0.0
    %496 = vmatpush.msra.mxu0 0.0
    %497 = vmatpush.msra.mxu0 0.0
    %498 = vmatpush.msra.mxu0 0.0
    %499 = vmatpush.msra.mxu0 %v475
    %500 = vmatpush.msra.mxu0 %v474
    %501 = vmatpush.msra.mxu0 %v473
    %502 = vmatpush.msra.mxu0 %v472
    %503 = vmatmul.f32.gmra.mxu0 %v482
    %v504 = vpop.f32.mrf.mxu0
    %v505 = vadd.f32 %v478, %v504
    %506 = vmatmul.f32.gmra.mxu0 %v485
    %v507 = vpop.f32.mrf.mxu0
    %v508 = vadd.f32 %v478, %v507
    %509 = vdwg.mxu0
    %v510 = vmax.f32 %v505, 0.0
    %v511 = vmax.f32 %v508, 0.0
    %v512 = vld [vmem:[%s5] sm:$0xff]
    %v513 = vld [vmem:[%s5 + $0x8] sm:$0xff]
    %v514 = vld [vmem:[%s5 + $0x10] sm:$0xff]
    %v515 = vld [vmem:[%s5 + $0x18] sm:$0xff]
    %v516 = vld [vmem:[%s6] sm:$0x1]
    %v518 = vperm.slane %v516, 0
    %v521 = vsel %vm480, %v510, 0
    %v524 = vsel %vm480, %v511, 0
    %526 = vmatpush.msra.mxu0 0.0
    %527 = vmatpush.msra.mxu0 0.0
    %528 = vmatpush.msra.mxu0 0.0
    %529 = vmatpush.msra.mxu0 0.0
    %530 = vmatpush.msra.mxu0 0.0
    %531 = vmatpush.msra.mxu0 0.0
    %532 = vmatpush.msra.mxu0 0.0
    %533 = vmatpush.msra.mxu0 0.0
    %534 = vmatpush.msra.mxu0 0.0
    %535 = vmatpush.msra.mxu0 0.0
    %536 = vmatpush.msra.mxu0 0.0
    %537 = vmatpush.msra.mxu0 0.0
    %538 = vmatpush.msra.mxu0 %v515
    %539 = vmatpush.msra.mxu0 %v514
    %540 = vmatpush.msra.mxu0 %v513
    %541 = vmatpush.msra.mxu0 %v512
    %542 = vmatmul.f32.gmra.mxu0 %v521
    %v543 = vpop.f32.mrf.mxu0
    %v544 = vadd.f32 %v518, %v543
    %545 = vmatmul.f32.gmra.mxu0 %v524
    %v546 = vpop.f32.mrf.mxu0
    %v547 = vadd.f32 %v518, %v546
    %548 = vdwg.mxu0
    %v549 = vld [vmem:[%s7] sm:$0xff]
    %v550 = vld [vmem:[%s7 + $0x8] sm:$0xff]
    %v551 = vld [vmem:[%s7 + $0x10] sm:$0xff]
    %v552 = vld [vmem:[%s7 + $0x18] sm:$0xff]
    %554 = vrot.lane.b32.xlu0 %v544, 96
    %v555 = vpop.permute.xlu0 %554
    %vm556 = vcmask 64512
    %v557 = vsel %vm556, %v544, 0
    %v559 = vsel %vm556, %v555, 0
    %561 = vmatpush.xpose.msra.mxu0 0.0
    %562 = vmatpush.xpose.msra.mxu0 0.0
    %563 = vmatpush.xpose.msra.mxu0 0.0
    %564 = vmatpush.xpose.msra.mxu0 0.0
    %565 = vmatpush.xpose.msra.mxu0 0.0
    %566 = vmatpush.xpose.msra.mxu0 0.0
    %567 = vmatpush.xpose.msra.mxu0 0.0
    %568 = vmatpush.xpose.msra.mxu0 0.0
    %569 = vmatpush.xpose.msra.mxu0 0.0
    %570 = vmatpush.xpose.msra.mxu0 0.0
    %571 = vmatpush.xpose.msra.mxu0 0.0
    %572 = vmatpush.xpose.msra.mxu0 0.0
    %573 = vmatpush.xpose.msra.mxu0 0.0
    %574 = vmatpush.xpose.msra.mxu0 0.0
    %575 = vmatpush.xpose.msra.mxu0 0.0
    %576 = vmatpush.xpose.msra.mxu0 %v559
    %577 = vmatmul.f32.gmra.mxu0 %v557
    %v578 = vpop.f32.mrf.mxu0
    %v579 = vadd.f32 0.0, %v578
    %580 = vdwg.mxu0
    %582 = vrot.lane.b32.xlu0 %v547, 96
    %v583 = vpop.permute.xlu0 %582
    %v584 = vsel %vm556, %v547, 0
    %v586 = vsel %vm556, %v583, 0
    %588 = vmatpush.xpose.msra.mxu0 0.0
    %589 = vmatpush.xpose.msra.mxu0 0.0
    %590 = vmatpush.xpose.msra.mxu0 0.0
    %591 = vmatpush.xpose.msra.mxu0 0.0
    %592 = vmatpush.xpose.msra.mxu0 0.0
    %593 = vmatpush.xpose.msra.mxu0 0.0
    %594 = vmatpush.xpose.msra.mxu0 0.0
    %595 = vmatpush.xpose.msra.mxu0 0.0
    %596 = vmatpush.xpose.msra.mxu0 0.0
    %597 = vmatpush.xpose.msra.mxu0 0.0
    %598 = vmatpush.xpose.msra.mxu0 0.0
    %599 = vmatpush.xpose.msra.mxu0 0.0
    %600 = vmatpush.xpose.msra.mxu0 0.0
    %601 = vmatpush.xpose.msra.mxu0 0.0
    %602 = vmatpush.xpose.msra.mxu0 0.0
    %603 = vmatpush.xpose.msra.mxu0 %v586
    %604 = vmatmul.f32.gmra.mxu0 %v584
    %v605 = vpop.f32.mrf.mxu0
    %v606 = vadd.f32 0.0, %v605
    %607 = vdwg.mxu0
    %v608 = vmul.f32 %v579, 0.35355338
    %v609 = vmul.f32 %v606, 0.35355338
    %v610 = vadd.f32 %v608, %v468
    %v611 = vadd.f32 %v609, %v469
    %v612 = vsel %vm556, %v610, -inf
    %613 = vmax.xlane.f32.xlu0 %v612
    %v614 = vpop.xlane.xlu0 %613
    %v615 = vsel %vm556, %v611, -inf
    %616 = vmax.xlane.f32.xlu0 %v615
    %v617 = vpop.xlane.xlu0 %616
    %v618 = vsub.f32 %v610, %v614
    %v619 = vsub.f32 %v611, %v617
    %v620 = vmul.f32 %v618, 1.442695
    %v621 = vpow.pop %v620
    %v622 = vmul.f32 %v619, 1.442695
    %v623 = vpow.pop %v622
    %v624 = vsel %vm556, %v621, 0.0
    %625 = vadd.xlane.f32.xlu0 %v624
    %v626 = vpop.xlane.xlu0 %625
    %v627 = vsel %vm556, %v623, 0.0
    %628 = vadd.xlane.f32.xlu0 %v627
    %v629 = vpop.xlane.xlu0 %628
    %v630 = vrcp.pop %v626
    %v631 = vrcp.pop %v629
    %v632 = vmul.f32 %v621, %v630
    %v633 = vmul.f32 %v623, %v631
    %634 = vrot.lane.b32.xlu0 %v544, 64
    %v635 = vpop.permute.xlu0 %634
    %v638 = vsel %vm556, %v632, 0
    %640 = vmatpush.msra.mxu0 0.0
    %641 = vmatpush.msra.mxu0 0.0
    %642 = vmatpush.msra.mxu0 0.0
    %643 = vmatpush.msra.mxu0 0.0
    %644 = vmatpush.msra.mxu0 0.0
    %645 = vmatpush.msra.mxu0 0.0
    %646 = vmatpush.msra.mxu0 0.0
    %647 = vmatpush.msra.mxu0 0.0
    %648 = vmatpush.msra.mxu0 0.0
    %649 = vmatpush.msra.mxu0 0.0
    %650 = vmatpush.msra.mxu0 0.0
    %651 = vmatpush.msra.mxu0 0.0
    %652 = vmatpush.msra.mxu0 0.0
    %653 = vmatpush.msra.mxu0 0.0
    %654 = vmatpush.msra.mxu0 0.0
    %655 = vmatpush.msra.mxu0 %v635
    %656 = vmatmul.f32.gmra.mxu0 %v638
    %v657 = vpop.f32.mrf.mxu0
    %v658 = vadd.f32 0.0, %v657
    %659 = vdwg.mxu0
    %660 = vrot.lane.b32.xlu0 %v547, 64
    %v661 = vpop.permute.xlu0 %660
    %v664 = vsel %vm556, %v633, 0
    %666 = vmatpush.msra.mxu0 0.0
    %667 = vmatpush.msra.mxu0 0.0
    %668 = vmatpush.msra.mxu0 0.0
    %669 = vmatpush.msra.mxu0 0.0
    %670 = vmatpush.msra.mxu0 0.0
    %671 = vmatpush.msra.mxu0 0.0
    %672 = vmatpush.msra.mxu0 0.0
    %673 = vmatpush.msra.mxu0 0.0
    %674 = vmatpush.msra.mxu0 0.0
    %675 = vmatpush.msra.mxu0 0.0
    %676 = vmatpush.msra.mxu0 0.0
    %677 = vmatpush.msra.mxu0 0.0
    %678 = vmatpush.msra.mxu0 0.0
    %679 = vmatpush.msra.mxu0 0.0
    %680 = vmatpush.msra.mxu0 0.0
    %681 = vmatpush.msra.mxu0 %v661
    %682 = vmatmul.f32.gmra.mxu0 %v664
    %v683 = vpop.f32.mrf.mxu0
    %v684 = vadd.f32 0.0, %v683
    %685 = vdwg.mxu0
    %686 = vrot.lane.b32.xlu0 %v544, 120
    %v687 = vpop.permute.xlu0 %686
    %688 = vrot.lane.b32.xlu0 %v544, 88
    %v689 = vpop.permute.xlu0 %688
    %v690 = vsel %vm556, %v687, 0
    %v692 = vsel %vm556, %v689, 0
    %694 = vmatpush.xpose.msra.mxu0 0.0
    %695 = vmatpush.xpose.msra.mxu0 0.0
    %696 = vmatpush.xpose.msra.mxu0 0.0
    %697 = vmatpush.xpose.msra.mxu0 0.0
    %698 = vmatpush.xpose.msra.mxu0 0.0
    %699 = vmatpush.xpose.msra.mxu0 0.0
    %700 = vmatpush.xpose.msra.mxu0 0.0
    %701 = vmatpush.xpose.msra.mxu0 0.0
    %702 = vmatpush.xpose.msra.mxu0 0.0
    %703 = vmatpush.xpose.msra.mxu0 0.0
    %704 = vmatpush.xpose.msra.mxu0 0.0
    %705 = vmatpush.xpose.msra.mxu0 0.0
    %706 = vmatpush.xpose.msra.mxu0 0.0
    %707 = vmatpush.xpose.msra.mxu0 0.0
    %708 = vmatpush.xpose.msra.mxu0 0.0
    %709 = vmatpush.xpose.msra.mxu0 %v692
    %710 = vmatmul.f32.gmra.mxu0 %v690
    %v711 = vpop.f32.mrf.mxu0
    %v712 = vadd.f32 0.0, %v711
    %713 = vdwg.mxu0
    %714 = vrot.lane.b32.xlu0 %v547, 120
    %v715 = vpop.permute.xlu0 %714
    %716 = vrot.lane.b32.xlu0 %v547, 88
    %v717 = vpop.permute.xlu0 %716
    %v718 = vsel %vm556, %v715, 0
    %v720 = vsel %vm556, %v717, 0
    %722 = vmatpush.xpose.msra.mxu0 0.0
    %723 = vmatpush.xpose.msra.mxu0 0.0
    %724 = vmatpush.xpose.msra.mxu0 0.0
    %725 = vmatpush.xpose.msra.mxu0 0.0
    %726 = vmatpush.xpose.msra.mxu0 0.0
    %727 = vmatpush.xpose.msra.mxu0 0.0
    %728 = vmatpush.xpose.msra.mxu0 0.0
    %729 = vmatpush.xpose.msra.mxu0 0.0
    %730 = vmatpush.xpose.msra.mxu0 0.0
    %731 = vmatpush.xpose.msra.mxu0 0.0
    %732 = vmatpush.xpose.msra.mxu0 0.0
    %733 = vmatpush.xpose.msra.mxu0 0.0
    %734 = vmatpush.xpose.msra.mxu0 0.0
    %735 = vmatpush.xpose.msra.mxu0 0.0
    %736 = vmatpush.xpose.msra.mxu0 0.0
    %737 = vmatpush.xpose.msra.mxu0 %v720
    %738 = vmatmul.f32.gmra.mxu0 %v718
    %v739 = vpop.f32.mrf.mxu0
    %v740 = vadd.f32 0.0, %v739
    %741 = vdwg.mxu0
    %v742 = vmul.f32 %v712, 0.35355338
    %v743 = vmul.f32 %v740, 0.35355338
    %v744 = vadd.f32 %v742, %v468
    %v745 = vadd.f32 %v743, %v469
    %v746 = vsel %vm556, %v744, -inf
    %747 = vmax.xlane.f32.xlu0 %v746
    %v748 = vpop.xlane.xlu0 %747
    %v749 = vsel %vm556, %v745, -inf
    %750 = vmax.xlane.f32.xlu0 %v749
    %v751 = vpop.xlane.xlu0 %750
    %v752 = vsub.f32 %v744, %v748
    %v753 = vsub.f32 %v745, %v751
    %v754 = vmul.f32 %v752, 1.442695
    %v755 = vpow.pop %v754
    %v756 = vmul.f32 %v753, 1.442695
    %v757 = vpow.pop %v756
    %v758 = vsel %vm556, %v755, 0.0
    %759 = vadd.xlane.f32.xlu0 %v758
    %v760 = vpop.xlane.xlu0 %759
    %v761 = vsel %vm556, %v757, 0.0
    %762 = vadd.xlane.f32.xlu0 %v761
    %v763 = vpop.xlane.xlu0 %762
    %v764 = vrcp.pop %v760
    %v765 = vrcp.pop %v763
    %v766 = vmul.f32 %v755, %v764
    %v767 = vmul.f32 %v757, %v765
    %768 = vrot.lane.b32.xlu0 %v544, 56
    %v769 = vpop.permute.xlu0 %768
    %v772 = vsel %vm556, %v766, 0
    %774 = vmatpush.msra.mxu0 0.0
    %775 = vmatpush.msra.mxu0 0.0
    %776 = vmatpush.msra.mxu0 0.0
    %777 = vmatpush.msra.mxu0 0.0
    %778 = vmatpush.msra.mxu0 0.0
    %779 = vmatpush.msra.mxu0 0.0
    %780 = vmatpush.msra.mxu0 0.0
    %781 = vmatpush.msra.mxu0 0.0
    %782 = vmatpush.msra.mxu0 0.0
    %783 = vmatpush.msra.mxu0 0.0
    %784 = vmatpush.msra.mxu0 0.0
    %785 = vmatpush.msra.mxu0 0.0
    %786 = vmatpush.msra.mxu0 0.0
    %787 = vmatpush.msra.mxu0 0.0
    %788 = vmatpush.msra.mxu0 0.0
    %789 = vmatpush.msra.mxu0 %v769
    %790 = vmatmul.f32.gmra.mxu0 %v772
    %v791 = vpop.f32.mrf.mxu0
    %v792 = vadd.f32 0.0, %v791
    %793 = vdwg.mxu0
    %794 = vrot.lane.b32.xlu0 %v547, 56
    %v795 = vpop.permute.xlu0 %794
    %v798 = vsel %vm556, %v767, 0
    %800 = vmatpush.msra.mxu0 0.0
    %801 = vmatpush.msra.mxu0 0.0
    %802 = vmatpush.msra.mxu0 0.0
    %803 = vmatpush.msra.mxu0 0.0
    %804 = vmatpush.msra.mxu0 0.0
    %805 = vmatpush.msra.mxu0 0.0
    %806 = vmatpush.msra.mxu0 0.0
    %807 = vmatpush.msra.mxu0 0.0
    %808 = vmatpush.msra.mxu0 0.0
    %809 = vmatpush.msra.mxu0 0.0
    %810 = vmatpush.msra.mxu0 0.0
    %811 = vmatpush.msra.mxu0 0.0
    %812 = vmatpush.msra.mxu0 0.0
    %813 = vmatpush.msra.mxu0 0.0
    %814 = vmatpush.msra.mxu0 0.0
    %815 = vmatpush.msra.mxu0 %v795
    %816 = vmatmul.f32.gmra.mxu0 %v798
    %v817 = vpop.f32.mrf.mxu0
    %v818 = vadd.f32 0.0, %v817
    %819 = vdwg.mxu0
    %v821 = vsel %vm556, %v792, 0
    %v824 = vsel %vm556, %v818, 0
    %826 = vmatpush.msra.mxu0 0.0
    %827 = vmatpush.msra.mxu0 0.0
    %828 = vmatpush.msra.mxu0 0.0
    %829 = vmatpush.msra.mxu0 0.0
    %830 = vmatpush.msra.mxu0 0.0
    %831 = vmatpush.msra.mxu0 0.0
    %832 = vmatpush.msra.mxu0 0.0
    %833 = vmatpush.msra.mxu0 0.0
    %834 = vmatpush.msra.mxu0 0.0
    %835 = vmatpush.msra.mxu0 0.0
    %836 = vmatpush.msra.mxu0 0.0
    %837 = vmatpush.msra.mxu0 0.0
    %838 = vmatpush.msra.mxu0 0.0
    %839 = vmatpush.msra.mxu0 0.0
    %840 = vmatpush.msra.mxu0 0.0
    %841 = vmatpush.msra.mxu0 %v550
    %842 = vmatmul.f32.gmra.mxu0 %v821
    %v843 = vpop.f32.mrf.mxu0
    %v844 = vadd.f32 0.0, %v843
    %845 = vmatmul.f32.gmra.mxu0 %v824
    %v846 = vpop.f32.mrf.mxu0
    %v847 = vadd.f32 0.0, %v846
    %848 = vdwg.mxu0
    %v850 = vsel %vm556, %v658, 0
    %v853 = vsel %vm556, %v684, 0
    %855 = vmatpush.msra.mxu0 0.0
    %856 = vmatpush.msra.mxu0 0.0
    %857 = vmatpush.msra.mxu0 0.0
    %858 = vmatpush.msra.mxu0 0.0
    %859 = vmatpush.msra.mxu0 0.0
    %860 = vmatpush.msra.mxu0 0.0
    %861 = vmatpush.msra.mxu0 0.0
    %862 = vmatpush.msra.mxu0 0.0
    %863 = vmatpush.msra.mxu0 0.0
    %864 = vmatpush.msra.mxu0 0.0
    %865 = vmatpush.msra.mxu0 0.0
    %866 = vmatpush.msra.mxu0 0.0
    %867 = vmatpush.msra.mxu0 0.0
    %868 = vmatpush.msra.mxu0 0.0
    %869 = vmatpush.msra.mxu0 0.0
    %870 = vmatpush.msra.mxu0 %v549
    %871 = vmatmul.f32.gmra.mxu0 %v850
    %v872 = vpop.f32.mrf.mxu0
    %v873 = vadd.f32 %v844, %v872
    %874 = vmatmul.f32.gmra.mxu0 %v853
    %v875 = vpop.f32.mrf.mxu0
    %v876 = vadd.f32 %v847, %v875
    %877 = vdwg.mxu0
    %878 = vrot.lane.b32.xlu0 %v544, 112
    %v879 = vpop.permute.xlu0 %878
    %880 = vrot.lane.b32.xlu0 %v544, 80
    %v881 = vpop.permute.xlu0 %880
    %v882 = vsel %vm556, %v879, 0
    %v884 = vsel %vm556, %v881, 0
    %886 = vmatpush.xpose.msra.mxu0 0.0
    %887 = vmatpush.xpose.msra.mxu0 0.0
    %888 = vmatpush.xpose.msra.mxu0 0.0
    %889 = vmatpush.xpose.msra.mxu0 0.0
    %890 = vmatpush.xpose.msra.mxu0 0.0
    %891 = vmatpush.xpose.msra.mxu0 0.0
    %892 = vmatpush.xpose.msra.mxu0 0.0
    %893 = vmatpush.xpose.msra.mxu0 0.0
    %894 = vmatpush.xpose.msra.mxu0 0.0
    %895 = vmatpush.xpose.msra.mxu0 0.0
    %896 = vmatpush.xpose.msra.mxu0 0.0
    %897 = vmatpush.xpose.msra.mxu0 0.0
    %898 = vmatpush.xpose.msra.mxu0 0.0
    %899 = vmatpush.xpose.msra.mxu0 0.0
    %900 = vmatpush.xpose.msra.mxu0 0.0
    %901 = vmatpush.xpose.msra.mxu0 %v884
    %902 = vmatmul.f32.gmra.mxu0 %v882
    %v903 = vpop.f32.mrf.mxu0
    %v904 = vadd.f32 0.0, %v903
    %905 = vdwg.mxu0
    %906 = vrot.lane.b32.xlu0 %v547, 112
    %v907 = vpop.permute.xlu0 %906
    %908 = vrot.lane.b32.xlu0 %v547, 80
    %v909 = vpop.permute.xlu0 %908
    %v910 = vsel %vm556, %v907, 0
    %v912 = vsel %vm556, %v909, 0
    %914 = vmatpush.xpose.msra.mxu0 0.0
    %915 = vmatpush.xpose.msra.mxu0 0.0
    %916 = vmatpush.xpose.msra.mxu0 0.0
    %917 = vmatpush.xpose.msra.mxu0 0.0
    %918 = vmatpush.xpose.msra.mxu0 0.0
    %919 = vmatpush.xpose.msra.mxu0 0.0
    %920 = vmatpush.xpose.msra.mxu0 0.0
    %921 = vmatpush.xpose.msra.mxu0 0.0
    %922 = vmatpush.xpose.msra.mxu0 0.0
    %923 = vmatpush.xpose.msra.mxu0 0.0
    %924 = vmatpush.xpose.msra.mxu0 0.0
    %925 = vmatpush.xpose.msra.mxu0 0.0
    %926 = vmatpush.xpose.msra.mxu0 0.0
    %927 = vmatpush.xpose.msra.mxu0 0.0
    %928 = vmatpush.xpose.msra.mxu0 0.0
    %929 = vmatpush.xpose.msra.mxu0 %v912
    %930 = vmatmul.f32.gmra.mxu0 %v910
    %v931 = vpop.f32.mrf.mxu0
    %v932 = vadd.f32 0.0, %v931
    %933 = vdwg.mxu0
    %v934 = vmul.f32 %v904, 0.35355338
    %v935 = vmul.f32 %v932, 0.35355338
    %v936 = vadd.f32 %v934, %v468
    %v937 = vadd.f32 %v935, %v469
    %v938 = vsel %vm556, %v936, -inf
    %939 = vmax.xlane.f32.xlu0 %v938
    %v940 = vpop.xlane.xlu0 %939
    %v941 = vsel %vm556, %v937, -inf
    %942 = vmax.xlane.f32.xlu0 %v941
    %v943 = vpop.xlane.xlu0 %942
    %v944 = vsub.f32 %v936, %v940
    %v945 = vsub.f32 %v937, %v943
    %v946 = vmul.f32 %v944, 1.442695
    %v947 = vpow.pop %v946
    %v948 = vmul.f32 %v945, 1.442695
    %v949 = vpow.pop %v948
    %v950 = vsel %vm556, %v947, 0.0
    %951 = vadd.xlane.f32.xlu0 %v950
    %v952 = vpop.xlane.xlu0 %951
    %v953 = vsel %vm556, %v949, 0.0
    %954 = vadd.xlane.f32.xlu0 %v953
    %v955 = vpop.xlane.xlu0 %954
    %v956 = vrcp.pop %v952
    %v957 = vrcp.pop %v955
    %v958 = vmul.f32 %v947, %v956
    %v959 = vmul.f32 %v949, %v957
    %960 = vrot.lane.b32.xlu0 %v544, 48
    %v961 = vpop.permute.xlu0 %960
    %v964 = vsel %vm556, %v958, 0
    %966 = vmatpush.msra.mxu0 0.0
    %967 = vmatpush.msra.mxu0 0.0
    %968 = vmatpush.msra.mxu0 0.0
    %969 = vmatpush.msra.mxu0 0.0
    %970 = vmatpush.msra.mxu0 0.0
    %971 = vmatpush.msra.mxu0 0.0
    %972 = vmatpush.msra.mxu0 0.0
    %973 = vmatpush.msra.mxu0 0.0
    %974 = vmatpush.msra.mxu0 0.0
    %975 = vmatpush.msra.mxu0 0.0
    %976 = vmatpush.msra.mxu0 0.0
    %977 = vmatpush.msra.mxu0 0.0
    %978 = vmatpush.msra.mxu0 0.0
    %979 = vmatpush.msra.mxu0 0.0
    %980 = vmatpush.msra.mxu0 0.0
    %981 = vmatpush.msra.mxu0 %v961
    %982 = vmatmul.f32.gmra.mxu0 %v964
    %v983 = vpop.f32.mrf.mxu0
    %v984 = vadd.f32 0.0, %v983
    %985 = vdwg.mxu0
    %986 = vrot.lane.b32.xlu0 %v547, 48
    %v987 = vpop.permute.xlu0 %986
    %v990 = vsel %vm556, %v959, 0
    %992 = vmatpush.msra.mxu0 0.0
    %993 = vmatpush.msra.mxu0 0.0
    %994 = vmatpush.msra.mxu0 0.0
    %995 = vmatpush.msra.mxu0 0.0
    %996 = vmatpush.msra.mxu0 0.0
    %997 = vmatpush.msra.mxu0 0.0
    %998 = vmatpush.msra.mxu0 0.0
    %999 = vmatpush.msra.mxu0 0.0
    %1000 = vmatpush.msra.mxu0 0.0
    %1001 = vmatpush.msra.mxu0 0.0
    %1002 = vmatpush.msra.mxu0 0.0
    %1003 = vmatpush.msra.mxu0 0.0
    %1004 = vmatpush.msra.mxu0 0.0
    %1005 = vmatpush.msra.mxu0 0.0
    %1006 = vmatpush.msra.mxu0 0.0
    %1007 = vmatpush.msra.mxu0 %v987
    %1008 = vmatmul.f32.gmra.mxu0 %v990
    %v1009 = vpop.f32.mrf.mxu0
    %v1010 = vadd.f32 0.0, %v1009
    %1011 = vdwg.mxu0
    %v1013 = vsel %vm556, %v984, 0
    %v1016 = vsel %vm556, %v1010, 0
    %1018 = vmatpush.msra.mxu0 0.0
    %1019 = vmatpush.msra.mxu0 0.0
    %1020 = vmatpush.msra.mxu0 0.0
    %1021 = vmatpush.msra.mxu0 0.0
    %1022 = vmatpush.msra.mxu0 0.0
    %1023 = vmatpush.msra.mxu0 0.0
    %1024 = vmatpush.msra.mxu0 0.0
    %1025 = vmatpush.msra.mxu0 0.0
    %1026 = vmatpush.msra.mxu0 0.0
    %1027 = vmatpush.msra.mxu0 0.0
    %1028 = vmatpush.msra.mxu0 0.0
    %1029 = vmatpush.msra.mxu0 0.0
    %1030 = vmatpush.msra.mxu0 0.0
    %1031 = vmatpush.msra.mxu0 0.0
    %1032 = vmatpush.msra.mxu0 0.0
    %1033 = vmatpush.msra.mxu0 %v551
    %1034 = vmatmul.f32.gmra.mxu0 %v1013
    %v1035 = vpop.f32.mrf.mxu0
    %v1036 = vadd.f32 0.0, %v1035
    %1037 = vmatmul.f32.gmra.mxu0 %v1016
    %v1038 = vpop.f32.mrf.mxu0
    %v1039 = vadd.f32 0.0, %v1038
    %1040 = vdwg.mxu0
    %v1041 = vadd.f32 %v873, %v1036
    %v1042 = vadd.f32 %v876, %v1039
    %1043 = vrot.lane.b32.xlu0 %v544, 104
    %v1044 = vpop.permute.xlu0 %1043
    %1045 = vrot.lane.b32.xlu0 %v544, 72
    %v1046 = vpop.permute.xlu0 %1045
    %v1047 = vsel %vm556, %v1044, 0
    %v1049 = vsel %vm556, %v1046, 0
    %1051 = vmatpush.xpose.msra.mxu0 0.0
    %1052 = vmatpush.xpose.msra.mxu0 0.0
    %1053 = vmatpush.xpose.msra.mxu0 0.0
    %1054 = vmatpush.xpose.msra.mxu0 0.0
    %1055 = vmatpush.xpose.msra.mxu0 0.0
    %1056 = vmatpush.xpose.msra.mxu0 0.0
    %1057 = vmatpush.xpose.msra.mxu0 0.0
    %1058 = vmatpush.xpose.msra.mxu0 0.0
    %1059 = vmatpush.xpose.msra.mxu0 0.0
    %1060 = vmatpush.xpose.msra.mxu0 0.0
    %1061 = vmatpush.xpose.msra.mxu0 0.0
    %1062 = vmatpush.xpose.msra.mxu0 0.0
    %1063 = vmatpush.xpose.msra.mxu0 0.0
    %1064 = vmatpush.xpose.msra.mxu0 0.0
    %1065 = vmatpush.xpose.msra.mxu0 0.0
    %1066 = vmatpush.xpose.msra.mxu0 %v1049
    %1067 = vmatmul.f32.gmra.mxu0 %v1047
    %v1068 = vpop.f32.mrf.mxu0
    %v1069 = vadd.f32 0.0, %v1068
    %1070 = vdwg.mxu0
    %1071 = vrot.lane.b32.xlu0 %v547, 104
    %v1072 = vpop.permute.xlu0 %1071
    %1073 = vrot.lane.b32.xlu0 %v547, 72
    %v1074 = vpop.permute.xlu0 %1073
    %v1075 = vsel %vm556, %v1072, 0
    %v1077 = vsel %vm556, %v1074, 0
    %1079 = vmatpush.xpose.msra.mxu0 0.0
    %1080 = vmatpush.xpose.msra.mxu0 0.0
    %1081 = vmatpush.xpose.msra.mxu0 0.0
    %1082 = vmatpush.xpose.msra.mxu0 0.0
    %1083 = vmatpush.xpose.msra.mxu0 0.0
    %1084 = vmatpush.xpose.msra.mxu0 0.0
    %1085 = vmatpush.xpose.msra.mxu0 0.0
    %1086 = vmatpush.xpose.msra.mxu0 0.0
    %1087 = vmatpush.xpose.msra.mxu0 0.0
    %1088 = vmatpush.xpose.msra.mxu0 0.0
    %1089 = vmatpush.xpose.msra.mxu0 0.0
    %1090 = vmatpush.xpose.msra.mxu0 0.0
    %1091 = vmatpush.xpose.msra.mxu0 0.0
    %1092 = vmatpush.xpose.msra.mxu0 0.0
    %1093 = vmatpush.xpose.msra.mxu0 0.0
    %1094 = vmatpush.xpose.msra.mxu0 %v1077
    %1095 = vmatmul.f32.gmra.mxu0 %v1075
    %v1096 = vpop.f32.mrf.mxu0
    %v1097 = vadd.f32 0.0, %v1096
    %1098 = vdwg.mxu0
    %v1099 = vmul.f32 %v1069, 0.35355338
    %v1100 = vmul.f32 %v1097, 0.35355338
    %v1101 = vadd.f32 %v1099, %v468
    %v1102 = vadd.f32 %v1100, %v469
    %v1103 = vsel %vm556, %v1101, -inf
    %1104 = vmax.xlane.f32.xlu0 %v1103
    %v1105 = vpop.xlane.xlu0 %1104
    %v1106 = vsel %vm556, %v1102, -inf
    %1107 = vmax.xlane.f32.xlu0 %v1106
    %v1108 = vpop.xlane.xlu0 %1107
    %v1109 = vsub.f32 %v1101, %v1105
    %v1110 = vsub.f32 %v1102, %v1108
    %v1111 = vmul.f32 %v1109, 1.442695
    %v1112 = vpow.pop %v1111
    %v1113 = vmul.f32 %v1110, 1.442695
    %v1114 = vpow.pop %v1113
    %v1115 = vsel %vm556, %v1112, 0.0
    %1116 = vadd.xlane.f32.xlu0 %v1115
    %v1117 = vpop.xlane.xlu0 %1116
    %v1118 = vsel %vm556, %v1114, 0.0
    %1119 = vadd.xlane.f32.xlu0 %v1118
    %v1120 = vpop.xlane.xlu0 %1119
    %v1121 = vrcp.pop %v1117
    %v1122 = vrcp.pop %v1120
    %v1123 = vmul.f32 %v1112, %v1121
    %v1124 = vmul.f32 %v1114, %v1122
    %1125 = vrot.lane.b32.xlu0 %v544, 40
    %v1126 = vpop.permute.xlu0 %1125
    %v1129 = vsel %vm556, %v1123, 0
    %1131 = vmatpush.msra.mxu0 0.0
    %1132 = vmatpush.msra.mxu0 0.0
    %1133 = vmatpush.msra.mxu0 0.0
    %1134 = vmatpush.msra.mxu0 0.0
    %1135 = vmatpush.msra.mxu0 0.0
    %1136 = vmatpush.msra.mxu0 0.0
    %1137 = vmatpush.msra.mxu0 0.0
    %1138 = vmatpush.msra.mxu0 0.0
    %1139 = vmatpush.msra.mxu0 0.0
    %1140 = vmatpush.msra.mxu0 0.0
    %1141 = vmatpush.msra.mxu0 0.0
    %1142 = vmatpush.msra.mxu0 0.0
    %1143 = vmatpush.msra.mxu0 0.0
    %1144 = vmatpush.msra.mxu0 0.0
    %1145 = vmatpush.msra.mxu0 0.0
    %1146 = vmatpush.msra.mxu0 %v1126
    %1147 = vmatmul.f32.gmra.mxu0 %v1129
    %v1148 = vpop.f32.mrf.mxu0
    %v1149 = vadd.f32 0.0, %v1148
    %1150 = vdwg.mxu0
    %1151 = vrot.lane.b32.xlu0 %v547, 40
    %v1152 = vpop.permute.xlu0 %1151
    %v1155 = vsel %vm556, %v1124, 0
    %1157 = vmatpush.msra.mxu0 0.0
    %1158 = vmatpush.msra.mxu0 0.0
    %1159 = vmatpush.msra.mxu0 0.0
    %1160 = vmatpush.msra.mxu0 0.0
    %1161 = vmatpush.msra.mxu0 0.0
    %1162 = vmatpush.msra.mxu0 0.0
    %1163 = vmatpush.msra.mxu0 0.0
    %1164 = vmatpush.msra.mxu0 0.0
    %1165 = vmatpush.msra.mxu0 0.0
    %1166 = vmatpush.msra.mxu0 0.0
    %1167 = vmatpush.msra.mxu0 0.0
    %1168 = vmatpush.msra.mxu0 0.0
    %1169 = vmatpush.msra.mxu0 0.0
    %1170 = vmatpush.msra.mxu0 0.0
    %1171 = vmatpush.msra.mxu0 0.0
    %1172 = vmatpush.msra.mxu0 %v1152
    %1173 = vmatmul.f32.gmra.mxu0 %v1155
    %v1174 = vpop.f32.mrf.mxu0
    %v1175 = vadd.f32 0.0, %v1174
    %1176 = vdwg.mxu0
    %v1178 = vsel %vm556, %v1149, 0
    %v1181 = vsel %vm556, %v1175, 0
    %1183 = vmatpush.msra.mxu0 0.0
    %1184 = vmatpush.msra.mxu0 0.0
    %1185 = vmatpush.msra.mxu0 0.0
    %1186 = vmatpush.msra.mxu0 0.0
    %1187 = vmatpush.msra.mxu0 0.0
    %1188 = vmatpush.msra.mxu0 0.0
    %1189 = vmatpush.msra.mxu0 0.0
    %1190 = vmatpush.msra.mxu0 0.0
    %1191 = vmatpush.msra.mxu0 0.0
    %1192 = vmatpush.msra.mxu0 0.0
    %1193 = vmatpush.msra.mxu0 0.0
    %1194 = vmatpush.msra.mxu0 0.0
    %1195 = vmatpush.msra.mxu0 0.0
    %1196 = vmatpush.msra.mxu0 0.0
    %1197 = vmatpush.msra.mxu0 0.0
    %1198 = vmatpush.msra.mxu0 %v552
    %1199 = vmatmul.f32.gmra.mxu0 %v1178
    %v1200 = vpop.f32.mrf.mxu0
    %v1201 = vadd.f32 0.0, %v1200
    %1202 = vmatmul.f32.gmra.mxu0 %v1181
    %v1203 = vpop.f32.mrf.mxu0
    %v1204 = vadd.f32 0.0, %v1203
    %1205 = vdwg.mxu0
    %v1206 = vadd.f32 %v1041, %v1201
    %v1207 = vadd.f32 %v1042, %v1204
    %v1208 = vld [vmem:[%s8] sm:$0x1]
    %v1210 = vperm.slane %v1208, 0
    %v1212 = vadd.f32 %v1206, %v1210
    %v1213 = vadd.f32 %v1207, %v1210
    %v1214 = vadd.f32 %v510, %v1212
    %v1215 = vadd.f32 %v511, %v1213
    %v1216 = vld [vmem:[%s9] sm:$0x1]
    %v1217 = vld [vmem:[#allocation9] sm:$0x1]
    %v1218 = vsel %vm480, %v1214, 0.0
    %1219 = vadd.xlane.f32.xlu0 %v1218
    %v1220 = vpop.xlane.xlu0 %1219
    %v1221 = vsel %vm480, %v1215, 0.0
    %1222 = vadd.xlane.f32.xlu0 %v1221
    %v1223 = vpop.xlane.xlu0 %1222
    %v1224 = vrcp.pop 32.0
    %v1225 = vmul.f32 32.0, %v1224
    %v1226 = vsub.f32 1.0, %v1225
    %v1227 = vmul.f32 %v1224, %v1226
    %v1228 = vadd.f32 %v1224, %v1227
    %vm1229 = vweird.f32 %v1224
    %v1230 = vsel %vm1229, %v1224, %v1228
    %v1231 = vmul.f32 %v1220, %v1230
    %v1232 = vmul.f32 %v1223, %v1230
    %v1233 = vsub.f32 %v1214, %v1231
    %v1234 = vsub.f32 %v1215, %v1232
    %v1235 = vmul.f32 %v1233, %v1233
    %v1236 = vmul.f32 %v1234, %v1234
    %v1237 = vsel %vm480, %v1235, 0.0
    %1238 = vadd.xlane.f32.xlu0 %v1237
    %v1239 = vpop.xlane.xlu0 %1238
    %v1240 = vsel %vm480, %v1236, 0.0
    %1241 = vadd.xlane.f32.xlu0 %v1240
    %v1242 = vpop.xlane.xlu0 %1241
    %v1243 = vmul.f32 %v1239, %v1230
    %v1244 = vmul.f32 %v1242, %v1230
    %v1245 = vadd.f32 %v1243, 1e-05
    %v1246 = vadd.f32 %v1244, 1e-05
    %v1247 = vrsqrt.pop %v1245
    %v1248 = vmul.f32 %v1247, %v1245
    %v1249 = vmul.f32 %v1248, %v1247
    %v1250 = vmul.f32 0.5, %v1249
    %v1251 = vsub.f32 1.5, %v1250
    %v1252 = vmul.f32 %v1247, %v1251
    %vm1253 = vweird.f32 %v1245
    %vm1254 = vweird.f32 %v1247
    %vm1255 = vmor %vm1253, %vm1254
    %v1256 = vsel %vm1255, %v1247, %v1252
    %v1257 = vrsqrt.pop %v1246
    %v1258 = vmul.f32 %v1257, %v1246
    %v1259 = vmul.f32 %v1258, %v1257
    %v1260 = vmul.f32 0.5, %v1259
    %v1261 = vsub.f32 1.5, %v1260
    %v1262 = vmul.f32 %v1257, %v1261
    %vm1263 = vweird.f32 %v1246
    %vm1264 = vweird.f32 %v1257
    %vm1265 = vmor %vm1263, %vm1264
    %v1266 = vsel %vm1265, %v1257, %v1262
    %v1267 = vmul.f32 %v1233, %v1256
    %v1268 = vmul.f32 %v1234, %v1266
    %v1270 = vperm.slane %v1216, 0
    %v1272 = vmul.f32 %v1267, %v1270
    %v1273 = vmul.f32 %v1268, %v1270
    %v1275 = vperm.slane %v1217, 0
    %v1277 = vadd.f32 %v1272, %v1275
    %v1278 = vadd.f32 %v1273, %v1275
    %v1279 = vld [vmem:[#allocation11] sm:$0xff]
    %v1280 = vld [vmem:[#allocation11 + $0x8] sm:$0xff]
    %v1281 = vld [vmem:[#allocation11 + $0x10] sm:$0xff]
    %v1282 = vld [vmem:[#allocation11 + $0x18] sm:$0xff]
    %v1283 = vld [vmem:[#allocation12] sm:$0x1]
    %v1285 = vperm.slane %v1283, 0
    %v1288 = vsel %vm480, %v1277, 0
    %v1291 = vsel %vm480, %v1278, 0
    %1293 = vmatpush.msra.mxu0 0.0
    %1294 = vmatpush.msra.mxu0 0.0
    %1295 = vmatpush.msra.mxu0 0.0
    %1296 = vmatpush.msra.mxu0 0.0
    %1297 = vmatpush.msra.mxu0 0.0
    %1298 = vmatpush.msra.mxu0 0.0
    %1299 = vmatpush.msra.mxu0 0.0
    %1300 = vmatpush.msra.mxu0 0.0
    %1301 = vmatpush.msra.mxu0 0.0
    %1302 = vmatpush.msra.mxu0 0.0
    %1303 = vmatpush.msra.mxu0 0.0
    %1304 = vmatpush.msra.mxu0 0.0
    %1305 = vmatpush.msra.mxu0 %v1282
    %1306 = vmatpush.msra.mxu0 %v1281
    %1307 = vmatpush.msra.mxu0 %v1280
    %1308 = vmatpush.msra.mxu0 %v1279
    %1309 = vmatmul.f32.gmra.mxu0 %v1288
    %v1310 = vpop.f32.mrf.mxu0
    %v1311 = vadd.f32 %v1285, %v1310
    %1312 = vmatmul.f32.gmra.mxu0 %v1291
    %v1313 = vpop.f32.mrf.mxu0
    %v1314 = vadd.f32 %v1285, %v1313
    %1315 = vdwg.mxu0
    %v1316 = vmax.f32 %v1311, 0.0
    %v1317 = vmax.f32 %v1314, 0.0
    %v1318 = vld [vmem:[%s13] sm:$0xff]
    %v1319 = vld [vmem:[%s13 + $0x8] sm:$0xff]
    %v1320 = vld [vmem:[%s13 + $0x10] sm:$0xff]
    %v1321 = vld [vmem:[%s13 + $0x18] sm:$0xff]
    %v1322 = vld [vmem:[%s13 + $0x20] sm:$0xff]
    %v1323 = vld [vmem:[%s13 + $0x28] sm:$0xff]
    %v1324 = vld [vmem:[%s13 + $0x30] sm:$0xff]
    %v1325 = vld [vmem:[%s13 + $0x38] sm:$0xff]
    %v1326 = vld [vmem:[#allocation14] sm:$0x1]
    %v1328 = vperm.slane %v1326, 0
    %vm1330 = vcmask 523264
    %v1332 = vsel %vm1330, %v1316, 0
    %v1335 = vsel %vm1330, %v1317, 0
    %1337 = vmatpush.msra.mxu0 0.0
    %1338 = vmatpush.msra.mxu0 0.0
    %1339 = vmatpush.msra.mxu0 0.0
    %1340 = vmatpush.msra.mxu0 0.0
    %1341 = vmatpush.msra.mxu0 0.0
    %1342 = vmatpush.msra.mxu0 0.0
    %1343 = vmatpush.msra.mxu0 0.0
    %1344 = vmatpush.msra.mxu0 0.0
    %1345 = vmatpush.msra.mxu0 %v1325
    %1346 = vmatpush.msra.mxu0 %v1324
    %1347 = vmatpush.msra.mxu0 %v1323
    %1348 = vmatpush.msra.mxu0 %v1322
    %1349 = vmatpush.msra.mxu0 %v1321
    %1350 = vmatpush.msra.mxu0 %v1320
    %1351 = vmatpush.msra.mxu0 %v1319
    %1352 = vmatpush.msra.mxu0 %v1318
    %1353 = vmatmul.f32.gmra.mxu0 %v1332
    %v1354 = vpop.f32.mrf.mxu0
    %v1355 = vadd.f32 %v1328, %v1354
    %1356 = vmatmul.f32.gmra.mxu0 %v1335
    %v1357 = vpop.f32.mrf.mxu0
    %v1358 = vadd.f32 %v1328, %v1357
    %1359 = vdwg.mxu0
    %v1360 = vadd.f32 %v1277, %v1355
    %v1361 = vadd.f32 %v1278, %v1358
    %v1362 = vld [vmem:[%s15] sm:$0x1]
    %v1363 = vld [vmem:[#allocation15] sm:$0x1]
    %v1364 = vsel %vm480, %v1360, 0.0
    %1365 = vadd.xlane.f32.xlu0 %v1364
    %v1366 = vpop.xlane.xlu0 %1365
    %v1367 = vsel %vm480, %v1361, 0.0
    %1368 = vadd.xlane.f32.xlu0 %v1367
    %v1369 = vpop.xlane.xlu0 %1368
    %v1370 = vmul.f32 %v1366, %v1230
    %v1371 = vmul.f32 %v1369, %v1230
    %v1372 = vsub.f32 %v1360, %v1370
    %v1373 = vsub.f32 %v1361, %v1371
    %v1374 = vmul.f32 %v1372, %v1372
    %v1375 = vmul.f32 %v1373, %v1373
    %v1376 = vsel %vm480, %v1374, 0.0
    %1377 = vadd.xlane.f32.xlu0 %v1376
    %v1378 = vpop.xlane.xlu0 %1377
    %v1379 = vsel %vm480, %v1375, 0.0
    %1380 = vadd.xlane.f32.xlu0 %v1379
    %v1381 = vpop.xlane.xlu0 %1380
    %v1382 = vmul.f32 %v1378, %v1230
    %v1383 = vmul.f32 %v1381, %v1230
    %v1384 = vadd.f32 %v1382, 1e-05
    %v1385 = vadd.f32 %v1383, 1e-05
    %v1386 = vrsqrt.pop %v1384
    %v1387 = vmul.f32 %v1386, %v1384
    %v1388 = vmul.f32 %v1387, %v1386
    %v1389 = vmul.f32 0.5, %v1388
    %v1390 = vsub.f32 1.5, %v1389
    %v1391 = vmul.f32 %v1386, %v1390
    %vm1392 = vweird.f32 %v1384
    %vm1393 = vweird.f32 %v1386
    %vm1394 = vmor %vm1392, %vm1393
    %v1395 = vsel %vm1394, %v1386, %v1391
    %v1396 = vrsqrt.pop %v1385
    %v1397 = vmul.f32 %v1396, %v1385
    %v1398 = vmul.f32 %v1397, %v1396
    %v1399 = vmul.f32 0.5, %v1398
    %v1400 = vsub.f32 1.5, %v1399
    %v1401 = vmul.f32 %v1396, %v1400
    %vm1402 = vweird.f32 %v1385
    %vm1403 = vweird.f32 %v1396
    %vm1404 = vmor %vm1402, %vm1403
    %v1405 = vsel %vm1404, %v1396, %v1401
    %v1406 = vmul.f32 %v1372, %v1395
    %v1407 = vmul.f32 %v1373, %v1405
    %v1409 = vperm.slane %v1362, 0
    %v1411 = vmul.f32 %v1406, %v1409
    %v1412 = vmul.f32 %v1407, %v1409
    %v1414 = vperm.slane %v1363, 0
    %v1416 = vadd.f32 %v1411, %v1414
    %v1417 = vadd.f32 %v1412, %v1414
    %s1418 = scalar_lea.vmem %s5, 32
    %v1419 = vld [vmem:[%s1418] sm:$0xff]
    %v1420 = vld [vmem:[%s1418 + $0x8] sm:$0xff]
    %v1421 = vld [vmem:[%s1418 + $0x10] sm:$0xff]
    %v1422 = vld [vmem:[%s1418 + $0x18] sm:$0xff]
    %s1423 = scalar_lea.vmem %s6, 1
    %v1424 = vld [vmem:[%s1423] sm:$0x1]
    %v1426 = vperm.slane %v1424, 0
    %v1429 = vsel %vm480, %v1416, 0
    %v1432 = vsel %vm480, %v1417, 0
    %1434 = vmatpush.msra.mxu0 0.0
    %1435 = vmatpush.msra.mxu0 0.0
    %1436 = vmatpush.msra.mxu0 0.0
    %1437 = vmatpush.msra.mxu0 0.0
    %1438 = vmatpush.msra.mxu0 0.0
    %1439 = vmatpush.msra.mxu0 0.0
    %1440 = vmatpush.msra.mxu0 0.0
    %1441 = vmatpush.msra.mxu0 0.0
    %1442 = vmatpush.msra.mxu0 0.0
    %1443 = vmatpush.msra.mxu0 0.0
    %1444 = vmatpush.msra.mxu0 0.0
    %1445 = vmatpush.msra.mxu0 0.0
    %1446 = vmatpush.msra.mxu0 %v1422
    %1447 = vmatpush.msra.mxu0 %v1421
    %1448 = vmatpush.msra.mxu0 %v1420
    %1449 = vmatpush.msra.mxu0 %v1419
    %1450 = vmatmul.f32.gmra.mxu0 %v1429
    %v1451 = vpop.f32.mrf.mxu0
    %v1452 = vadd.f32 %v1426, %v1451
    %1453 = vmatmul.f32.gmra.mxu0 %v1432
    %v1454 = vpop.f32.mrf.mxu0
    %v1455 = vadd.f32 %v1426, %v1454
    %1456 = vdwg.mxu0
    %s1457 = scalar_lea.vmem %s7, 32
    %v1458 = vld [vmem:[%s1457] sm:$0xff]
    %v1459 = vld [vmem:[%s1457 + $0x8] sm:$0xff]
    %v1460 = vld [vmem:[%s1457 + $0x10] sm:$0xff]
    %v1461 = vld [vmem:[%s1457 + $0x18] sm:$0xff]
    %1463 = vrot.lane.b32.xlu0 %v1452, 96
    %v1464 = vpop.permute.xlu0 %1463
    %v1465 = vsel %vm556, %v1452, 0
    %v1467 = vsel %vm556, %v1464, 0
    %1469 = vmatpush.xpose.msra.mxu0 0.0
    %1470 = vmatpush.xpose.msra.mxu0 0.0
    %1471 = vmatpush.xpose.msra.mxu0 0.0
    %1472 = vmatpush.xpose.msra.mxu0 0.0
    %1473 = vmatpush.xpose.msra.mxu0 0.0
    %1474 = vmatpush.xpose.msra.mxu0 0.0
    %1475 = vmatpush.xpose.msra.mxu0 0.0
    %1476 = vmatpush.xpose.msra.mxu0 0.0
    %1477 = vmatpush.xpose.msra.mxu0 0.0
    %1478 = vmatpush.xpose.msra.mxu0 0.0
    %1479 = vmatpush.xpose.msra.mxu0 0.0
    %1480 = vmatpush.xpose.msra.mxu0 0.0
    %1481 = vmatpush.xpose.msra.mxu0 0.0
    %1482 = vmatpush.xpose.msra.mxu0 0.0
    %1483 = vmatpush.xpose.msra.mxu0 0.0
    %1484 = vmatpush.xpose.msra.mxu0 %v1467
    %1485 = vmatmul.f32.gmra.mxu0 %v1465
    %v1486 = vpop.f32.mrf.mxu0
    %v1487 = vadd.f32 0.0, %v1486
    %1488 = vdwg.mxu0
    %1490 = vrot.lane.b32.xlu0 %v1455, 96
    %v1491 = vpop.permute.xlu0 %1490
    %v1492 = vsel %vm556, %v1455, 0
    %v1494 = vsel %vm556, %v1491, 0
    %1496 = vmatpush.xpose.msra.mxu0 0.0
    %1497 = vmatpush.xpose.msra.mxu0 0.0
    %1498 = vmatpush.xpose.msra.mxu0 0.0
    %1499 = vmatpush.xpose.msra.mxu0 0.0
    %1500 = vmatpush.xpose.msra.mxu0 0.0
    %1501 = vmatpush.xpose.msra.mxu0 0.0
    %1502 = vmatpush.xpose.msra.mxu0 0.0
    %1503 = vmatpush.xpose.msra.mxu0 0.0
    %1504 = vmatpush.xpose.msra.mxu0 0.0
    %1505 = vmatpush.xpose.msra.mxu0 0.0
    %1506 = vmatpush.xpose.msra.mxu0 0.0
    %1507 = vmatpush.xpose.msra.mxu0 0.0
    %1508 = vmatpush.xpose.msra.mxu0 0.0
    %1509 = vmatpush.xpose.msra.mxu0 0.0
    %1510 = vmatpush.xpose.msra.mxu0 0.0
    %1511 = vmatpush.xpose.msra.mxu0 %v1494
    %1512 = vmatmul.f32.gmra.mxu0 %v1492
    %v1513 = vpop.f32.mrf.mxu0
    %v1514 = vadd.f32 0.0, %v1513
    %1515 = vdwg.mxu0
    %v1516 = vmul.f32 %v1487, 0.35355338
    %v1517 = vmul.f32 %v1514, 0.35355338
    %v1518 = vadd.f32 %v1516, %v468
    %v1519 = vadd.f32 %v1517, %v469
    %v1520 = vsel %vm556, %v1518, -inf
    %1521 = vmax.xlane.f32.xlu0 %v1520
    %v1522 = vpop.xlane.xlu0 %1521
    %v1523 = vsel %vm556, %v1519, -inf
    %1524 = vmax.xlane.f32.xlu0 %v1523
    %v1525 = vpop.xlane.xlu0 %1524
    %v1526 = vsub.f32 %v1518, %v1522
    %v1527 = vsub.f32 %v1519, %v1525
    %v1528 = vmul.f32 %v1526, 1.442695
    %v1529 = vpow.pop %v1528
    %v1530 = vmul.f32 %v1527, 1.442695
    %v1531 = vpow.pop %v1530
    %v1532 = vsel %vm556, %v1529, 0.0
    %1533 = vadd.xlane.f32.xlu0 %v1532
    %v1534 = vpop.xlane.xlu0 %1533
    %v1535 = vsel %vm556, %v1531, 0.0
    %1536 = vadd.xlane.f32.xlu0 %v1535
    %v1537 = vpop.xlane.xlu0 %1536
    %v1538 = vrcp.pop %v1534
    %v1539 = vrcp.pop %v1537
    %v1540 = vmul.f32 %v1529, %v1538
    %v1541 = vmul.f32 %v1531, %v1539
    %1542 = vrot.lane.b32.xlu0 %v1452, 64
    %v1543 = vpop.permute.xlu0 %1542
    %v1546 = vsel %vm556, %v1540, 0
    %1548 = vmatpush.msra.mxu0 0.0
    %1549 = vmatpush.msra.mxu0 0.0
    %1550 = vmatpush.msra.mxu0 0.0
    %1551 = vmatpush.msra.mxu0 0.0
    %1552 = vmatpush.msra.mxu0 0.0
    %1553 = vmatpush.msra.mxu0 0.0
    %1554 = vmatpush.msra.mxu0 0.0
    %1555 = vmatpush.msra.mxu0 0.0
    %1556 = vmatpush.msra.mxu0 0.0
    %1557 = vmatpush.msra.mxu0 0.0
    %1558 = vmatpush.msra.mxu0 0.0
    %1559 = vmatpush.msra.mxu0 0.0
    %1560 = vmatpush.msra.mxu0 0.0
    %1561 = vmatpush.msra.mxu0 0.0
    %1562 = vmatpush.msra.mxu0 0.0
    %1563 = vmatpush.msra.mxu0 %v1543
    %1564 = vmatmul.f32.gmra.mxu0 %v1546
    %v1565 = vpop.f32.mrf.mxu0
    %v1566 = vadd.f32 0.0, %v1565
    %1567 = vdwg.mxu0
    %1568 = vrot.lane.b32.xlu0 %v1455, 64
    %v1569 = vpop.permute.xlu0 %1568
    %v1572 = vsel %vm556, %v1541, 0
    %1574 = vmatpush.msra.mxu0 0.0
    %1575 = vmatpush.msra.mxu0 0.0
    %1576 = vmatpush.msra.mxu0 0.0
    %1577 = vmatpush.msra.mxu0 0.0
    %1578 = vmatpush.msra.mxu0 0.0
    %1579 = vmatpush.msra.mxu0 0.0
    %1580 = vmatpush.msra.mxu0 0.0
    %1581 = vmatpush.msra.mxu0 0.0
    %1582 = vmatpush.msra.mxu0 0.0
    %1583 = vmatpush.msra.mxu0 0.0
    %1584 = vmatpush.msra.mxu0 0.0
    %1585 = vmatpush.msra.mxu0 0.0
    %1586 = vmatpush.msra.mxu0 0.0
    %1587 = vmatpush.msra.mxu0 0.0
    %1588 = vmatpush.msra.mxu0 0.0
    %1589 = vmatpush.msra.mxu0 %v1569
    %1590 = vmatmul.f32.gmra.mxu0 %v1572
    %v1591 = vpop.f32.mrf.mxu0
    %v1592 = vadd.f32 0.0, %v1591
    %1593 = vdwg.mxu0
    %1594 = vrot.lane.b32.xlu0 %v1452, 120
    %v1595 = vpop.permute.xlu0 %1594
    %1596 = vrot.lane.b32.xlu0 %v1452, 88
    %v1597 = vpop.permute.xlu0 %1596
    %v1598 = vsel %vm556, %v1595, 0
    %v1600 = vsel %vm556, %v1597, 0
    %1602 = vmatpush.xpose.msra.mxu0 0.0
    %1603 = vmatpush.xpose.msra.mxu0 0.0
    %1604 = vmatpush.xpose.msra.mxu0 0.0
    %1605 = vmatpush.xpose.msra.mxu0 0.0
    %1606 = vmatpush.xpose.msra.mxu0 0.0
    %1607 = vmatpush.xpose.msra.mxu0 0.0
    %1608 = vmatpush.xpose.msra.mxu0 0.0
    %1609 = vmatpush.xpose.msra.mxu0 0.0
    %1610 = vmatpush.xpose.msra.mxu0 0.0
    %1611 = vmatpush.xpose.msra.mxu0 0.0
    %1612 = vmatpush.xpose.msra.mxu0 0.0
    %1613 = vmatpush.xpose.msra.mxu0 0.0
    %1614 = vmatpush.xpose.msra.mxu0 0.0
    %1615 = vmatpush.xpose.msra.mxu0 0.0
    %1616 = vmatpush.xpose.msra.mxu0 0.0
    %1617 = vmatpush.xpose.msra.mxu0 %v1600
    %1618 = vmatmul.f32.gmra.mxu0 %v1598
    %v1619 = vpop.f32.mrf.mxu0
    %v1620 = vadd.f32 0.0, %v1619
    %1621 = vdwg.mxu0
    %1622 = vrot.lane.b32.xlu0 %v1455, 120
    %v1623 = vpop.permute.xlu0 %1622
    %1624 = vrot.lane.b32.xlu0 %v1455, 88
    %v1625 = vpop.permute.xlu0 %1624
    %v1626 = vsel %vm556, %v1623, 0
    %v1628 = vsel %vm556, %v1625, 0
    %1630 = vmatpush.xpose.msra.mxu0 0.0
    %1631 = vmatpush.xpose.msra.mxu0 0.0
    %1632 = vmatpush.xpose.msra.mxu0 0.0
    %1633 = vmatpush.xpose.msra.mxu0 0.0
    %1634 = vmatpush.xpose.msra.mxu0 0.0
    %1635 = vmatpush.xpose.msra.mxu0 0.0
    %1636 = vmatpush.xpose.msra.mxu0 0.0
    %1637 = vmatpush.xpose.msra.mxu0 0.0
    %1638 = vmatpush.xpose.msra.mxu0 0.0
    %1639 = vmatpush.xpose.msra.mxu0 0.0
    %1640 = vmatpush.xpose.msra.mxu0 0.0
    %1641 = vmatpush.xpose.msra.mxu0 0.0
    %1642 = vmatpush.xpose.msra.mxu0 0.0
    %1643 = vmatpush.xpose.msra.mxu0 0.0
    %1644 = vmatpush.xpose.msra.mxu0 0.0
    %1645 = vmatpush.xpose.msra.mxu0 %v1628
    %1646 = vmatmul.f32.gmra.mxu0 %v1626
    %v1647 = vpop.f32.mrf.mxu0
    %v1648 = vadd.f32 0.0, %v1647
    %1649 = vdwg.mxu0
    %v1650 = vmul.f32 %v1620, 0.35355338
    %v1651 = vmul.f32 %v1648, 0.35355338
    %v1652 = vadd.f32 %v1650, %v468
    %v1653 = vadd.f32 %v1651, %v469
    %v1654 = vsel %vm556, %v1652, -inf
    %1655 = vmax.xlane.f32.xlu0 %v1654
    %v1656 = vpop.xlane.xlu0 %1655
    %v1657 = vsel %vm556, %v1653, -inf
    %1658 = vmax.xlane.f32.xlu0 %v1657
    %v1659 = vpop.xlane.xlu0 %1658
    %v1660 = vsub.f32 %v1652, %v1656
    %v1661 = vsub.f32 %v1653, %v1659
    %v1662 = vmul.f32 %v1660, 1.442695
    %v1663 = vpow.pop %v1662
    %v1664 = vmul.f32 %v1661, 1.442695
    %v1665 = vpow.pop %v1664
    %v1666 = vsel %vm556, %v1663, 0.0
    %1667 = vadd.xlane.f32.xlu0 %v1666
    %v1668 = vpop.xlane.xlu0 %1667
    %v1669 = vsel %vm556, %v1665, 0.0
    %1670 = vadd.xlane.f32.xlu0 %v1669
    %v1671 = vpop.xlane.xlu0 %1670
    %v1672 = vrcp.pop %v1668
    %v1673 = vrcp.pop %v1671
    %v1674 = vmul.f32 %v1663, %v1672
    %v1675 = vmul.f32 %v1665, %v1673
    %1676 = vrot.lane.b32.xlu0 %v1452, 56
    %v1677 = vpop.permute.xlu0 %1676
    %v1680 = vsel %vm556, %v1674, 0
    %1682 = vmatpush.msra.mxu0 0.0
    %1683 = vmatpush.msra.mxu0 0.0
    %1684 = vmatpush.msra.mxu0 0.0
    %1685 = vmatpush.msra.mxu0 0.0
    %1686 = vmatpush.msra.mxu0 0.0
    %1687 = vmatpush.msra.mxu0 0.0
    %1688 = vmatpush.msra.mxu0 0.0
    %1689 = vmatpush.msra.mxu0 0.0
    %1690 = vmatpush.msra.mxu0 0.0
    %1691 = vmatpush.msra.mxu0 0.0
    %1692 = vmatpush.msra.mxu0 0.0
    %1693 = vmatpush.msra.mxu0 0.0
    %1694 = vmatpush.msra.mxu0 0.0
    %1695 = vmatpush.msra.mxu0 0.0
    %1696 = vmatpush.msra.mxu0 0.0
    %1697 = vmatpush.msra.mxu0 %v1677
    %1698 = vmatmul.f32.gmra.mxu0 %v1680
    %v1699 = vpop.f32.mrf.mxu0
    %v1700 = vadd.f32 0.0, %v1699
    %1701 = vdwg.mxu0
    %1702 = vrot.lane.b32.xlu0 %v1455, 56
    %v1703 = vpop.permute.xlu0 %1702
    %v1706 = vsel %vm556, %v1675, 0
    %1708 = vmatpush.msra.mxu0 0.0
    %1709 = vmatpush.msra.mxu0 0.0
    %1710 = vmatpush.msra.mxu0 0.0
    %1711 = vmatpush.msra.mxu0 0.0
    %1712 = vmatpush.msra.mxu0 0.0
    %1713 = vmatpush.msra.mxu0 0.0
    %1714 = vmatpush.msra.mxu0 0.0
    %1715 = vmatpush.msra.mxu0 0.0
    %1716 = vmatpush.msra.mxu0 0.0
    %1717 = vmatpush.msra.mxu0 0.0
    %1718 = vmatpush.msra.mxu0 0.0
    %1719 = vmatpush.msra.mxu0 0.0
    %1720 = vmatpush.msra.mxu0 0.0
    %1721 = vmatpush.msra.mxu0 0.0
    %1722 = vmatpush.msra.mxu0 0.0
    %1723 = vmatpush.msra.mxu0 %v1703
    %1724 = vmatmul.f32.gmra.mxu0 %v1706
    %v1725 = vpop.f32.mrf.mxu0
    %v1726 = vadd.f32 0.0, %v1725
    %1727 = vdwg.mxu0
    %v1729 = vsel %vm556, %v1700, 0
    %v1732 = vsel %vm556, %v1726, 0
    %1734 = vmatpush.msra.mxu0 0.0
    %1735 = vmatpush.msra.mxu0 0.0
    %1736 = vmatpush.msra.mxu0 0.0
    %1737 = vmatpush.msra.mxu0 0.0
    %1738 = vmatpush.msra.mxu0 0.0
    %1739 = vmatpush.msra.mxu0 0.0
    %1740 = vmatpush.msra.mxu0 0.0
    %1741 = vmatpush.msra.mxu0 0.0
    %1742 = vmatpush.msra.mxu0 0.0
    %1743 = vmatpush.msra.mxu0 0.0
    %1744 = vmatpush.msra.mxu0 0.0
    %1745 = vmatpush.msra.mxu0 0.0
    %1746 = vmatpush.msra.mxu0 0.0
    %1747 = vmatpush.msra.mxu0 0.0
    %1748 = vmatpush.msra.mxu0 0.0
    %1749 = vmatpush.msra.mxu0 %v1459
    %1750 = vmatmul.f32.gmra.mxu0 %v1729
    %v1751 = vpop.f32.mrf.mxu0
    %v1752 = vadd.f32 0.0, %v1751
    %1753 = vmatmul.f32.gmra.mxu0 %v1732
    %v1754 = vpop.f32.mrf.mxu0
    %v1755 = vadd.f32 0.0, %v1754
    %1756 = vdwg.mxu0
    %v1758 = vsel %vm556, %v1566, 0
    %v1761 = vsel %vm556, %v1592, 0
    %1763 = vmatpush.msra.mxu0 0.0
    %1764 = vmatpush.msra.mxu0 0.0
    %1765 = vmatpush.msra.mxu0 0.0
    %1766 = vmatpush.msra.mxu0 0.0
    %1767 = vmatpush.msra.mxu0 0.0
    %1768 = vmatpush.msra.mxu0 0.0
    %1769 = vmatpush.msra.mxu0 0.0
    %1770 = vmatpush.msra.mxu0 0.0
    %1771 = vmatpush.msra.mxu0 0.0
    %1772 = vmatpush.msra.mxu0 0.0
    %1773 = vmatpush.msra.mxu0 0.0
    %1774 = vmatpush.msra.mxu0 0.0
    %1775 = vmatpush.msra.mxu0 0.0
    %1776 = vmatpush.msra.mxu0 0.0
    %1777 = vmatpush.msra.mxu0 0.0
    %1778 = vmatpush.msra.mxu0 %v1458
    %1779 = vmatmul.f32.gmra.mxu0 %v1758
    %v1780 = vpop.f32.mrf.mxu0
    %v1781 = vadd.f32 %v1752, %v1780
    %1782 = vmatmul.f32.gmra.mxu0 %v1761
    %v1783 = vpop.f32.mrf.mxu0
    %v1784 = vadd.f32 %v1755, %v1783
    %1785 = vdwg.mxu0
    %1786 = vrot.lane.b32.xlu0 %v1452, 112
    %v1787 = vpop.permute.xlu0 %1786
    %1788 = vrot.lane.b32.xlu0 %v1452, 80
    %v1789 = vpop.permute.xlu0 %1788
    %v1790 = vsel %vm556, %v1787, 0
    %v1792 = vsel %vm556, %v1789, 0
    %1794 = vmatpush.xpose.msra.mxu0 0.0
    %1795 = vmatpush.xpose.msra.mxu0 0.0
    %1796 = vmatpush.xpose.msra.mxu0 0.0
    %1797 = vmatpush.xpose.msra.mxu0 0.0
    %1798 = vmatpush.xpose.msra.mxu0 0.0
    %1799 = vmatpush.xpose.msra.mxu0 0.0
    %1800 = vmatpush.xpose.msra.mxu0 0.0
    %1801 = vmatpush.xpose.msra.mxu0 0.0
    %1802 = vmatpush.xpose.msra.mxu0 0.0
    %1803 = vmatpush.xpose.msra.mxu0 0.0
    %1804 = vmatpush.xpose.msra.mxu0 0.0
    %1805 = vmatpush.xpose.msra.mxu0 0.0
    %1806 = vmatpush.xpose.msra.mxu0 0.0
    %1807 = vmatpush.xpose.msra.mxu0 0.0
    %1808 = vmatpush.xpose.msra.mxu0 0.0
    %1809 = vmatpush.xpose.msra.mxu0 %v1792
    %1810 = vmatmul.f32.gmra.mxu0 %v1790
    %v1811 = vpop.f32.mrf.mxu0
    %v1812 = vadd.f32 0.0, %v1811
    %1813 = vdwg.mxu0
    %1814 = vrot.lane.b32.xlu0 %v1455, 112
    %v1815 = vpop.permute.xlu0 %1814
    %1816 = vrot.lane.b32.xlu0 %v1455, 80
    %v1817 = vpop.permute.xlu0 %1816
    %v1818 = vsel %vm556, %v1815, 0
    %v1820 = vsel %vm556, %v1817, 0
    %1822 = vmatpush.xpose.msra.mxu0 0.0
    %1823 = vmatpush.xpose.msra.mxu0 0.0
    %1824 = vmatpush.xpose.msra.mxu0 0.0
    %1825 = vmatpush.xpose.msra.mxu0 0.0
    %1826 = vmatpush.xpose.msra.mxu0 0.0
    %1827 = vmatpush.xpose.msra.mxu0 0.0
    %1828 = vmatpush.xpose.msra.mxu0 0.0
    %1829 = vmatpush.xpose.msra.mxu0 0.0
    %1830 = vmatpush.xpose.msra.mxu0 0.0
    %1831 = vmatpush.xpose.msra.mxu0 0.0
    %1832 = vmatpush.xpose.msra.mxu0 0.0
    %1833 = vmatpush.xpose.msra.mxu0 0.0
    %1834 = vmatpush.xpose.msra.mxu0 0.0
    %1835 = vmatpush.xpose.msra.mxu0 0.0
    %1836 = vmatpush.xpose.msra.mxu0 0.0
    %1837 = vmatpush.xpose.msra.mxu0 %v1820
    %1838 = vmatmul.f32.gmra.mxu0 %v1818
    %v1839 = vpop.f32.mrf.mxu0
    %v1840 = vadd.f32 0.0, %v1839
    %1841 = vdwg.mxu0
    %v1842 = vmul.f32 %v1812, 0.35355338
    %v1843 = vmul.f32 %v1840, 0.35355338
    %v1844 = vadd.f32 %v1842, %v468
    %v1845 = vadd.f32 %v1843, %v469
    %v1846 = vsel %vm556, %v1844, -inf
    %1847 = vmax.xlane.f32.xlu0 %v1846
    %v1848 = vpop.xlane.xlu0 %1847
    %v1849 = vsel %vm556, %v1845, -inf
    %1850 = vmax.xlane.f32.xlu0 %v1849
    %v1851 = vpop.xlane.xlu0 %1850
    %v1852 = vsub.f32 %v1844, %v1848
    %v1853 = vsub.f32 %v1845, %v1851
    %v1854 = vmul.f32 %v1852, 1.442695
    %v1855 = vpow.pop %v1854
    %v1856 = vmul.f32 %v1853, 1.442695
    %v1857 = vpow.pop %v1856
    %v1858 = vsel %vm556, %v1855, 0.0
    %1859 = vadd.xlane.f32.xlu0 %v1858
    %v1860 = vpop.xlane.xlu0 %1859
    %v1861 = vsel %vm556, %v1857, 0.0
    %1862 = vadd.xlane.f32.xlu0 %v1861
    %v1863 = vpop.xlane.xlu0 %1862
    %v1864 = vrcp.pop %v1860
    %v1865 = vrcp.pop %v1863
    %v1866 = vmul.f32 %v1855, %v1864
    %v1867 = vmul.f32 %v1857, %v1865
    %1868 = vrot.lane.b32.xlu0 %v1452, 48
    %v1869 = vpop.permute.xlu0 %1868
    %v1872 = vsel %vm556, %v1866, 0
    %1874 = vmatpush.msra.mxu0 0.0
    %1875 = vmatpush.msra.mxu0 0.0
    %1876 = vmatpush.msra.mxu0 0.0
    %1877 = vmatpush.msra.mxu0 0.0
    %1878 = vmatpush.msra.mxu0 0.0
    %1879 = vmatpush.msra.mxu0 0.0
    %1880 = vmatpush.msra.mxu0 0.0
    %1881 = vmatpush.msra.mxu0 0.0
    %1882 = vmatpush.msra.mxu0 0.0
    %1883 = vmatpush.msra.mxu0 0.0
    %1884 = vmatpush.msra.mxu0 0.0
    %1885 = vmatpush.msra.mxu0 0.0
    %1886 = vmatpush.msra.mxu0 0.0
    %1887 = vmatpush.msra.mxu0 0.0
    %1888 = vmatpush.msra.mxu0 0.0
    %1889 = vmatpush.msra.mxu0 %v1869
    %1890 = vmatmul.f32.gmra.mxu0 %v1872
    %v1891 = vpop.f32.mrf.mxu0
    %v1892 = vadd.f32 0.0, %v1891
    %1893 = vdwg.mxu0
    %1894 = vrot.lane.b32.xlu0 %v1455, 48
    %v1895 = vpop.permute.xlu0 %1894
    %v1898 = vsel %vm556, %v1867, 0
    %1900 = vmatpush.msra.mxu0 0.0
    %1901 = vmatpush.msra.mxu0 0.0
    %1902 = vmatpush.msra.mxu0 0.0
    %1903 = vmatpush.msra.mxu0 0.0
    %1904 = vmatpush.msra.mxu0 0.0
    %1905 = vmatpush.msra.mxu0 0.0
    %1906 = vmatpush.msra.mxu0 0.0
    %1907 = vmatpush.msra.mxu0 0.0
    %1908 = vmatpush.msra.mxu0 0.0
    %1909 = vmatpush.msra.mxu0 0.0
    %1910 = vmatpush.msra.mxu0 0.0
    %1911 = vmatpush.msra.mxu0 0.0
    %1912 = vmatpush.msra.mxu0 0.0
    %1913 = vmatpush.msra.mxu0 0.0
    %1914 = vmatpush.msra.mxu0 0.0
    %1915 = vmatpush.msra.mxu0 %v1895
    %1916 = vmatmul.f32.gmra.mxu0 %v1898
    %v1917 = vpop.f32.mrf.mxu0
    %v1918 = vadd.f32 0.0, %v1917
    %1919 = vdwg.mxu0
    %v1921 = vsel %vm556, %v1892, 0
    %v1924 = vsel %vm556, %v1918, 0
    %1926 = vmatpush.msra.mxu0 0.0
    %1927 = vmatpush.msra.mxu0 0.0
    %1928 = vmatpush.msra.mxu0 0.0
    %1929 = vmatpush.msra.mxu0 0.0
    %1930 = vmatpush.msra.mxu0 0.0
    %1931 = vmatpush.msra.mxu0 0.0
    %1932 = vmatpush.msra.mxu0 0.0
    %1933 = vmatpush.msra.mxu0 0.0
    %1934 = vmatpush.msra.mxu0 0.0
    %1935 = vmatpush.msra.mxu0 0.0
    %1936 = vmatpush.msra.mxu0 0.0
    %1937 = vmatpush.msra.mxu0 0.0
    %1938 = vmatpush.msra.mxu0 0.0
    %1939 = vmatpush.msra.mxu0 0.0
    %1940 = vmatpush.msra.mxu0 0.0
    %1941 = vmatpush.msra.mxu0 %v1460
    %1942 = vmatmul.f32.gmra.mxu0 %v1921
    %v1943 = vpop.f32.mrf.mxu0
    %v1944 = vadd.f32 0.0, %v1943
    %1945 = vmatmul.f32.gmra.mxu0 %v1924
    %v1946 = vpop.f32.mrf.mxu0
    %v1947 = vadd.f32 0.0, %v1946
    %1948 = vdwg.mxu0
    %v1949 = vadd.f32 %v1781, %v1944
    %v1950 = vadd.f32 %v1784, %v1947
    %1951 = vrot.lane.b32.xlu0 %v1452, 104
    %v1952 = vpop.permute.xlu0 %1951
    %1953 = vrot.lane.b32.xlu0 %v1452, 72
    %v1954 = vpop.permute.xlu0 %1953
    %v1955 = vsel %vm556, %v1952, 0
    %v1957 = vsel %vm556, %v1954, 0
    %1959 = vmatpush.xpose.msra.mxu0 0.0
    %1960 = vmatpush.xpose.msra.mxu0 0.0
    %1961 = vmatpush.xpose.msra.mxu0 0.0
    %1962 = vmatpush.xpose.msra.mxu0 0.0
    %1963 = vmatpush.xpose.msra.mxu0 0.0
    %1964 = vmatpush.xpose.msra.mxu0 0.0
    %1965 = vmatpush.xpose.msra.mxu0 0.0
    %1966 = vmatpush.xpose.msra.mxu0 0.0
    %1967 = vmatpush.xpose.msra.mxu0 0.0
    %1968 = vmatpush.xpose.msra.mxu0 0.0
    %1969 = vmatpush.xpose.msra.mxu0 0.0
    %1970 = vmatpush.xpose.msra.mxu0 0.0
    %1971 = vmatpush.xpose.msra.mxu0 0.0
    %1972 = vmatpush.xpose.msra.mxu0 0.0
    %1973 = vmatpush.xpose.msra.mxu0 0.0
    %1974 = vmatpush.xpose.msra.mxu0 %v1957
    %1975 = vmatmul.f32.gmra.mxu0 %v1955
    %v1976 = vpop.f32.mrf.mxu0
    %v1977 = vadd.f32 0.0, %v1976
    %1978 = vdwg.mxu0
    %1979 = vrot.lane.b32.xlu0 %v1455, 104
    %v1980 = vpop.permute.xlu0 %1979
    %1981 = vrot.lane.b32.xlu0 %v1455, 72
    %v1982 = vpop.permute.xlu0 %1981
    %v1983 = vsel %vm556, %v1980, 0
    %v1985 = vsel %vm556, %v1982, 0
    %1987 = vmatpush.xpose.msra.mxu0 0.0
    %1988 = vmatpush.xpose.msra.mxu0 0.0
    %1989 = vmatpush.xpose.msra.mxu0 0.0
    %1990 = vmatpush.xpose.msra.mxu0 0.0
    %1991 = vmatpush.xpose.msra.mxu0 0.0
    %1992 = vmatpush.xpose.msra.mxu0 0.0
    %1993 = vmatpush.xpose.msra.mxu0 0.0
    %1994 = vmatpush.xpose.msra.mxu0 0.0
    %1995 = vmatpush.xpose.msra.mxu0 0.0
    %1996 = vmatpush.xpose.msra.mxu0 0.0
    %1997 = vmatpush.xpose.msra.mxu0 0.0
    %1998 = vmatpush.xpose.msra.mxu0 0.0
    %1999 = vmatpush.xpose.msra.mxu0 0.0
    %2000 = vmatpush.xpose.msra.mxu0 0.0
    %2001 = vmatpush.xpose.msra.mxu0 0.0
    %2002 = vmatpush.xpose.msra.mxu0 %v1985
    %2003 = vmatmul.f32.gmra.mxu0 %v1983
    %v2004 = vpop.f32.mrf.mxu0
    %v2005 = vadd.f32 0.0, %v2004
    %2006 = vdwg.mxu0
    %v2007 = vmul.f32 %v1977, 0.35355338
    %v2008 = vmul.f32 %v2005, 0.35355338
    %v2009 = vadd.f32 %v2007, %v468
    %v2010 = vadd.f32 %v2008, %v469
    %v2011 = vsel %vm556, %v2009, -inf
    %2012 = vmax.xlane.f32.xlu0 %v2011
    %v2013 = vpop.xlane.xlu0 %2012
    %v2014 = vsel %vm556, %v2010, -inf
    %2015 = vmax.xlane.f32.xlu0 %v2014
    %v2016 = vpop.xlane.xlu0 %2015
    %v2017 = vsub.f32 %v2009, %v2013
    %v2018 = vsub.f32 %v2010, %v2016
    %v2019 = vmul.f32 %v2017, 1.442695
    %v2020 = vpow.pop %v2019
    %v2021 = vmul.f32 %v2018, 1.442695
    %v2022 = vpow.pop %v2021
    %v2023 = vsel %vm556, %v2020, 0.0
    %2024 = vadd.xlane.f32.xlu0 %v2023
    %v2025 = vpop.xlane.xlu0 %2024
    %v2026 = vsel %vm556, %v2022, 0.0
    %2027 = vadd.xlane.f32.xlu0 %v2026
    %v2028 = vpop.xlane.xlu0 %2027
    %v2029 = vrcp.pop %v2025
    %v2030 = vrcp.pop %v2028
    %v2031 = vmul.f32 %v2020, %v2029
    %v2032 = vmul.f32 %v2022, %v2030
    %2033 = vrot.lane.b32.xlu0 %v1452, 40
    %v2034 = vpop.permute.xlu0 %2033
    %v2037 = vsel %vm556, %v2031, 0
    %2039 = vmatpush.msra.mxu0 0.0
    %2040 = vmatpush.msra.mxu0 0.0
    %2041 = vmatpush.msra.mxu0 0.0
    %2042 = vmatpush.msra.mxu0 0.0
    %2043 = vmatpush.msra.mxu0 0.0
    %2044 = vmatpush.msra.mxu0 0.0
    %2045 = vmatpush.msra.mxu0 0.0
    %2046 = vmatpush.msra.mxu0 0.0
    %2047 = vmatpush.msra.mxu0 0.0
    %2048 = vmatpush.msra.mxu0 0.0
    %2049 = vmatpush.msra.mxu0 0.0
    %2050 = vmatpush.msra.mxu0 0.0
    %2051 = vmatpush.msra.mxu0 0.0
    %2052 = vmatpush.msra.mxu0 0.0
    %2053 = vmatpush.msra.mxu0 0.0
    %2054 = vmatpush.msra.mxu0 %v2034
    %2055 = vmatmul.f32.gmra.mxu0 %v2037
    %v2056 = vpop.f32.mrf.mxu0
    %v2057 = vadd.f32 0.0, %v2056
    %2058 = vdwg.mxu0
    %2059 = vrot.lane.b32.xlu0 %v1455, 40
    %v2060 = vpop.permute.xlu0 %2059
    %v2063 = vsel %vm556, %v2032, 0
    %2065 = vmatpush.msra.mxu0 0.0
    %2066 = vmatpush.msra.mxu0 0.0
    %2067 = vmatpush.msra.mxu0 0.0
    %2068 = vmatpush.msra.mxu0 0.0
    %2069 = vmatpush.msra.mxu0 0.0
    %2070 = vmatpush.msra.mxu0 0.0
    %2071 = vmatpush.msra.mxu0 0.0
    %2072 = vmatpush.msra.mxu0 0.0
    %2073 = vmatpush.msra.mxu0 0.0
    %2074 = vmatpush.msra.mxu0 0.0
    %2075 = vmatpush.msra.mxu0 0.0
    %2076 = vmatpush.msra.mxu0 0.0
    %2077 = vmatpush.msra.mxu0 0.0
    %2078 = vmatpush.msra.mxu0 0.0
    %2079 = vmatpush.msra.mxu0 0.0
    %2080 = vmatpush.msra.mxu0 %v2060
    %2081 = vmatmul.f32.gmra.mxu0 %v2063
    %v2082 = vpop.f32.mrf.mxu0
    %v2083 = vadd.f32 0.0, %v2082
    %2084 = vdwg.mxu0
    %v2086 = vsel %vm556, %v2057, 0
    %v2089 = vsel %vm556, %v2083, 0
    %2091 = vmatpush.msra.mxu0 0.0
    %2092 = vmatpush.msra.mxu0 0.0
    %2093 = vmatpush.msra.mxu0 0.0
    %2094 = vmatpush.msra.mxu0 0.0
    %2095 = vmatpush.msra.mxu0 0.0
    %2096 = vmatpush.msra.mxu0 0.0
    %2097 = vmatpush.msra.mxu0 0.0
    %2098 = vmatpush.msra.mxu0 0.0
    %2099 = vmatpush.msra.mxu0 0.0
    %2100 = vmatpush.msra.mxu0 0.0
    %2101 = vmatpush.msra.mxu0 0.0
    %2102 = vmatpush.msra.mxu0 0.0
    %2103 = vmatpush.msra.mxu0 0.0
    %2104 = vmatpush.msra.mxu0 0.0
    %2105 = vmatpush.msra.mxu0 0.0
    %2106 = vmatpush.msra.mxu0 %v1461
    %2107 = vmatmul.f32.gmra.mxu0 %v2086
    %v2108 = vpop.f32.mrf.mxu0
    %v2109 = vadd.f32 0.0, %v2108
    %2110 = vmatmul.f32.gmra.mxu0 %v2089
    %v2111 = vpop.f32.mrf.mxu0
    %v2112 = vadd.f32 0.0, %v2111
    %2113 = vdwg.mxu0
    %v2114 = vadd.f32 %v1949, %v2109
    %v2115 = vadd.f32 %v1950, %v2112
    %s2116 = scalar_lea.vmem %s8, 1
    %v2117 = vld [vmem:[%s2116] sm:$0x1]
    %v2119 = vperm.slane %v2117, 0
    %v2121 = vadd.f32 %v2114, %v2119
    %v2122 = vadd.f32 %v2115, %v2119
    %v2123 = vadd.f32 %v1416, %v2121
    %v2124 = vadd.f32 %v1417, %v2122
    %s2125 = scalar_lea.vmem %s9, 1
    %v2126 = vld [vmem:[%s2125] sm:$0x1]
    %s2127 = scalar_lea.vmem [#allocation9], 1
    %v2128 = vld [vmem:[%s2127] sm:$0x1]
    %v2129 = vsel %vm480, %v2123, 0.0
    %2130 = vadd.xlane.f32.xlu0 %v2129
    %v2131 = vpop.xlane.xlu0 %2130
    %v2132 = vsel %vm480, %v2124, 0.0
    %2133 = vadd.xlane.f32.xlu0 %v2132
    %v2134 = vpop.xlane.xlu0 %2133
    %v2135 = vmul.f32 %v2131, %v1230
    %v2136 = vmul.f32 %v2134, %v1230
    %v2137 = vsub.f32 %v2123, %v2135
    %v2138 = vsub.f32 %v2124, %v2136
    %v2139 = vmul.f32 %v2137, %v2137
    %v2140 = vmul.f32 %v2138, %v2138
    %v2141 = vsel %vm480, %v2139, 0.0
    %2142 = vadd.xlane.f32.xlu0 %v2141
    %v2143 = vpop.xlane.xlu0 %2142
    %v2144 = vsel %vm480, %v2140, 0.0
    %2145 = vadd.xlane.f32.xlu0 %v2144
    %v2146 = vpop.xlane.xlu0 %2145
    %v2147 = vmul.f32 %v2143, %v1230
    %v2148 = vmul.f32 %v2146, %v1230
    %v2149 = vadd.f32 %v2147, 1e-05
    %v2150 = vadd.f32 %v2148, 1e-05
    %v2151 = vrsqrt.pop %v2149
    %v2152 = vmul.f32 %v2151, %v2149
    %v2153 = vmul.f32 %v2152, %v2151
    %v2154 = vmul.f32 0.5, %v2153
    %v2155 = vsub.f32 1.5, %v2154
    %v2156 = vmul.f32 %v2151, %v2155
    %vm2157 = vweird.f32 %v2149
    %vm2158 = vweird.f32 %v2151
    %vm2159 = vmor %vm2157, %vm2158
    %v2160 = vsel %vm2159, %v2151, %v2156
    %v2161 = vrsqrt.pop %v2150
    %v2162 = vmul.f32 %v2161, %v2150
    %v2163 = vmul.f32 %v2162, %v2161
    %v2164 = vmul.f32 0.5, %v2163
    %v2165 = vsub.f32 1.5, %v2164
    %v2166 = vmul.f32 %v2161, %v2165
    %vm2167 = vweird.f32 %v2150
    %vm2168 = vweird.f32 %v2161
    %vm2169 = vmor %vm2167, %vm2168
    %v2170 = vsel %vm2169, %v2161, %v2166
    %v2171 = vmul.f32 %v2137, %v2160
    %v2172 = vmul.f32 %v2138, %v2170
    %v2174 = vperm.slane %v2126, 0
    %v2176 = vmul.f32 %v2171, %v2174
    %v2177 = vmul.f32 %v2172, %v2174
    %v2179 = vperm.slane %v2128, 0
    %v2181 = vadd.f32 %v2176, %v2179
    %v2182 = vadd.f32 %v2177, %v2179
    %s2183 = scalar_lea.vmem [#allocation11], 32
    %v2184 = vld [vmem:[%s2183] sm:$0xff]
    %v2185 = vld [vmem:[%s2183 + $0x8] sm:$0xff]
    %v2186 = vld [vmem:[%s2183 + $0x10] sm:$0xff]
    %v2187 = vld [vmem:[%s2183 + $0x18] sm:$0xff]
    %s2188 = scalar_lea.vmem [#allocation12], 1
    %v2189 = vld [vmem:[%s2188] sm:$0x1]
    %v2191 = vperm.slane %v2189, 0
    %v2194 = vsel %vm480, %v2181, 0
    %v2197 = vsel %vm480, %v2182, 0
    %2199 = vmatpush.msra.mxu0 0.0
    %2200 = vmatpush.msra.mxu0 0.0
    %2201 = vmatpush.msra.mxu0 0.0
    %2202 = vmatpush.msra.mxu0 0.0
    %2203 = vmatpush.msra.mxu0 0.0
    %2204 = vmatpush.msra.mxu0 0.0
    %2205 = vmatpush.msra.mxu0 0.0
    %2206 = vmatpush.msra.mxu0 0.0
    %2207 = vmatpush.msra.mxu0 0.0
    %2208 = vmatpush.msra.mxu0 0.0
    %2209 = vmatpush.msra.mxu0 0.0
    %2210 = vmatpush.msra.mxu0 0.0
    %2211 = vmatpush.msra.mxu0 %v2187
    %2212 = vmatpush.msra.mxu0 %v2186
    %2213 = vmatpush.msra.mxu0 %v2185
    %2214 = vmatpush.msra.mxu0 %v2184
    %2215 = vmatmul.f32.gmra.mxu0 %v2194
    %v2216 = vpop.f32.mrf.mxu0
    %v2217 = vadd.f32 %v2191, %v2216
    %2218 = vmatmul.f32.gmra.mxu0 %v2197
    %v2219 = vpop.f32.mrf.mxu0
    %v2220 = vadd.f32 %v2191, %v2219
    %2221 = vdwg.mxu0
    %v2222 = vmax.f32 %v2217, 0.0
    %v2223 = vmax.f32 %v2220, 0.0
    %s2224 = scalar_lea.vmem %s13, 64
    %v2225 = vld [vmem:[%s2224] sm:$0xff]
    %v2226 = vld [vmem:[%s2224 + $0x8] sm:$0xff]
    %v2227 = vld [vmem:[%s2224 + $0x10] sm:$0xff]
    %v2228 = vld [vmem:[%s2224 + $0x18] sm:$0xff]
    %v2229 = vld [vmem:[%s2224 + $0x20] sm:$0xff]
    %v2230 = vld [vmem:[%s2224 + $0x28] sm:$0xff]
    %v2231 = vld [vmem:[%s2224 + $0x30] sm:$0xff]
    %v2232 = vld [vmem:[%s2224 + $0x38] sm:$0xff]
    %s2233 = scalar_lea.vmem [#allocation14], 1
    %v2234 = vld [vmem:[%s2233] sm:$0x1]
    %v2236 = vperm.slane %v2234, 0
    %v2239 = vsel %vm1330, %v2222, 0
    %v2242 = vsel %vm1330, %v2223, 0
    %2244 = vmatpush.msra.mxu0 0.0
    %2245 = vmatpush.msra.mxu0 0.0
    %2246 = vmatpush.msra.mxu0 0.0
    %2247 = vmatpush.msra.mxu0 0.0
    %2248 = vmatpush.msra.mxu0 0.0
    %2249 = vmatpush.msra.mxu0 0.0
    %2250 = vmatpush.msra.mxu0 0.0
    %2251 = vmatpush.msra.mxu0 0.0
    %2252 = vmatpush.msra.mxu0 %v2232
    %2253 = vmatpush.msra.mxu0 %v2231
    %2254 = vmatpush.msra.mxu0 %v2230
    %2255 = vmatpush.msra.mxu0 %v2229
    %2256 = vmatpush.msra.mxu0 %v2228
    %2257 = vmatpush.msra.mxu0 %v2227
    %2258 = vmatpush.msra.mxu0 %v2226
    %2259 = vmatpush.msra.mxu0 %v2225
    %2260 = vmatmul.f32.gmra.mxu0 %v2239
    %v2261 = vpop.f32.mrf.mxu0
    %v2262 = vadd.f32 %v2236, %v2261
    %2263 = vmatmul.f32.gmra.mxu0 %v2242
    %v2264 = vpop.f32.mrf.mxu0
    %v2265 = vadd.f32 %v2236, %v2264
    %2266 = vdwg.mxu0
    %v2267 = vadd.f32 %v2181, %v2262
    %v2268 = vadd.f32 %v2182, %v2265
    %s2269 = scalar_lea.vmem %s15, 1
    %v2270 = vld [vmem:[%s2269] sm:$0x1]
    %s2271 = scalar_lea.vmem [#allocation15], 1
    %v2272 = vld [vmem:[%s2271] sm:$0x1]
    %v2273 = vsel %vm480, %v2267, 0.0
    %2274 = vadd.xlane.f32.xlu0 %v2273
    %v2275 = vpop.xlane.xlu0 %2274
    %v2276 = vsel %vm480, %v2268, 0.0
    %2277 = vadd.xlane.f32.xlu0 %v2276
    %v2278 = vpop.xlane.xlu0 %2277
    %v2279 = vmul.f32 %v2275, %v1230
    %v2280 = vmul.f32 %v2278, %v1230
    %v2281 = vsub.f32 %v2267, %v2279
    %v2282 = vsub.f32 %v2268, %v2280
    %v2283 = vmul.f32 %v2281, %v2281
    %v2284 = vmul.f32 %v2282, %v2282
    %v2285 = vsel %vm480, %v2283, 0.0
    %2286 = vadd.xlane.f32.xlu0 %v2285
    %v2287 = vpop.xlane.xlu0 %2286
    %v2288 = vsel %vm480, %v2284, 0.0
    %2289 = vadd.xlane.f32.xlu0 %v2288
    %v2290 = vpop.xlane.xlu0 %2289
    %v2291 = vmul.f32 %v2287, %v1230
    %v2292 = vmul.f32 %v2290, %v1230
    %v2293 = vadd.f32 %v2291, 1e-05
    %v2294 = vadd.f32 %v2292, 1e-05
    %v2295 = vrsqrt.pop %v2293
    %v2296 = vmul.f32 %v2295, %v2293
    %v2297 = vmul.f32 %v2296, %v2295
    %v2298 = vmul.f32 0.5, %v2297
    %v2299 = vsub.f32 1.5, %v2298
    %v2300 = vmul.f32 %v2295, %v2299
    %vm2301 = vweird.f32 %v2293
    %vm2302 = vweird.f32 %v2295
    %vm2303 = vmor %vm2301, %vm2302
    %v2304 = vsel %vm2303, %v2295, %v2300
    %v2305 = vrsqrt.pop %v2294
    %v2306 = vmul.f32 %v2305, %v2294
    %v2307 = vmul.f32 %v2306, %v2305
    %v2308 = vmul.f32 0.5, %v2307
    %v2309 = vsub.f32 1.5, %v2308
    %v2310 = vmul.f32 %v2305, %v2309
    %vm2311 = vweird.f32 %v2294
    %vm2312 = vweird.f32 %v2305
    %vm2313 = vmor %vm2311, %vm2312
    %v2314 = vsel %vm2313, %v2305, %v2310
    %v2315 = vmul.f32 %v2281, %v2304
    %v2316 = vmul.f32 %v2282, %v2314
    %v2318 = vperm.slane %v2270, 0
    %v2320 = vmul.f32 %v2315, %v2318
    %v2321 = vmul.f32 %v2316, %v2318
    %v2323 = vperm.slane %v2272, 0
    %v2325 = vadd.f32 %v2320, %v2323
    %v2326 = vadd.f32 %v2321, %v2323
    %2327 = vst.msk [vmem:[%s27] sm:$0xff] %vm480, %v2325
    %2328 = vst.msk [vmem:[%s27 + $0x8] sm:$0xff] %vm480, %v2326
    %s2329 = smul.u32 4, 4
    %s2330 = smul.u32 %s2329, 8
    %s2331 = sshll.u32 %s2330, 4
    %2332 = dma.done [#allocation5], %s2331
    %s2333 = smul.u32 4, 64
    %s2334 = smul.u32 %s2333, 2
    %s2335 = sshll.u32 %s2334, 4
    %2336 = dma.done %s281, %s2335
    %s2337 = sshll.u32 %s2334, 4
    %2338 = dma.done %s426, %s2337
    %v2339 = vpack.c.bf16 %v2326, %v2325
    %v2340 = vld [vmem:[#allocation2] sm:$0xff]
    %v2341 = vld [vmem:[#allocation2 + $0x8] sm:$0xff]
    %v2342 = vld [vmem:[#allocation2 + $0x10] sm:$0xff]
    %v2343 = vld [vmem:[#allocation2 + $0x18] sm:$0xff]
    %v2344 = vld [vmem:[#allocation2 + $0x20] sm:$0xff]
    %v2345 = vld [vmem:[#allocation2 + $0x28] sm:$0xff]
    %v2346 = vld [vmem:[#allocation2 + $0x30] sm:$0xff]
    %v2347 = vld [vmem:[#allocation2 + $0x38] sm:$0xff]
    %v2348 = vld [vmem:[#allocation2 + $0x40] sm:$0xff]
    %v2349 = vld [vmem:[#allocation2 + $0x48] sm:$0xff]
    %v2350 = vld [vmem:[#allocation2 + $0x50] sm:$0xff]
    %v2351 = vld [vmem:[#allocation2 + $0x58] sm:$0xff]
    %v2352 = vld [vmem:[#allocation2 + $0x60] sm:$0xff]
    %v2353 = vld [vmem:[#allocation2 + $0x68] sm:$0xff]
    %v2354 = vld [vmem:[#allocation2 + $0x70] sm:$0xff]
    %v2355 = vld [vmem:[#allocation2 + $0x78] sm:$0xff]
    %v2356 = vld [vmem:[#allocation17] sm:$0xff]
    %v2358 = vperm.slane %v2356, 0
    %v2359 = vperm.slane %v2356, 1
    %v2360 = vperm.slane %v2356, 2
    %v2361 = vperm.slane %v2356, 3
    %v2362 = vperm.slane %v2356, 4
    %v2363 = vperm.slane %v2356, 5
    %v2364 = vperm.slane %v2356, 6
    %v2365 = vperm.slane %v2356, 7
    %v2390 = vunpack.c.l.b16 %v2340
    %v2391 = vunpack.c.h.b16 %v2340
    %v2392 = vunpack.c.l.b16 %v2341
    %v2393 = vunpack.c.h.b16 %v2341
    %v2394 = vunpack.c.l.b16 %v2342
    %v2395 = vunpack.c.h.b16 %v2342
    %v2396 = vunpack.c.l.b16 %v2343
    %v2397 = vunpack.c.h.b16 %v2343
    %v2398 = vunpack.c.l.b16 %v2344
    %v2399 = vunpack.c.h.b16 %v2344
    %v2400 = vunpack.c.l.b16 %v2345
    %v2401 = vunpack.c.h.b16 %v2345
    %v2402 = vunpack.c.l.b16 %v2346
    %v2403 = vunpack.c.h.b16 %v2346
    %v2404 = vunpack.c.l.b16 %v2347
    %v2405 = vunpack.c.h.b16 %v2347
    %v2406 = vunpack.c.l.b16 %v2348
    %v2407 = vunpack.c.h.b16 %v2348
    %v2408 = vunpack.c.l.b16 %v2349
    %v2409 = vunpack.c.h.b16 %v2349
    %v2410 = vunpack.c.l.b16 %v2350
    %v2411 = vunpack.c.h.b16 %v2350
    %v2412 = vunpack.c.l.b16 %v2351
    %v2413 = vunpack.c.h.b16 %v2351
    %v2414 = vunpack.c.l.b16 %v2352
    %v2415 = vunpack.c.h.b16 %v2352
    %v2416 = vunpack.c.l.b16 %v2353
    %v2417 = vunpack.c.h.b16 %v2353
    %v2418 = vunpack.c.l.b16 %v2354
    %v2419 = vunpack.c.h.b16 %v2354
    %v2420 = vunpack.c.l.b16 %v2355
    %v2421 = vunpack.c.h.b16 %v2355
    %v2422 = vpack.c.b16 %v2398, %v2390
    %v2423 = vpack.c.b16 %v2399, %v2391
    %v2424 = vpack.c.b16 %v2400, %v2392
    %v2425 = vpack.c.b16 %v2401, %v2393
    %v2426 = vpack.c.b16 %v2402, %v2394
    %v2427 = vpack.c.b16 %v2403, %v2395
    %v2428 = vpack.c.b16 %v2404, %v2396
    %v2429 = vpack.c.b16 %v2405, %v2397
    %v2430 = vpack.c.b16 %v2414, %v2406
    %v2431 = vpack.c.b16 %v2415, %v2407
    %v2432 = vpack.c.b16 %v2416, %v2408
    %v2433 = vpack.c.b16 %v2417, %v2409
    %v2434 = vpack.c.b16 %v2418, %v2410
    %v2435 = vpack.c.b16 %v2419, %v2411
    %v2436 = vpack.c.b16 %v2420, %v2412
    %v2437 = vpack.c.b16 %v2421, %v2413
    %v2455 = vsel %vm480, %v2339, 0
    %2457 = vmatpush.bf16.msra.mxu0 0
    %2458 = vmatpush.bf16.msra.mxu0 0
    %2459 = vmatpush.bf16.msra.mxu0 0
    %2460 = vmatpush.bf16.msra.mxu0 0
    %2461 = vmatpush.bf16.msra.mxu0 0
    %2462 = vmatpush.bf16.msra.mxu0 0
    %2463 = vmatpush.bf16.msra.mxu0 %v2430
    %2464 = vmatpush.bf16.msra.mxu0 %v2422
    %2465 = vmatmul.bf16.gmra.mxu0 %v2455
    %v2466 = vpop.f32.mrf.mxu0
    %v2467 = vadd.f32 %v2358, %v2466
    %v2468 = vpop.f32.mrf.mxu0
    %v2469 = vadd.f32 %v2358, %v2468
    %2470 = vdwg.mxu0
    %2471 = vmatpush.bf16.msra.mxu0 0
    %2472 = vmatpush.bf16.msra.mxu0 0
    %2473 = vmatpush.bf16.msra.mxu0 0
    %2474 = vmatpush.bf16.msra.mxu0 0
    %2475 = vmatpush.bf16.msra.mxu0 0
    %2476 = vmatpush.bf16.msra.mxu0 0
    %2477 = vmatpush.bf16.msra.mxu0 %v2431
    %2478 = vmatpush.bf16.msra.mxu0 %v2423
    %2479 = vmatmul.bf16.gmra.mxu0 %v2455
    %v2480 = vpop.f32.mrf.mxu0
    %v2481 = vadd.f32 %v2359, %v2480
    %v2482 = vpop.f32.mrf.mxu0
    %v2483 = vadd.f32 %v2359, %v2482
    %2484 = vdwg.mxu0
    %2485 = vmatpush.bf16.msra.mxu0 0
    %2486 = vmatpush.bf16.msra.mxu0 0
    %2487 = vmatpush.bf16.msra.mxu0 0
    %2488 = vmatpush.bf16.msra.mxu0 0
    %2489 = vmatpush.bf16.msra.mxu0 0
    %2490 = vmatpush.bf16.msra.mxu0 0
    %2491 = vmatpush.bf16.msra.mxu0 %v2432
    %2492 = vmatpush.bf16.msra.mxu0 %v2424
    %2493 = vmatmul.bf16.gmra.mxu0 %v2455
    %v2494 = vpop.f32.mrf.mxu0
    %v2495 = vadd.f32 %v2360, %v2494
    %v2496 = vpop.f32.mrf.mxu0
    %v2497 = vadd.f32 %v2360, %v2496
    %2498 = vdwg.mxu0
    %2499 = vmatpush.bf16.msra.mxu0 0
    %2500 = vmatpush.bf16.msra.mxu0 0
    %2501 = vmatpush.bf16.msra.mxu0 0
    %2502 = vmatpush.bf16.msra.mxu0 0
    %2503 = vmatpush.bf16.msra.mxu0 0
    %2504 = vmatpush.bf16.msra.mxu0 0
    %2505 = vmatpush.bf16.msra.mxu0 %v2433
    %2506 = vmatpush.bf16.msra.mxu0 %v2425
    %2507 = vmatmul.bf16.gmra.mxu0 %v2455
    %v2508 = vpop.f32.mrf.mxu0
    %v2509 = vadd.f32 %v2361, %v2508
    %v2510 = vpop.f32.mrf.mxu0
    %v2511 = vadd.f32 %v2361, %v2510
    %2512 = vdwg.mxu0
    %2513 = vmatpush.bf16.msra.mxu0 0
    %2514 = vmatpush.bf16.msra.mxu0 0
    %2515 = vmatpush.bf16.msra.mxu0 0
    %2516 = vmatpush.bf16.msra.mxu0 0
    %2517 = vmatpush.bf16.msra.mxu0 0
    %2518 = vmatpush.bf16.msra.mxu0 0
    %2519 = vmatpush.bf16.msra.mxu0 %v2434
    %2520 = vmatpush.bf16.msra.mxu0 %v2426
    %2521 = vmatmul.bf16.gmra.mxu0 %v2455
    %v2522 = vpop.f32.mrf.mxu0
    %v2523 = vadd.f32 %v2362, %v2522
    %v2524 = vpop.f32.mrf.mxu0
    %v2525 = vadd.f32 %v2362, %v2524
    %2526 = vdwg.mxu0
    %2527 = vmatpush.bf16.msra.mxu0 0
    %2528 = vmatpush.bf16.msra.mxu0 0
    %2529 = vmatpush.bf16.msra.mxu0 0
    %2530 = vmatpush.bf16.msra.mxu0 0
    %2531 = vmatpush.bf16.msra.mxu0 0
    %2532 = vmatpush.bf16.msra.mxu0 0
    %2533 = vmatpush.bf16.msra.mxu0 %v2435
    %2534 = vmatpush.bf16.msra.mxu0 %v2427
    %2535 = vmatmul.bf16.gmra.mxu0 %v2455
    %v2536 = vpop.f32.mrf.mxu0
    %v2537 = vadd.f32 %v2363, %v2536
    %v2538 = vpop.f32.mrf.mxu0
    %v2539 = vadd.f32 %v2363, %v2538
    %2540 = vdwg.mxu0
    %2541 = vmatpush.bf16.msra.mxu0 0
    %2542 = vmatpush.bf16.msra.mxu0 0
    %2543 = vmatpush.bf16.msra.mxu0 0
    %2544 = vmatpush.bf16.msra.mxu0 0
    %2545 = vmatpush.bf16.msra.mxu0 0
    %2546 = vmatpush.bf16.msra.mxu0 0
    %2547 = vmatpush.bf16.msra.mxu0 %v2436
    %2548 = vmatpush.bf16.msra.mxu0 %v2428
    %2549 = vmatmul.bf16.gmra.mxu0 %v2455
    %v2550 = vpop.f32.mrf.mxu0
    %v2551 = vadd.f32 %v2364, %v2550
    %v2552 = vpop.f32.mrf.mxu0
    %v2553 = vadd.f32 %v2364, %v2552
    %2554 = vdwg.mxu0
    %2555 = vmatpush.bf16.msra.mxu0 0
    %2556 = vmatpush.bf16.msra.mxu0 0
    %2557 = vmatpush.bf16.msra.mxu0 0
    %2558 = vmatpush.bf16.msra.mxu0 0
    %2559 = vmatpush.bf16.msra.mxu0 0
    %2560 = vmatpush.bf16.msra.mxu0 0
    %2561 = vmatpush.bf16.msra.mxu0 %v2437
    %2562 = vmatpush.bf16.msra.mxu0 %v2429
    %2563 = vmatmul.bf16.gmra.mxu0 %v2455
    %v2564 = vpop.f32.mrf.mxu0
    %v2565 = vadd.f32 %v2365, %v2564
    %v2566 = vpop.f32.mrf.mxu0
    %v2567 = vadd.f32 %v2365, %v2566
    %2568 = vdwg.mxu0
    %v2569 = vmax.f32 %v2467, 0.0
    %v2570 = vmax.f32 %v2481, 0.0
    %v2571 = vmax.f32 %v2495, 0.0
    %v2572 = vmax.f32 %v2509, 0.0
    %v2573 = vmax.f32 %v2523, 0.0
    %v2574 = vmax.f32 %v2537, 0.0
    %v2575 = vmax.f32 %v2551, 0.0
    %v2576 = vmax.f32 %v2565, 0.0
    %v2577 = vmax.f32 %v2469, 0.0
    %v2578 = vmax.f32 %v2483, 0.0
    %v2579 = vmax.f32 %v2497, 0.0
    %v2580 = vmax.f32 %v2511, 0.0
    %v2581 = vmax.f32 %v2525, 0.0
    %v2582 = vmax.f32 %v2539, 0.0
    %v2583 = vmax.f32 %v2553, 0.0
    %v2584 = vmax.f32 %v2567, 0.0
    %v2585 = vpack.c.bf16 %v2577, %v2569
    %v2586 = vpack.c.bf16 %v2578, %v2570
    %v2587 = vpack.c.bf16 %v2579, %v2571
    %v2588 = vpack.c.bf16 %v2580, %v2572
    %v2589 = vld [vmem:[#allocation3] sm:$0xff]
    %v2590 = vld [vmem:[#allocation3 + $0x8] sm:$0xff]
    %v2591 = vld [vmem:[#allocation3 + $0x10] sm:$0xff]
    %v2592 = vld [vmem:[#allocation3 + $0x18] sm:$0xff]
    %v2593 = vld [vmem:[#allocation3 + $0x20] sm:$0xff]
    %v2594 = vld [vmem:[#allocation3 + $0x28] sm:$0xff]
    %v2595 = vld [vmem:[#allocation3 + $0x30] sm:$0xff]
    %v2596 = vld [vmem:[#allocation3 + $0x38] sm:$0xff]
    %v2597 = vld [vmem:[#allocation3 + $0x40] sm:$0xff]
    %v2598 = vld [vmem:[#allocation3 + $0x48] sm:$0xff]
    %v2599 = vld [vmem:[#allocation3 + $0x50] sm:$0xff]
    %v2600 = vld [vmem:[#allocation3 + $0x58] sm:$0xff]
    %v2601 = vld [vmem:[#allocation3 + $0x60] sm:$0xff]
    %v2602 = vld [vmem:[#allocation3 + $0x68] sm:$0xff]
    %v2603 = vld [vmem:[#allocation3 + $0x70] sm:$0xff]
    %v2604 = vld [vmem:[#allocation3 + $0x78] sm:$0xff]
    %v2605 = vld [vmem:[#allocation3 + $0x80] sm:$0xff]
    %v2606 = vld [vmem:[#allocation3 + $0x88] sm:$0xff]
    %v2607 = vld [vmem:[#allocation3 + $0x90] sm:$0xff]
    %v2608 = vld [vmem:[#allocation3 + $0x98] sm:$0xff]
    %v2609 = vld [vmem:[#allocation3 + $0xa0] sm:$0xff]
    %v2610 = vld [vmem:[#allocation3 + $0xa8] sm:$0xff]
    %v2611 = vld [vmem:[#allocation3 + $0xb0] sm:$0xff]
    %v2612 = vld [vmem:[#allocation3 + $0xb8] sm:$0xff]
    %v2613 = vld [vmem:[#allocation3 + $0xc0] sm:$0xff]
    %v2614 = vld [vmem:[#allocation3 + $0xc8] sm:$0xff]
    %v2615 = vld [vmem:[#allocation3 + $0xd0] sm:$0xff]
    %v2616 = vld [vmem:[#allocation3 + $0xd8] sm:$0xff]
    %v2617 = vld [vmem:[#allocation3 + $0xe0] sm:$0xff]
    %v2618 = vld [vmem:[#allocation3 + $0xe8] sm:$0xff]
    %v2619 = vld [vmem:[#allocation3 + $0xf0] sm:$0xff]
    %v2620 = vld [vmem:[#allocation3 + $0xf8] sm:$0xff]
    %v2621 = vld [vmem:[#allocation3 + $0x100] sm:$0xff]
    %v2622 = vld [vmem:[#allocation3 + $0x108] sm:$0xff]
    %v2623 = vld [vmem:[#allocation3 + $0x110] sm:$0xff]
    %v2624 = vld [vmem:[#allocation3 + $0x118] sm:$0xff]
    %v2625 = vld [vmem:[#allocation3 + $0x120] sm:$0xff]
    %v2626 = vld [vmem:[#allocation3 + $0x128] sm:$0xff]
    %v2627 = vld [vmem:[#allocation3 + $0x130] sm:$0xff]
    %v2628 = vld [vmem:[#allocation3 + $0x138] sm:$0xff]
    %v2629 = vld [vmem:[#allocation3 + $0x140] sm:$0xff]
    %v2630 = vld [vmem:[#allocation3 + $0x148] sm:$0xff]
    %v2631 = vld [vmem:[#allocation3 + $0x150] sm:$0xff]
    %v2632 = vld [vmem:[#allocation3 + $0x158] sm:$0xff]
    %v2633 = vld [vmem:[#allocation3 + $0x160] sm:$0xff]
    %v2634 = vld [vmem:[#allocation3 + $0x168] sm:$0xff]
    %v2635 = vld [vmem:[#allocation3 + $0x170] sm:$0xff]
    %v2636 = vld [vmem:[#allocation3 + $0x178] sm:$0xff]
    %v2637 = vld [vmem:[#allocation3 + $0x180] sm:$0xff]
    %v2638 = vld [vmem:[#allocation3 + $0x188] sm:$0xff]
    %v2639 = vld [vmem:[#allocation3 + $0x190] sm:$0xff]
    %v2640 = vld [vmem:[#allocation3 + $0x198] sm:$0xff]
    %v2641 = vld [vmem:[#allocation3 + $0x1a0] sm:$0xff]
    %v2642 = vld [vmem:[#allocation3 + $0x1a8] sm:$0xff]
    %v2643 = vld [vmem:[#allocation3 + $0x1b0] sm:$0xff]
    %v2644 = vld [vmem:[#allocation3 + $0x1b8] sm:$0xff]
    %v2645 = vld [vmem:[#allocation3 + $0x1c0] sm:$0xff]
    %v2646 = vld [vmem:[#allocation3 + $0x1c8] sm:$0xff]
    %v2647 = vld [vmem:[#allocation3 + $0x1d0] sm:$0xff]
    %v2648 = vld [vmem:[#allocation3 + $0x1d8] sm:$0xff]
    %v2649 = vld [vmem:[#allocation3 + $0x1e0] sm:$0xff]
    %v2650 = vld [vmem:[#allocation3 + $0x1e8] sm:$0xff]
    %v2651 = vld [vmem:[#allocation3 + $0x1f0] sm:$0xff]
    %v2652 = vld [vmem:[#allocation3 + $0x1f8] sm:$0xff]
    %v2653 = vld [vmem:[#allocation18] sm:$0x3]
    %v2655 = vperm.slane %v2653, 0
    %v2656 = vperm.slane %v2653, 1
    %v2723 = vunpack.c.l.b16 %v2589
    %v2724 = vunpack.c.h.b16 %v2589
    %v2725 = vunpack.c.l.b16 %v2590
    %v2726 = vunpack.c.h.b16 %v2590
    %v2727 = vunpack.c.l.b16 %v2591
    %v2728 = vunpack.c.h.b16 %v2591
    %v2729 = vunpack.c.l.b16 %v2592
    %v2730 = vunpack.c.h.b16 %v2592
    %v2731 = vunpack.c.l.b16 %v2593
    %v2732 = vunpack.c.h.b16 %v2593
    %v2733 = vunpack.c.l.b16 %v2594
    %v2734 = vunpack.c.h.b16 %v2594
    %v2735 = vunpack.c.l.b16 %v2595
    %v2736 = vunpack.c.h.b16 %v2595
    %v2737 = vunpack.c.l.b16 %v2596
    %v2738 = vunpack.c.h.b16 %v2596
    %v2739 = vunpack.c.l.b16 %v2597
    %v2740 = vunpack.c.h.b16 %v2597
    %v2741 = vunpack.c.l.b16 %v2598
    %v2742 = vunpack.c.h.b16 %v2598
    %v2743 = vunpack.c.l.b16 %v2599
    %v2744 = vunpack.c.h.b16 %v2599
    %v2745 = vunpack.c.l.b16 %v2600
    %v2746 = vunpack.c.h.b16 %v2600
    %v2747 = vunpack.c.l.b16 %v2601
    %v2748 = vunpack.c.h.b16 %v2601
    %v2749 = vunpack.c.l.b16 %v2602
    %v2750 = vunpack.c.h.b16 %v2602
    %v2751 = vunpack.c.l.b16 %v2603
    %v2752 = vunpack.c.h.b16 %v2603
    %v2753 = vunpack.c.l.b16 %v2604
    %v2754 = vunpack.c.h.b16 %v2604
    %v2755 = vunpack.c.l.b16 %v2605
    %v2756 = vunpack.c.h.b16 %v2605
    %v2757 = vunpack.c.l.b16 %v2606
    %v2758 = vunpack.c.h.b16 %v2606
    %v2759 = vunpack.c.l.b16 %v2607
    %v2760 = vunpack.c.h.b16 %v2607
    %v2761 = vunpack.c.l.b16 %v2608
    %v2762 = vunpack.c.h.b16 %v2608
    %v2763 = vunpack.c.l.b16 %v2609
    %v2764 = vunpack.c.h.b16 %v2609
    %v2765 = vunpack.c.l.b16 %v2610
    %v2766 = vunpack.c.h.b16 %v2610
    %v2767 = vunpack.c.l.b16 %v2611
    %v2768 = vunpack.c.h.b16 %v2611
    %v2769 = vunpack.c.l.b16 %v2612
    %v2770 = vunpack.c.h.b16 %v2612
    %v2771 = vunpack.c.l.b16 %v2613
    %v2772 = vunpack.c.h.b16 %v2613
    %v2773 = vunpack.c.l.b16 %v2614
    %v2774 = vunpack.c.h.b16 %v2614
    %v2775 = vunpack.c.l.b16 %v2615
    %v2776 = vunpack.c.h.b16 %v2615
    %v2777 = vunpack.c.l.b16 %v2616
    %v2778 = vunpack.c.h.b16 %v2616
    %v2779 = vunpack.c.l.b16 %v2617
    %v2780 = vunpack.c.h.b16 %v2617
    %v2781 = vunpack.c.l.b16 %v2618
    %v2782 = vunpack.c.h.b16 %v2618
    %v2783 = vunpack.c.l.b16 %v2619
    %v2784 = vunpack.c.h.b16 %v2619
    %v2785 = vunpack.c.l.b16 %v2620
    %v2786 = vunpack.c.h.b16 %v2620
    %v2787 = vunpack.c.l.b16 %v2621
    %v2788 = vunpack.c.h.b16 %v2621
    %v2789 = vunpack.c.l.b16 %v2622
    %v2790 = vunpack.c.h.b16 %v2622
    %v2791 = vunpack.c.l.b16 %v2623
    %v2792 = vunpack.c.h.b16 %v2623
    %v2793 = vunpack.c.l.b16 %v2624
    %v2794 = vunpack.c.h.b16 %v2624
    %v2795 = vunpack.c.l.b16 %v2625
    %v2796 = vunpack.c.h.b16 %v2625
    %v2797 = vunpack.c.l.b16 %v2626
    %v2798 = vunpack.c.h.b16 %v2626
    %v2799 = vunpack.c.l.b16 %v2627
    %v2800 = vunpack.c.h.b16 %v2627
    %v2801 = vunpack.c.l.b16 %v2628
    %v2802 = vunpack.c.h.b16 %v2628
    %v2803 = vunpack.c.l.b16 %v2629
    %v2804 = vunpack.c.h.b16 %v2629
    %v2805 = vunpack.c.l.b16 %v2630
    %v2806 = vunpack.c.h.b16 %v2630
    %v2807 = vunpack.c.l.b16 %v2631
    %v2808 = vunpack.c.h.b16 %v2631
    %v2809 = vunpack.c.l.b16 %v2632
    %v2810 = vunpack.c.h.b16 %v2632
    %v2811 = vunpack.c.l.b16 %v2633
    %v2812 = vunpack.c.h.b16 %v2633
    %v2813 = vunpack.c.l.b16 %v2634
    %v2814 = vunpack.c.h.b16 %v2634
    %v2815 = vunpack.c.l.b16 %v2635
    %v2816 = vunpack.c.h.b16 %v2635
    %v2817 = vunpack.c.l.b16 %v2636
    %v2818 = vunpack.c.h.b16 %v2636
    %v2819 = vunpack.c.l.b16 %v2637
    %v2820 = vunpack.c.h.b16 %v2637
    %v2821 = vunpack.c.l.b16 %v2638
    %v2822 = vunpack.c.h.b16 %v2638
    %v2823 = vunpack.c.l.b16 %v2639
    %v2824 = vunpack.c.h.b16 %v2639
    %v2825 = vunpack.c.l.b16 %v2640
    %v2826 = vunpack.c.h.b16 %v2640
    %v2827 = vunpack.c.l.b16 %v2641
    %v2828 = vunpack.c.h.b16 %v2641
    %v2829 = vunpack.c.l.b16 %v2642
    %v2830 = vunpack.c.h.b16 %v2642
    %v2831 = vunpack.c.l.b16 %v2643
    %v2832 = vunpack.c.h.b16 %v2643
    %v2833 = vunpack.c.l.b16 %v2644
    %v2834 = vunpack.c.h.b16 %v2644
    %v2835 = vunpack.c.l.b16 %v2645
    %v2836 = vunpack.c.h.b16 %v2645
    %v2837 = vunpack.c.l.b16 %v2646
    %v2838 = vunpack.c.h.b16 %v2646
    %v2839 = vunpack.c.l.b16 %v2647
    %v2840 = vunpack.c.h.b16 %v2647
    %v2841 = vunpack.c.l.b16 %v2648
    %v2842 = vunpack.c.h.b16 %v2648
    %v2843 = vunpack.c.l.b16 %v2649
    %v2844 = vunpack.c.h.b16 %v2649
    %v2845 = vunpack.c.l.b16 %v2650
    %v2846 = vunpack.c.h.b16 %v2650
    %v2847 = vunpack.c.l.b16 %v2651
    %v2848 = vunpack.c.h.b16 %v2651
    %v2849 = vunpack.c.l.b16 %v2652
    %v2850 = vunpack.c.h.b16 %v2652
    %v2851 = vpack.c.b16 %v2725, %v2723
    %v2852 = vpack.c.b16 %v2726, %v2724
    %v2853 = vpack.c.b16 %v2729, %v2727
    %v2854 = vpack.c.b16 %v2730, %v2728
    %v2855 = vpack.c.b16 %v2733, %v2731
    %v2856 = vpack.c.b16 %v2734, %v2732
    %v2857 = vpack.c.b16 %v2737, %v2735
    %v2858 = vpack.c.b16 %v2738, %v2736
    %v2859 = vpack.c.b16 %v2741, %v2739
    %v2860 = vpack.c.b16 %v2742, %v2740
    %v2861 = vpack.c.b16 %v2745, %v2743
    %v2862 = vpack.c.b16 %v2746, %v2744
    %v2863 = vpack.c.b16 %v2749, %v2747
    %v2864 = vpack.c.b16 %v2750, %v2748
    %v2865 = vpack.c.b16 %v2753, %v2751
    %v2866 = vpack.c.b16 %v2754, %v2752
    %v2867 = vpack.c.b16 %v2757, %v2755
    %v2868 = vpack.c.b16 %v2758, %v2756
    %v2869 = vpack.c.b16 %v2761, %v2759
    %v2870 = vpack.c.b16 %v2762, %v2760
    %v2871 = vpack.c.b16 %v2765, %v2763
    %v2872 = vpack.c.b16 %v2766, %v2764
    %v2873 = vpack.c.b16 %v2769, %v2767
    %v2874 = vpack.c.b16 %v2770, %v2768
    %v2875 = vpack.c.b16 %v2773, %v2771
    %v2876 = vpack.c.b16 %v2774, %v2772
    %v2877 = vpack.c.b16 %v2777, %v2775
    %v2878 = vpack.c.b16 %v2778, %v2776
    %v2879 = vpack.c.b16 %v2781, %v2779
    %v2880 = vpack.c.b16 %v2782, %v2780
    %v2881 = vpack.c.b16 %v2785, %v2783
    %v2882 = vpack.c.b16 %v2786, %v2784
    %v2883 = vpack.c.b16 %v2789, %v2787
    %v2884 = vpack.c.b16 %v2790, %v2788
    %v2885 = vpack.c.b16 %v2793, %v2791
    %v2886 = vpack.c.b16 %v2794, %v2792
    %v2887 = vpack.c.b16 %v2797, %v2795
    %v2888 = vpack.c.b16 %v2798, %v2796
    %v2889 = vpack.c.b16 %v2801, %v2799
    %v2890 = vpack.c.b16 %v2802, %v2800
    %v2891 = vpack.c.b16 %v2805, %v2803
    %v2892 = vpack.c.b16 %v2806, %v2804
    %v2893 = vpack.c.b16 %v2809, %v2807
    %v2894 = vpack.c.b16 %v2810, %v2808
    %v2895 = vpack.c.b16 %v2813, %v2811
    %v2896 = vpack.c.b16 %v2814, %v2812
    %v2897 = vpack.c.b16 %v2817, %v2815
    %v2898 = vpack.c.b16 %v2818, %v2816
    %v2899 = vpack.c.b16 %v2821, %v2819
    %v2900 = vpack.c.b16 %v2822, %v2820
    %v2901 = vpack.c.b16 %v2825, %v2823
    %v2902 = vpack.c.b16 %v2826, %v2824
    %v2903 = vpack.c.b16 %v2829, %v2827
    %v2904 = vpack.c.b16 %v2830, %v2828
    %v2905 = vpack.c.b16 %v2833, %v2831
    %v2906 = vpack.c.b16 %v2834, %v2832
    %v2907 = vpack.c.b16 %v2837, %v2835
    %v2908 = vpack.c.b16 %v2838, %v2836
    %v2909 = vpack.c.b16 %v2841, %v2839
    %v2910 = vpack.c.b16 %v2842, %v2840
    %v2911 = vpack.c.b16 %v2845, %v2843
    %v2912 = vpack.c.b16 %v2846, %v2844
    %v2913 = vpack.c.b16 %v2849, %v2847
    %v2914 = vpack.c.b16 %v2850, %v2848
    %2979 = vmatpush.bf16.msra.mxu0 %v2865
    %2980 = vmatpush.bf16.msra.mxu0 %v2863
    %2981 = vmatpush.bf16.msra.mxu0 %v2861
    %2982 = vmatpush.bf16.msra.mxu0 %v2859
    %2983 = vmatpush.bf16.msra.mxu0 %v2857
    %2984 = vmatpush.bf16.msra.mxu0 %v2855
    %2985 = vmatpush.bf16.msra.mxu0 %v2853
    %2986 = vmatpush.bf16.msra.mxu0 %v2851
    %2987 = vmatmul.bf16.gmra.mxu0 %v2585
    %v2988 = vpop.f32.mrf.mxu0
    %v2989 = vadd.f32 %v2655, %v2988
    %v2990 = vpop.f32.mrf.mxu0
    %v2991 = vadd.f32 %v2655, %v2990
    %2992 = vdwg.mxu0
    %2993 = vmatpush.bf16.msra.mxu0 %v2881
    %2994 = vmatpush.bf16.msra.mxu0 %v2879
    %2995 = vmatpush.bf16.msra.mxu0 %v2877
    %2996 = vmatpush.bf16.msra.mxu0 %v2875
    %2997 = vmatpush.bf16.msra.mxu0 %v2873
    %2998 = vmatpush.bf16.msra.mxu0 %v2871
    %2999 = vmatpush.bf16.msra.mxu0 %v2869
    %3000 = vmatpush.bf16.msra.mxu0 %v2867
    %3001 = vmatmul.bf16.gmra.mxu0 %v2586
    %v3002 = vpop.f32.mrf.mxu0
    %v3003 = vadd.f32 %v2989, %v3002
    %v3004 = vpop.f32.mrf.mxu0
    %v3005 = vadd.f32 %v2991, %v3004
    %3006 = vdwg.mxu0
    %3007 = vmatpush.bf16.msra.mxu0 %v2897
    %3008 = vmatpush.bf16.msra.mxu0 %v2895
    %3009 = vmatpush.bf16.msra.mxu0 %v2893
    %3010 = vmatpush.bf16.msra.mxu0 %v2891
    %3011 = vmatpush.bf16.msra.mxu0 %v2889
    %3012 = vmatpush.bf16.msra.mxu0 %v2887
    %3013 = vmatpush.bf16.msra.mxu0 %v2885
    %3014 = vmatpush.bf16.msra.mxu0 %v2883
    %3015 = vmatmul.bf16.gmra.mxu0 %v2587
    %v3016 = vpop.f32.mrf.mxu0
    %v3017 = vadd.f32 %v3003, %v3016
    %v3018 = vpop.f32.mrf.mxu0
    %v3019 = vadd.f32 %v3005, %v3018
    %3020 = vdwg.mxu0
    %3021 = vmatpush.bf16.msra.mxu0 %v2913
    %3022 = vmatpush.bf16.msra.mxu0 %v2911
    %3023 = vmatpush.bf16.msra.mxu0 %v2909
    %3024 = vmatpush.bf16.msra.mxu0 %v2907
    %3025 = vmatpush.bf16.msra.mxu0 %v2905
    %3026 = vmatpush.bf16.msra.mxu0 %v2903
    %3027 = vmatpush.bf16.msra.mxu0 %v2901
    %3028 = vmatpush.bf16.msra.mxu0 %v2899
    %3029 = vmatmul.bf16.gmra.mxu0 %v2588
    %v3030 = vpop.f32.mrf.mxu0
    %v3031 = vadd.f32 %v3017, %v3030
    %v3032 = vpop.f32.mrf.mxu0
    %v3033 = vadd.f32 %v3019, %v3032
    %3034 = vdwg.mxu0
    %3035 = vmatpush.bf16.msra.mxu0 %v2866
    %3036 = vmatpush.bf16.msra.mxu0 %v2864
    %3037 = vmatpush.bf16.msra.mxu0 %v2862
    %3038 = vmatpush.bf16.msra.mxu0 %v2860
    %3039 = vmatpush.bf16.msra.mxu0 %v2858
    %3040 = vmatpush.bf16.msra.mxu0 %v2856
    %3041 = vmatpush.bf16.msra.mxu0 %v2854
    %3042 = vmatpush.bf16.msra.mxu0 %v2852
    %3043 = vmatmul.bf16.gmra.mxu0 %v2585
    %v3044 = vpop.f32.mrf.mxu0
    %v3045 = vadd.f32 %v2656, %v3044
    %v3046 = vpop.f32.mrf.mxu0
    %v3047 = vadd.f32 %v2656, %v3046
    %3048 = vdwg.mxu0
    %3049 = vmatpush.bf16.msra.mxu0 %v2882
    %3050 = vmatpush.bf16.msra.mxu0 %v2880
    %3051 = vmatpush.bf16.msra.mxu0 %v2878
    %3052 = vmatpush.bf16.msra.mxu0 %v2876
    %3053 = vmatpush.bf16.msra.mxu0 %v2874
    %3054 = vmatpush.bf16.msra.mxu0 %v2872
    %3055 = vmatpush.bf16.msra.mxu0 %v2870
    %3056 = vmatpush.bf16.msra.mxu0 %v2868
    %3057 = vmatmul.bf16.gmra.mxu0 %v2586
    %v3058 = vpop.f32.mrf.mxu0
    %v3059 = vadd.f32 %v3045, %v3058
    %v3060 = vpop.f32.mrf.mxu0
    %v3061 = vadd.f32 %v3047, %v3060
    %3062 = vdwg.mxu0
    %3063 = vmatpush.bf16.msra.mxu0 %v2898
    %3064 = vmatpush.bf16.msra.mxu0 %v2896
    %3065 = vmatpush.bf16.msra.mxu0 %v2894
    %3066 = vmatpush.bf16.msra.mxu0 %v2892
    %3067 = vmatpush.bf16.msra.mxu0 %v2890
    %3068 = vmatpush.bf16.msra.mxu0 %v2888
    %3069 = vmatpush.bf16.msra.mxu0 %v2886
    %3070 = vmatpush.bf16.msra.mxu0 %v2884
    %3071 = vmatmul.bf16.gmra.mxu0 %v2587
    %v3072 = vpop.f32.mrf.mxu0
    %v3073 = vadd.f32 %v3059, %v3072
    %v3074 = vpop.f32.mrf.mxu0
    %v3075 = vadd.f32 %v3061, %v3074
    %3076 = vdwg.mxu0
    %3077 = vmatpush.bf16.msra.mxu0 %v2914
    %3078 = vmatpush.bf16.msra.mxu0 %v2912
    %3079 = vmatpush.bf16.msra.mxu0 %v2910
    %3080 = vmatpush.bf16.msra.mxu0 %v2908
    %3081 = vmatpush.bf16.msra.mxu0 %v2906
    %3082 = vmatpush.bf16.msra.mxu0 %v2904
    %3083 = vmatpush.bf16.msra.mxu0 %v2902
    %3084 = vmatpush.bf16.msra.mxu0 %v2900
    %3085 = vmatmul.bf16.gmra.mxu0 %v2588
    %v3086 = vpop.f32.mrf.mxu0
    %v3087 = vadd.f32 %v3073, %v3086
    %v3088 = vpop.f32.mrf.mxu0
    %v3089 = vadd.f32 %v3075, %v3088
    %3090 = vdwg.mxu0
    %v3091 = vmax.f32 %v3031, 0.0
    %v3092 = vmax.f32 %v3087, 0.0
    %v3093 = vmax.f32 %v3033, 0.0
    %v3094 = vmax.f32 %v3089, 0.0
    %v3095 = vpack.c.bf16 %v2581, %v2573
    %v3096 = vpack.c.bf16 %v2582, %v2574
    %v3097 = vpack.c.bf16 %v2583, %v2575
    %v3098 = vpack.c.bf16 %v2584, %v2576
    %v3099 = vld [vmem:[#allocation4] sm:$0xff]
    %v3100 = vld [vmem:[#allocation4 + $0x8] sm:$0xff]
    %v3101 = vld [vmem:[#allocation4 + $0x10] sm:$0xff]
    %v3102 = vld [vmem:[#allocation4 + $0x18] sm:$0xff]
    %v3103 = vld [vmem:[#allocation4 + $0x20] sm:$0xff]
    %v3104 = vld [vmem:[#allocation4 + $0x28] sm:$0xff]
    %v3105 = vld [vmem:[#allocation4 + $0x30] sm:$0xff]
    %v3106 = vld [vmem:[#allocation4 + $0x38] sm:$0xff]
    %v3107 = vld [vmem:[#allocation4 + $0x40] sm:$0xff]
    %v3108 = vld [vmem:[#allocation4 + $0x48] sm:$0xff]
    %v3109 = vld [vmem:[#allocation4 + $0x50] sm:$0xff]
    %v3110 = vld [vmem:[#allocation4 + $0x58] sm:$0xff]
    %v3111 = vld [vmem:[#allocation4 + $0x60] sm:$0xff]
    %v3112 = vld [vmem:[#allocation4 + $0x68] sm:$0xff]
    %v3113 = vld [vmem:[#allocation4 + $0x70] sm:$0xff]
    %v3114 = vld [vmem:[#allocation4 + $0x78] sm:$0xff]
    %v3115 = vld [vmem:[#allocation4 + $0x80] sm:$0xff]
    %v3116 = vld [vmem:[#allocation4 + $0x88] sm:$0xff]
    %v3117 = vld [vmem:[#allocation4 + $0x90] sm:$0xff]
    %v3118 = vld [vmem:[#allocation4 + $0x98] sm:$0xff]
    %v3119 = vld [vmem:[#allocation4 + $0xa0] sm:$0xff]
    %v3120 = vld [vmem:[#allocation4 + $0xa8] sm:$0xff]
    %v3121 = vld [vmem:[#allocation4 + $0xb0] sm:$0xff]
    %v3122 = vld [vmem:[#allocation4 + $0xb8] sm:$0xff]
    %v3123 = vld [vmem:[#allocation4 + $0xc0] sm:$0xff]
    %v3124 = vld [vmem:[#allocation4 + $0xc8] sm:$0xff]
    %v3125 = vld [vmem:[#allocation4 + $0xd0] sm:$0xff]
    %v3126 = vld [vmem:[#allocation4 + $0xd8] sm:$0xff]
    %v3127 = vld [vmem:[#allocation4 + $0xe0] sm:$0xff]
    %v3128 = vld [vmem:[#allocation4 + $0xe8] sm:$0xff]
    %v3129 = vld [vmem:[#allocation4 + $0xf0] sm:$0xff]
    %v3130 = vld [vmem:[#allocation4 + $0xf8] sm:$0xff]
    %v3131 = vld [vmem:[#allocation4 + $0x100] sm:$0xff]
    %v3132 = vld [vmem:[#allocation4 + $0x108] sm:$0xff]
    %v3133 = vld [vmem:[#allocation4 + $0x110] sm:$0xff]
    %v3134 = vld [vmem:[#allocation4 + $0x118] sm:$0xff]
    %v3135 = vld [vmem:[#allocation4 + $0x120] sm:$0xff]
    %v3136 = vld [vmem:[#allocation4 + $0x128] sm:$0xff]
    %v3137 = vld [vmem:[#allocation4 + $0x130] sm:$0xff]
    %v3138 = vld [vmem:[#allocation4 + $0x138] sm:$0xff]
    %v3139 = vld [vmem:[#allocation4 + $0x140] sm:$0xff]
    %v3140 = vld [vmem:[#allocation4 + $0x148] sm:$0xff]
    %v3141 = vld [vmem:[#allocation4 + $0x150] sm:$0xff]
    %v3142 = vld [vmem:[#allocation4 + $0x158] sm:$0xff]
    %v3143 = vld [vmem:[#allocation4 + $0x160] sm:$0xff]
    %v3144 = vld [vmem:[#allocation4 + $0x168] sm:$0xff]
    %v3145 = vld [vmem:[#allocation4 + $0x170] sm:$0xff]
    %v3146 = vld [vmem:[#allocation4 + $0x178] sm:$0xff]
    %v3147 = vld [vmem:[#allocation4 + $0x180] sm:$0xff]
    %v3148 = vld [vmem:[#allocation4 + $0x188] sm:$0xff]
    %v3149 = vld [vmem:[#allocation4 + $0x190] sm:$0xff]
    %v3150 = vld [vmem:[#allocation4 + $0x198] sm:$0xff]
    %v3151 = vld [vmem:[#allocation4 + $0x1a0] sm:$0xff]
    %v3152 = vld [vmem:[#allocation4 + $0x1a8] sm:$0xff]
    %v3153 = vld [vmem:[#allocation4 + $0x1b0] sm:$0xff]
    %v3154 = vld [vmem:[#allocation4 + $0x1b8] sm:$0xff]
    %v3155 = vld [vmem:[#allocation4 + $0x1c0] sm:$0xff]
    %v3156 = vld [vmem:[#allocation4 + $0x1c8] sm:$0xff]
    %v3157 = vld [vmem:[#allocation4 + $0x1d0] sm:$0xff]
    %v3158 = vld [vmem:[#allocation4 + $0x1d8] sm:$0xff]
    %v3159 = vld [vmem:[#allocation4 + $0x1e0] sm:$0xff]
    %v3160 = vld [vmem:[#allocation4 + $0x1e8] sm:$0xff]
    %v3161 = vld [vmem:[#allocation4 + $0x1f0] sm:$0xff]
    %v3162 = vld [vmem:[#allocation4 + $0x1f8] sm:$0xff]
    %v3163 = vld [vmem:[#allocation20] sm:$0x3]
    %v3165 = vperm.slane %v3163, 0
    %v3166 = vperm.slane %v3163, 1
    %v3233 = vunpack.c.l.b16 %v3099
    %v3234 = vunpack.c.h.b16 %v3099
    %v3235 = vunpack.c.l.b16 %v3100
    %v3236 = vunpack.c.h.b16 %v3100
    %v3237 = vunpack.c.l.b16 %v3101
    %v3238 = vunpack.c.h.b16 %v3101
    %v3239 = vunpack.c.l.b16 %v3102
    %v3240 = vunpack.c.h.b16 %v3102
    %v3241 = vunpack.c.l.b16 %v3103
    %v3242 = vunpack.c.h.b16 %v3103
    %v3243 = vunpack.c.l.b16 %v3104
    %v3244 = vunpack.c.h.b16 %v3104
    %v3245 = vunpack.c.l.b16 %v3105
    %v3246 = vunpack.c.h.b16 %v3105
    %v3247 = vunpack.c.l.b16 %v3106
    %v3248 = vunpack.c.h.b16 %v3106
    %v3249 = vunpack.c.l.b16 %v3107
    %v3250 = vunpack.c.h.b16 %v3107
    %v3251 = vunpack.c.l.b16 %v3108
    %v3252 = vunpack.c.h.b16 %v3108
    %v3253 = vunpack.c.l.b16 %v3109
    %v3254 = vunpack.c.h.b16 %v3109
    %v3255 = vunpack.c.l.b16 %v3110
    %v3256 = vunpack.c.h.b16 %v3110
    %v3257 = vunpack.c.l.b16 %v3111
    %v3258 = vunpack.c.h.b16 %v3111
    %v3259 = vunpack.c.l.b16 %v3112
    %v3260 = vunpack.c.h.b16 %v3112
    %v3261 = vunpack.c.l.b16 %v3113
    %v3262 = vunpack.c.h.b16 %v3113
    %v3263 = vunpack.c.l.b16 %v3114
    %v3264 = vunpack.c.h.b16 %v3114
    %v3265 = vunpack.c.l.b16 %v3115
    %v3266 = vunpack.c.h.b16 %v3115
    %v3267 = vunpack.c.l.b16 %v3116
    %v3268 = vunpack.c.h.b16 %v3116
    %v3269 = vunpack.c.l.b16 %v3117
    %v3270 = vunpack.c.h.b16 %v3117
    %v3271 = vunpack.c.l.b16 %v3118
    %v3272 = vunpack.c.h.b16 %v3118
    %v3273 = vunpack.c.l.b16 %v3119
    %v3274 = vunpack.c.h.b16 %v3119
    %v3275 = vunpack.c.l.b16 %v3120
    %v3276 = vunpack.c.h.b16 %v3120
    %v3277 = vunpack.c.l.b16 %v3121
    %v3278 = vunpack.c.h.b16 %v3121
    %v3279 = vunpack.c.l.b16 %v3122
    %v3280 = vunpack.c.h.b16 %v3122
    %v3281 = vunpack.c.l.b16 %v3123
    %v3282 = vunpack.c.h.b16 %v3123
    %v3283 = vunpack.c.l.b16 %v3124
    %v3284 = vunpack.c.h.b16 %v3124
    %v3285 = vunpack.c.l.b16 %v3125
    %v3286 = vunpack.c.h.b16 %v3125
    %v3287 = vunpack.c.l.b16 %v3126
    %v3288 = vunpack.c.h.b16 %v3126
    %v3289 = vunpack.c.l.b16 %v3127
    %v3290 = vunpack.c.h.b16 %v3127
    %v3291 = vunpack.c.l.b16 %v3128
    %v3292 = vunpack.c.h.b16 %v3128
    %v3293 = vunpack.c.l.b16 %v3129
    %v3294 = vunpack.c.h.b16 %v3129
    %v3295 = vunpack.c.l.b16 %v3130
    %v3296 = vunpack.c.h.b16 %v3130
    %v3297 = vunpack.c.l.b16 %v3131
    %v3298 = vunpack.c.h.b16 %v3131
    %v3299 = vunpack.c.l.b16 %v3132
    %v3300 = vunpack.c.h.b16 %v3132
    %v3301 = vunpack.c.l.b16 %v3133
    %v3302 = vunpack.c.h.b16 %v3133
    %v3303 = vunpack.c.l.b16 %v3134
    %v3304 = vunpack.c.h.b16 %v3134
    %v3305 = vunpack.c.l.b16 %v3135
    %v3306 = vunpack.c.h.b16 %v3135
    %v3307 = vunpack.c.l.b16 %v3136
    %v3308 = vunpack.c.h.b16 %v3136
    %v3309 = vunpack.c.l.b16 %v3137
    %v3310 = vunpack.c.h.b16 %v3137
    %v3311 = vunpack.c.l.b16 %v3138
    %v3312 = vunpack.c.h.b16 %v3138
    %v3313 = vunpack.c.l.b16 %v3139
    %v3314 = vunpack.c.h.b16 %v3139
    %v3315 = vunpack.c.l.b16 %v3140
    %v3316 = vunpack.c.h.b16 %v3140
    %v3317 = vunpack.c.l.b16 %v3141
    %v3318 = vunpack.c.h.b16 %v3141
    %v3319 = vunpack.c.l.b16 %v3142
    %v3320 = vunpack.c.h.b16 %v3142
    %v3321 = vunpack.c.l.b16 %v3143
    %v3322 = vunpack.c.h.b16 %v3143
    %v3323 = vunpack.c.l.b16 %v3144
    %v3324 = vunpack.c.h.b16 %v3144
    %v3325 = vunpack.c.l.b16 %v3145
    %v3326 = vunpack.c.h.b16 %v3145
    %v3327 = vunpack.c.l.b16 %v3146
    %v3328 = vunpack.c.h.b16 %v3146
    %v3329 = vunpack.c.l.b16 %v3147
    %v3330 = vunpack.c.h.b16 %v3147
    %v3331 = vunpack.c.l.b16 %v3148
    %v3332 = vunpack.c.h.b16 %v3148
    %v3333 = vunpack.c.l.b16 %v3149
    %v3334 = vunpack.c.h.b16 %v3149
    %v3335 = vunpack.c.l.b16 %v3150
    %v3336 = vunpack.c.h.b16 %v3150
    %v3337 = vunpack.c.l.b16 %v3151
    %v3338 = vunpack.c.h.b16 %v3151
    %v3339 = vunpack.c.l.b16 %v3152
    %v3340 = vunpack.c.h.b16 %v3152
    %v3341 = vunpack.c.l.b16 %v3153
    %v3342 = vunpack.c.h.b16 %v3153
    %v3343 = vunpack.c.l.b16 %v3154
    %v3344 = vunpack.c.h.b16 %v3154
    %v3345 = vunpack.c.l.b16 %v3155
    %v3346 = vunpack.c.h.b16 %v3155
    %v3347 = vunpack.c.l.b16 %v3156
    %v3348 = vunpack.c.h.b16 %v3156
    %v3349 = vunpack.c.l.b16 %v3157
    %v3350 = vunpack.c.h.b16 %v3157
    %v3351 = vunpack.c.l.b16 %v3158
    %v3352 = vunpack.c.h.b16 %v3158
    %v3353 = vunpack.c.l.b16 %v3159
    %v3354 = vunpack.c.h.b16 %v3159
    %v3355 = vunpack.c.l.b16 %v3160
    %v3356 = vunpack.c.h.b16 %v3160
    %v3357 = vunpack.c.l.b16 %v3161
    %v3358 = vunpack.c.h.b16 %v3161
    %v3359 = vunpack.c.l.b16 %v3162
    %v3360 = vunpack.c.h.b16 %v3162
    %v3361 = vpack.c.b16 %v3235, %v3233
    %v3362 = vpack.c.b16 %v3236, %v3234
    %v3363 = vpack.c.b16 %v3239, %v3237
    %v3364 = vpack.c.b16 %v3240, %v3238
    %v3365 = vpack.c.b16 %v3243, %v3241
    %v3366 = vpack.c.b16 %v3244, %v3242
    %v3367 = vpack.c.b16 %v3247, %v3245
    %v3368 = vpack.c.b16 %v3248, %v3246
    %v3369 = vpack.c.b16 %v3251, %v3249
    %v3370 = vpack.c.b16 %v3252, %v3250
    %v3371 = vpack.c.b16 %v3255, %v3253
    %v3372 = vpack.c.b16 %v3256, %v3254
    %v3373 = vpack.c.b16 %v3259, %v3257
    %v3374 = vpack.c.b16 %v3260, %v3258
    %v3375 = vpack.c.b16 %v3263, %v3261
    %v3376 = vpack.c.b16 %v3264, %v3262
    %v3377 = vpack.c.b16 %v3267, %v3265
    %v3378 = vpack.c.b16 %v3268, %v3266
    %v3379 = vpack.c.b16 %v3271, %v3269
    %v3380 = vpack.c.b16 %v3272, %v3270
    %v3381 = vpack.c.b16 %v3275, %v3273
    %v3382 = vpack.c.b16 %v3276, %v3274
    %v3383 = vpack.c.b16 %v3279, %v3277
    %v3384 = vpack.c.b16 %v3280, %v3278
    %v3385 = vpack.c.b16 %v3283, %v3281
    %v3386 = vpack.c.b16 %v3284, %v3282
    %v3387 = vpack.c.b16 %v3287, %v3285
    %v3388 = vpack.c.b16 %v3288, %v3286
    %v3389 = vpack.c.b16 %v3291, %v3289
    %v3390 = vpack.c.b16 %v3292, %v3290
    %v3391 = vpack.c.b16 %v3295, %v3293
    %v3392 = vpack.c.b16 %v3296, %v3294
    %v3393 = vpack.c.b16 %v3299, %v3297
    %v3394 = vpack.c.b16 %v3300, %v3298
    %v3395 = vpack.c.b16 %v3303, %v3301
    %v3396 = vpack.c.b16 %v3304, %v3302
    %v3397 = vpack.c.b16 %v3307, %v3305
    %v3398 = vpack.c.b16 %v3308, %v3306
    %v3399 = vpack.c.b16 %v3311, %v3309
    %v3400 = vpack.c.b16 %v3312, %v3310
    %v3401 = vpack.c.b16 %v3315, %v3313
    %v3402 = vpack.c.b16 %v3316, %v3314
    %v3403 = vpack.c.b16 %v3319, %v3317
    %v3404 = vpack.c.b16 %v3320, %v3318
    %v3405 = vpack.c.b16 %v3323, %v3321
    %v3406 = vpack.c.b16 %v3324, %v3322
    %v3407 = vpack.c.b16 %v3327, %v3325
    %v3408 = vpack.c.b16 %v3328, %v3326
    %v3409 = vpack.c.b16 %v3331, %v3329
    %v3410 = vpack.c.b16 %v3332, %v3330
    %v3411 = vpack.c.b16 %v3335, %v3333
    %v3412 = vpack.c.b16 %v3336, %v3334
    %v3413 = vpack.c.b16 %v3339, %v3337
    %v3414 = vpack.c.b16 %v3340, %v3338
    %v3415 = vpack.c.b16 %v3343, %v3341
    %v3416 = vpack.c.b16 %v3344, %v3342
    %v3417 = vpack.c.b16 %v3347, %v3345
    %v3418 = vpack.c.b16 %v3348, %v3346
    %v3419 = vpack.c.b16 %v3351, %v3349
    %v3420 = vpack.c.b16 %v3352, %v3350
    %v3421 = vpack.c.b16 %v3355, %v3353
    %v3422 = vpack.c.b16 %v3356, %v3354
    %v3423 = vpack.c.b16 %v3359, %v3357
    %v3424 = vpack.c.b16 %v3360, %v3358
    %3489 = vmatpush.bf16.msra.mxu0 %v3375
    %3490 = vmatpush.bf16.msra.mxu0 %v3373
    %3491 = vmatpush.bf16.msra.mxu0 %v3371
    %3492 = vmatpush.bf16.msra.mxu0 %v3369
    %3493 = vmatpush.bf16.msra.mxu0 %v3367
    %3494 = vmatpush.bf16.msra.mxu0 %v3365
    %3495 = vmatpush.bf16.msra.mxu0 %v3363
    %3496 = vmatpush.bf16.msra.mxu0 %v3361
    %3497 = vmatmul.bf16.gmra.mxu0 %v3095
    %v3498 = vpop.f32.mrf.mxu0
    %v3499 = vadd.f32 %v3165, %v3498
    %v3500 = vpop.f32.mrf.mxu0
    %v3501 = vadd.f32 %v3165, %v3500
    %3502 = vdwg.mxu0
    %3503 = vmatpush.bf16.msra.mxu0 %v3391
    %3504 = vmatpush.bf16.msra.mxu0 %v3389
    %3505 = vmatpush.bf16.msra.mxu0 %v3387
    %3506 = vmatpush.bf16.msra.mxu0 %v3385
    %3507 = vmatpush.bf16.msra.mxu0 %v3383
    %3508 = vmatpush.bf16.msra.mxu0 %v3381
    %3509 = vmatpush.bf16.msra.mxu0 %v3379
    %3510 = vmatpush.bf16.msra.mxu0 %v3377
    %3511 = vmatmul.bf16.gmra.mxu0 %v3096
    %v3512 = vpop.f32.mrf.mxu0
    %v3513 = vadd.f32 %v3499, %v3512
    %v3514 = vpop.f32.mrf.mxu0
    %v3515 = vadd.f32 %v3501, %v3514
    %3516 = vdwg.mxu0
    %3517 = vmatpush.bf16.msra.mxu0 %v3407
    %3518 = vmatpush.bf16.msra.mxu0 %v3405
    %3519 = vmatpush.bf16.msra.mxu0 %v3403
    %3520 = vmatpush.bf16.msra.mxu0 %v3401
    %3521 = vmatpush.bf16.msra.mxu0 %v3399
    %3522 = vmatpush.bf16.msra.mxu0 %v3397
    %3523 = vmatpush.bf16.msra.mxu0 %v3395
    %3524 = vmatpush.bf16.msra.mxu0 %v3393
    %3525 = vmatmul.bf16.gmra.mxu0 %v3097
    %v3526 = vpop.f32.mrf.mxu0
    %v3527 = vadd.f32 %v3513, %v3526
    %v3528 = vpop.f32.mrf.mxu0
    %v3529 = vadd.f32 %v3515, %v3528
    %3530 = vdwg.mxu0
    %3531 = vmatpush.bf16.msra.mxu0 %v3423
    %3532 = vmatpush.bf16.msra.mxu0 %v3421
    %3533 = vmatpush.bf16.msra.mxu0 %v3419
    %3534 = vmatpush.bf16.msra.mxu0 %v3417
    %3535 = vmatpush.bf16.msra.mxu0 %v3415
    %3536 = vmatpush.bf16.msra.mxu0 %v3413
    %3537 = vmatpush.bf16.msra.mxu0 %v3411
    %3538 = vmatpush.bf16.msra.mxu0 %v3409
    %3539 = vmatmul.bf16.gmra.mxu0 %v3098
    %v3540 = vpop.f32.mrf.mxu0
    %v3541 = vadd.f32 %v3527, %v3540
    %v3542 = vpop.f32.mrf.mxu0
    %v3543 = vadd.f32 %v3529, %v3542
    %3544 = vdwg.mxu0
    %3545 = vmatpush.bf16.msra.mxu0 %v3376
    %3546 = vmatpush.bf16.msra.mxu0 %v3374
    %3547 = vmatpush.bf16.msra.mxu0 %v3372
    %3548 = vmatpush.bf16.msra.mxu0 %v3370
    %3549 = vmatpush.bf16.msra.mxu0 %v3368
    %3550 = vmatpush.bf16.msra.mxu0 %v3366
    %3551 = vmatpush.bf16.msra.mxu0 %v3364
    %3552 = vmatpush.bf16.msra.mxu0 %v3362
    %3553 = vmatmul.bf16.gmra.mxu0 %v3095
    %v3554 = vpop.f32.mrf.mxu0
    %v3555 = vadd.f32 %v3166, %v3554
    %v3556 = vpop.f32.mrf.mxu0
    %v3557 = vadd.f32 %v3166, %v3556
    %3558 = vdwg.mxu0
    %3559 = vmatpush.bf16.msra.mxu0 %v3392
    %3560 = vmatpush.bf16.msra.mxu0 %v3390
    %3561 = vmatpush.bf16.msra.mxu0 %v3388
    %3562 = vmatpush.bf16.msra.mxu0 %v3386
    %3563 = vmatpush.bf16.msra.mxu0 %v3384
    %3564 = vmatpush.bf16.msra.mxu0 %v3382
    %3565 = vmatpush.bf16.msra.mxu0 %v3380
    %3566 = vmatpush.bf16.msra.mxu0 %v3378
    %3567 = vmatmul.bf16.gmra.mxu0 %v3096
    %v3568 = vpop.f32.mrf.mxu0
    %v3569 = vadd.f32 %v3555, %v3568
    %v3570 = vpop.f32.mrf.mxu0
    %v3571 = vadd.f32 %v3557, %v3570
    %3572 = vdwg.mxu0
    %3573 = vmatpush.bf16.msra.mxu0 %v3408
    %3574 = vmatpush.bf16.msra.mxu0 %v3406
    %3575 = vmatpush.bf16.msra.mxu0 %v3404
    %3576 = vmatpush.bf16.msra.mxu0 %v3402
    %3577 = vmatpush.bf16.msra.mxu0 %v3400
    %3578 = vmatpush.bf16.msra.mxu0 %v3398
    %3579 = vmatpush.bf16.msra.mxu0 %v3396
    %3580 = vmatpush.bf16.msra.mxu0 %v3394
    %3581 = vmatmul.bf16.gmra.mxu0 %v3097
    %v3582 = vpop.f32.mrf.mxu0
    %v3583 = vadd.f32 %v3569, %v3582
    %v3584 = vpop.f32.mrf.mxu0
    %v3585 = vadd.f32 %v3571, %v3584
    %3586 = vdwg.mxu0
    %3587 = vmatpush.bf16.msra.mxu0 %v3424
    %3588 = vmatpush.bf16.msra.mxu0 %v3422
    %3589 = vmatpush.bf16.msra.mxu0 %v3420
    %3590 = vmatpush.bf16.msra.mxu0 %v3418
    %3591 = vmatpush.bf16.msra.mxu0 %v3416
    %3592 = vmatpush.bf16.msra.mxu0 %v3414
    %3593 = vmatpush.bf16.msra.mxu0 %v3412
    %3594 = vmatpush.bf16.msra.mxu0 %v3410
    %3595 = vmatmul.bf16.gmra.mxu0 %v3098
    %v3596 = vpop.f32.mrf.mxu0
    %v3597 = vadd.f32 %v3583, %v3596
    %v3598 = vpop.f32.mrf.mxu0
    %v3599 = vadd.f32 %v3585, %v3598
    %3600 = vdwg.mxu0
    %v3601 = vmax.f32 %v3541, 0.0
    %v3602 = vmax.f32 %v3597, 0.0
    %v3603 = vmax.f32 %v3543, 0.0
    %v3604 = vmax.f32 %v3599, 0.0
    %v3605 = vld [vmem:[%s23] sm:$0xff]
    %v3606 = vld [vmem:[%s23 + $0x8] sm:$0xff]
    %v3607 = vld [vmem:[%s23 + $0x10] sm:$0xff]
    %v3608 = vld [vmem:[%s23 + $0x18] sm:$0xff]
    %v3609 = vld [vmem:[%s23 + $0x20] sm:$0xff]
    %v3610 = vld [vmem:[%s23 + $0x28] sm:$0xff]
    %v3611 = vld [vmem:[%s23 + $0x30] sm:$0xff]
    %v3612 = vld [vmem:[%s23 + $0x38] sm:$0xff]
    %v3613 = vld [vmem:[%s23 + $0x40] sm:$0xff]
    %v3614 = vld [vmem:[%s23 + $0x48] sm:$0xff]
    %v3615 = vld [vmem:[%s23 + $0x50] sm:$0xff]
    %v3616 = vld [vmem:[%s23 + $0x58] sm:$0xff]
    %v3617 = vld [vmem:[%s23 + $0x60] sm:$0xff]
    %v3618 = vld [vmem:[%s23 + $0x68] sm:$0xff]
    %v3619 = vld [vmem:[%s23 + $0x70] sm:$0xff]
    %v3620 = vld [vmem:[%s23 + $0x78] sm:$0xff]
    %v3621 = vld [vmem:[%s23 + $0x80] sm:$0xff]
    %v3622 = vld [vmem:[%s23 + $0x88] sm:$0xff]
    %v3623 = vld [vmem:[%s23 + $0x90] sm:$0xff]
    %v3624 = vld [vmem:[%s23 + $0x98] sm:$0xff]
    %v3625 = vld [vmem:[%s23 + $0xa0] sm:$0xff]
    %v3626 = vld [vmem:[%s23 + $0xa8] sm:$0xff]
    %v3627 = vld [vmem:[%s23 + $0xb0] sm:$0xff]
    %v3628 = vld [vmem:[%s23 + $0xb8] sm:$0xff]
    %v3629 = vld [vmem:[%s23 + $0xc0] sm:$0xff]
    %v3630 = vld [vmem:[%s23 + $0xc8] sm:$0xff]
    %v3631 = vld [vmem:[%s23 + $0xd0] sm:$0xff]
    %v3632 = vld [vmem:[%s23 + $0xd8] sm:$0xff]
    %v3633 = vld [vmem:[%s23 + $0xe0] sm:$0xff]
    %v3634 = vld [vmem:[%s23 + $0xe8] sm:$0xff]
    %v3635 = vld [vmem:[%s23 + $0xf0] sm:$0xff]
    %v3636 = vld [vmem:[%s23 + $0xf8] sm:$0xff]
    %v3637 = vld [vmem:[#allocation21] sm:$0x1]
    %v3639 = vperm.slane %v3637, 0
    %3641 = vmatpush.msra.mxu0 %v3620
    %3642 = vmatpush.msra.mxu0 %v3619
    %3643 = vmatpush.msra.mxu0 %v3618
    %3644 = vmatpush.msra.mxu0 %v3617
    %3645 = vmatpush.msra.mxu0 %v3616
    %3646 = vmatpush.msra.mxu0 %v3615
    %3647 = vmatpush.msra.mxu0 %v3614
    %3648 = vmatpush.msra.mxu0 %v3613
    %3649 = vmatpush.msra.mxu0 %v3612
    %3650 = vmatpush.msra.mxu0 %v3611
    %3651 = vmatpush.msra.mxu0 %v3610
    %3652 = vmatpush.msra.mxu0 %v3609
    %3653 = vmatpush.msra.mxu0 %v3608
    %3654 = vmatpush.msra.mxu0 %v3607
    %3655 = vmatpush.msra.mxu0 %v3606
    %3656 = vmatpush.msra.mxu0 %v3605
    %3657 = vmatmul.f32.gmra.mxu0 %v3091
    %v3658 = vpop.f32.mrf.mxu0
    %v3659 = vadd.f32 %v3639, %v3658
    %3660 = vmatmul.f32.gmra.mxu0 %v3093
    %v3661 = vpop.f32.mrf.mxu0
    %v3662 = vadd.f32 %v3639, %v3661
    %3663 = vdwg.mxu0
    %3664 = vmatpush.msra.mxu0 %v3636
    %3665 = vmatpush.msra.mxu0 %v3635
    %3666 = vmatpush.msra.mxu0 %v3634
    %3667 = vmatpush.msra.mxu0 %v3633
    %3668 = vmatpush.msra.mxu0 %v3632
    %3669 = vmatpush.msra.mxu0 %v3631
    %3670 = vmatpush.msra.mxu0 %v3630
    %3671 = vmatpush.msra.mxu0 %v3629
    %3672 = vmatpush.msra.mxu0 %v3628
    %3673 = vmatpush.msra.mxu0 %v3627
    %3674 = vmatpush.msra.mxu0 %v3626
    %3675 = vmatpush.msra.mxu0 %v3625
    %3676 = vmatpush.msra.mxu0 %v3624
    %3677 = vmatpush.msra.mxu0 %v3623
    %3678 = vmatpush.msra.mxu0 %v3622
    %3679 = vmatpush.msra.mxu0 %v3621
    %3680 = vmatmul.f32.gmra.mxu0 %v3092
    %v3681 = vpop.f32.mrf.mxu0
    %v3682 = vadd.f32 %v3659, %v3681
    %3683 = vmatmul.f32.gmra.mxu0 %v3094
    %v3684 = vpop.f32.mrf.mxu0
    %v3685 = vadd.f32 %v3662, %v3684
    %3686 = vdwg.mxu0
    %v3687 = vld [vmem:[%s25] sm:$0xff]
    %v3688 = vld [vmem:[%s25 + $0x8] sm:$0xff]
    %v3689 = vld [vmem:[%s25 + $0x10] sm:$0xff]
    %v3690 = vld [vmem:[%s25 + $0x18] sm:$0xff]
    %v3691 = vld [vmem:[%s25 + $0x20] sm:$0xff]
    %v3692 = vld [vmem:[%s25 + $0x28] sm:$0xff]
    %v3693 = vld [vmem:[%s25 + $0x30] sm:$0xff]
    %v3694 = vld [vmem:[%s25 + $0x38] sm:$0xff]
    %v3695 = vld [vmem:[%s25 + $0x40] sm:$0xff]
    %v3696 = vld [vmem:[%s25 + $0x48] sm:$0xff]
    %v3697 = vld [vmem:[%s25 + $0x50] sm:$0xff]
    %v3698 = vld [vmem:[%s25 + $0x58] sm:$0xff]
    %v3699 = vld [vmem:[%s25 + $0x60] sm:$0xff]
    %v3700 = vld [vmem:[%s25 + $0x68] sm:$0xff]
    %v3701 = vld [vmem:[%s25 + $0x70] sm:$0xff]
    %v3702 = vld [vmem:[%s25 + $0x78] sm:$0xff]
    %v3703 = vld [vmem:[%s25 + $0x80] sm:$0xff]
    %v3704 = vld [vmem:[%s25 + $0x88] sm:$0xff]
    %v3705 = vld [vmem:[%s25 + $0x90] sm:$0xff]
    %v3706 = vld [vmem:[%s25 + $0x98] sm:$0xff]
    %v3707 = vld [vmem:[%s25 + $0xa0] sm:$0xff]
    %v3708 = vld [vmem:[%s25 + $0xa8] sm:$0xff]
    %v3709 = vld [vmem:[%s25 + $0xb0] sm:$0xff]
    %v3710 = vld [vmem:[%s25 + $0xb8] sm:$0xff]
    %v3711 = vld [vmem:[%s25 + $0xc0] sm:$0xff]
    %v3712 = vld [vmem:[%s25 + $0xc8] sm:$0xff]
    %v3713 = vld [vmem:[%s25 + $0xd0] sm:$0xff]
    %v3714 = vld [vmem:[%s25 + $0xd8] sm:$0xff]
    %v3715 = vld [vmem:[%s25 + $0xe0] sm:$0xff]
    %v3716 = vld [vmem:[%s25 + $0xe8] sm:$0xff]
    %v3717 = vld [vmem:[%s25 + $0xf0] sm:$0xff]
    %v3718 = vld [vmem:[%s25 + $0xf8] sm:$0xff]
    %v3719 = vld [vmem:[#allocation6] sm:$0x1]
    %v3721 = vperm.slane %v3719, 0
    %3723 = vmatpush.msra.mxu0 %v3702
    %3724 = vmatpush.msra.mxu0 %v3701
    %3725 = vmatpush.msra.mxu0 %v3700
    %3726 = vmatpush.msra.mxu0 %v3699
    %3727 = vmatpush.msra.mxu0 %v3698
    %3728 = vmatpush.msra.mxu0 %v3697
    %3729 = vmatpush.msra.mxu0 %v3696
    %3730 = vmatpush.msra.mxu0 %v3695
    %3731 = vmatpush.msra.mxu0 %v3694
    %3732 = vmatpush.msra.mxu0 %v3693
    %3733 = vmatpush.msra.mxu0 %v3692
    %3734 = vmatpush.msra.mxu0 %v3691
    %3735 = vmatpush.msra.mxu0 %v3690
    %3736 = vmatpush.msra.mxu0 %v3689
    %3737 = vmatpush.msra.mxu0 %v3688
    %3738 = vmatpush.msra.mxu0 %v3687
    %3739 = vmatmul.f32.gmra.mxu0 %v3601
    %v3740 = vpop.f32.mrf.mxu0
    %v3741 = vadd.f32 %v3721, %v3740
    %3742 = vmatmul.f32.gmra.mxu0 %v3603
    %v3743 = vpop.f32.mrf.mxu0
    %v3744 = vadd.f32 %v3721, %v3743
    %3745 = vdwg.mxu0
    %3746 = vmatpush.msra.mxu0 %v3718
    %3747 = vmatpush.msra.mxu0 %v3717
    %3748 = vmatpush.msra.mxu0 %v3716
    %3749 = vmatpush.msra.mxu0 %v3715
    %3750 = vmatpush.msra.mxu0 %v3714
    %3751 = vmatpush.msra.mxu0 %v3713
    %3752 = vmatpush.msra.mxu0 %v3712
    %3753 = vmatpush.msra.mxu0 %v3711
    %3754 = vmatpush.msra.mxu0 %v3710
    %3755 = vmatpush.msra.mxu0 %v3709
    %3756 = vmatpush.msra.mxu0 %v3708
    %3757 = vmatpush.msra.mxu0 %v3707
    %3758 = vmatpush.msra.mxu0 %v3706
    %3759 = vmatpush.msra.mxu0 %v3705
    %3760 = vmatpush.msra.mxu0 %v3704
    %3761 = vmatpush.msra.mxu0 %v3703
    %3762 = vmatmul.f32.gmra.mxu0 %v3602
    %v3763 = vpop.f32.mrf.mxu0
    %v3764 = vadd.f32 %v3741, %v3763
    %3765 = vmatmul.f32.gmra.mxu0 %v3604
    %v3766 = vpop.f32.mrf.mxu0
    %v3767 = vadd.f32 %v3744, %v3766
    %3768 = vdwg.mxu0
    %v3769 = vld [vmem:[%s2] sm:$0xff]
    %v3770 = vld [vmem:[%s2 + $0x8] sm:$0xff]
    %v3771 = vadd.f32 %v3769, %v3682
    %v3772 = vadd.f32 %v3770, %v3685
    %vm3773 = vcmask 31744
    %3774 = vst.msk [vmem:[%s28] sm:$0xff] %vm3773, %v3771
    %3775 = vst.msk [vmem:[%s28 + $0x8] sm:$0xff] %vm3773, %v3772
    %3778 = vrot.lane.b32.xlu0 %v3682, 4
    %v3779 = vpop.permute.xlu0 %3778
    %3780 = vrot.lane.b32.xlu0 %v3685, 4
    %v3781 = vpop.permute.xlu0 %3780
    %vm3784 = vcmask 64544
    %3785 = vst.msk [vmem:[%s28] sm:$0xff] %vm3784, %v3779
    %3786 = vst.msk [vmem:[%s28 + $0x8] sm:$0xff] %vm3784, %v3781
    %3789 = vrot.lane.b32.xlu0 %v3764, 8
    %v3790 = vpop.permute.xlu0 %3789
    %3791 = vrot.lane.b32.xlu0 %v3767, 8
    %v3792 = vpop.permute.xlu0 %3791
    %vm3795 = vcmask 72768
    %3796 = vst.msk [vmem:[%s28] sm:$0xff] %vm3795, %v3790
    %3797 = vst.msk [vmem:[%s28 + $0x8] sm:$0xff] %vm3795, %v3792
    %vm3798 = vcmask 130120
    %3799 = vst.msk [vmem:[%s28] sm:$0xff] %vm3798, 0.0
    %3800 = vst.msk [vmem:[%s28 + $0x8] sm:$0xff] %vm3798, 0.0
    // Predicated region
    $region180: #{trajectory_transformer_encoder.1} parent=1 // pred_check
      _
    $region181: #{trajectory_transformer_encoder.1} parent=1 // pred_check_branch
      %3802 = sbr.rel (0) target = $region183
    $region182: #{trajectory_transformer_encoder.1} parent=1 // pred_region
      _
    $region183: #{trajectory_transformer_encoder.1} parent=1 // pred_fallthru
      _
    // Predicated region
    $region184: #{trajectory_transformer_encoder.1} parent=1 // pred_check
      _
    $region185: #{trajectory_transformer_encoder.1} parent=1 // pred_check_branch
      %3804 = sbr.rel (0) target = $region187
    $region186: #{trajectory_transformer_encoder.1} parent=1 // pred_region
      _
    $region187: #{trajectory_transformer_encoder.1} parent=1 // pred_fallthru
      _
    // Predicated region
    $region188: #{trajectory_transformer_encoder.1} parent=1 // pred_check
      _
    $region189: #{trajectory_transformer_encoder.1} parent=1 // pred_check_branch
      %3806 = sbr.rel (0) target = $region191
    $region190: #{trajectory_transformer_encoder.1} parent=1 // pred_region
      _
    $region191: #{trajectory_transformer_encoder.1} parent=1 // pred_fallthru
      _
    // Predicated region
    $region192: #{trajectory_transformer_encoder.1} parent=1 // pred_check
      _
    $region193: #{trajectory_transformer_encoder.1} parent=1 // pred_check_branch
      %3808 = sbr.rel (0) target = $region195
    $region194: #{trajectory_transformer_encoder.1} parent=1 // pred_region
      _
    $region195: #{trajectory_transformer_encoder.1} parent=1 // pred_fallthru
      _
    %3809 = vsyncpa [#allocation8], 1
    %3810 = vsyncpa [#allocation10], 1
    %3811 = vsyncpa [#allocation13], 1
    %3812 = vsyncpa [#allocation16], 1
    %3813 = vsyncpa [#allocation19], 1
    %3814 = vsyncpa [#allocation22], 1
  %3815 = vsyncmov [#allocation5]
  %s3816 = vpop.sfrf %3815
  %p3817 = scmp.eq.s32.totalorder %s3816, 0
  %p3818 = pneg %p3817
  %3820 = shalt.err (%p3818)
  %s3821 = scalar_lea.sflag [#allocation5], 1
  %3822 = vsyncmov %s3821
  %s3823 = vpop.sfrf %3822
  %p3824 = scmp.eq.s32.totalorder %s3823, 0
  %p3825 = pneg %p3824
  %3827 = shalt.err (%p3825)
  %s3828 = scalar_lea.sflag [#allocation5], 2
  %3829 = vsyncmov %s3828
  %s3830 = vpop.sfrf %3829
  %p3831 = scmp.eq.s32.totalorder %s3830, 0
  %p3832 = pneg %p3831
  %3834 = shalt.err (%p3832)

</llo_original>
